<compile_context>
chip_gen: v6e
topology: v6e:2x2x1
jax: 0.10.0
libtpu: 0.0.40
codegen_flags: <defaults>
</compile_context>

<pallas_src>
import jax
import jax.numpy as jnp
from jax.experimental import pallas as pl
from jax.experimental.pallas import tpu as pltpu

DIM = 256
NUM_HEADS = 4
EXPAND = 2
HEAD_DIM = DIM // NUM_HEADS
LN_EPS = 1e-5


def _layernorm(x, gamma, beta):
    # x: (M, D) f32; gamma/beta: (D,).  Centered two-pass statistics (safer than
    # E[x^2]-mean^2 when activations drift to large mean).
    mean = jnp.mean(x, axis=-1, keepdims=True)
    c = x - mean
    var = jnp.mean(c * c, axis=-1, keepdims=True)
    return c * jax.lax.rsqrt(var + LN_EPS) * gamma + beta


def transformer_block_kernel(
    x_ref,               # (TB, S, D) bf16  input block
    g1_ref, b1_ref,      # (1, D) f32       LayerNorm1
    wqkv_ref,            # (D, 3D) bf16     fused q|k|v projection (scale folded into q part)
    bqkv_ref,            # (1, 3D) f32      fused q|k|v bias (scale folded into q part)
    wo_ref, bo_ref,      # (D, D) bf16, (1, D) f32   attention output projection
    g2_ref, b2_ref,      # (1, D) f32       LayerNorm2
    w1_ref,              # (D, D*EXPAND) bf16   linear1 (no bias)
    w2_ref,              # (D*EXPAND, D) bf16   linear2 (no bias)
    o_ref,               # (TB, S, D) bf16  output block
):
    TB, S, D = x_ref.shape

    x = x_ref[...].astype(jnp.float32)              # (TB, S, D)
    xf = x.reshape(TB * S, D)                       # (M, D)

    # ---- norm1 ----
    h = _layernorm(xf, g1_ref[0], b1_ref[0])        # (M, D) f32

    # ---- fused QKV projection (one MXU op, bf16 inputs, f32 accumulate) ----
    qkv = jnp.dot(h.astype(jnp.bfloat16), wqkv_ref[...],
                  preferred_element_type=jnp.float32) + bqkv_ref[0]   # (M, 3D)

    q3 = qkv[:, 0 * D:1 * D].astype(jnp.bfloat16).reshape(TB, S, D)
    k3 = qkv[:, 1 * D:2 * D].astype(jnp.bfloat16).reshape(TB, S, D)
    v3 = qkv[:, 2 * D:3 * D].astype(jnp.bfloat16).reshape(TB, S, D)

    # ---- multi-head self-attention (scale already folded into wq/bq) ----
    head_outs = []
    for hh in range(NUM_HEADS):                     # static unrolled loop, TB-batched 3-D dots
        lo = hh * HEAD_DIM
        qh = q3[:, :, lo:lo + HEAD_DIM]             # (TB, S, hd)
        kh = k3[:, :, lo:lo + HEAD_DIM]
        vh = v3[:, :, lo:lo + HEAD_DIM]
        sc = jnp.einsum("bqc,bkc->bqk", qh, kh,
                        preferred_element_type=jnp.float32)           # (TB, S, S)
        sc = sc - jnp.max(sc, axis=-1, keepdims=True)
        p = jnp.exp(sc)
        p = p * pl.reciprocal(jnp.sum(p, axis=-1, keepdims=True), approx=True)
        head_outs.append(jnp.einsum("bqk,bkc->bqc", p.astype(jnp.bfloat16), vh,
                                    preferred_element_type=jnp.float32))
    attn = jnp.concatenate(head_outs, axis=-1).reshape(TB * S, D)      # (M, D) f32
    attn = jnp.dot(attn.astype(jnp.bfloat16), wo_ref[...],
                   preferred_element_type=jnp.float32) + bo_ref[0]

    # dropout1: identity (inference)
    res1 = attn + xf                                 # residual 1, (M, D)

    # ---- norm2 + feed-forward (Swish) ----
    h2 = _layernorm(res1, g2_ref[0], b2_ref[0])
    ff = jnp.dot(h2.astype(jnp.bfloat16), w1_ref[...],
                 preferred_element_type=jnp.float32)                   # (M, D*EXPAND)
    ff = ff * jax.nn.sigmoid(ff)                     # Swish (f32 VPU/EUP)
    ff = jnp.dot(ff.astype(jnp.bfloat16), w2_ref[...],
                 preferred_element_type=jnp.float32)                   # (M, D)

    # dropout2: identity (inference)
    o_ref[...] = (ff + res1).reshape(TB, S, D).astype(o_ref.dtype)     # residual 2


def _choose_tb(B, S):
    """Batch-tile size (a divisor of B).

    Targets >= 512 rows (= TB*S) per grid step so the 256-wide MXU is fed and the
    ~0.35us per-step overhead is amortized; caps rows at 2048 to stay inside
    v7x's 64 MiB VMEM; prefers a grid of length >= 2 so both v7x TensorCores get
    work (costs nothing on single-core v5e/v6e).
    """
    TARGET_ROWS = 512
    MAX_ROWS = 2048   # TODO(synk): flash-style KV tiling before scaling S further.
    divs = [d for d in range(1, B + 1) if B % d == 0]
    fit = [d for d in divs if d * S <= MAX_ROWS] or divs[:1]
    reach = [d for d in fit if d * S >= TARGET_ROWS]
    if reach:
        multi = [d for d in reach if B // d >= 2]
        return (multi or reach)[0]        # smallest tile that hits the row target
    multi = [d for d in fit if B // d >= 2]
    return (multi or fit)[-1]             # biggest tile that fits, keep >=2 steps if possible


def _vmem_limit_bytes(TB, S):
    """Rough per-step VMEM demand estimate with headroom, clamped for portability."""
    M = TB * S
    act = M * (12 * DIM) * 4                              # f32 row intermediates
    scores = 2 * NUM_HEADS * M * S * 4                    # per-head (S,S) scores + exp (live together)
    weights = (3 * DIM * DIM + DIM * DIM + 2 * DIM * DIM * EXPAND) * 2   # bf16, single-buffered
    io = 2 * 2 * M * DIM * 2                              # double-buffered bf16 in/out blocks
    est = int(1.5 * (act + scores + weights + io)) + (4 << 20)
    return max(24 << 20, min(est, 48 << 20))              # <= 48 MiB: safe on v7x (64 MiB physical)


def _const_spec(shape):
    """Grid-invariant operand: single-buffered (no point double-buffering weights)."""
    zero_map = lambda b, _n=len(shape): (0,) * _n
    try:
        return pl.BlockSpec(shape, zero_map, pipeline_mode=pl.Buffered(1))
    except (TypeError, AttributeError):   # older jax without pipeline_mode / Buffered
        return pl.BlockSpec(shape, zero_map)


def transformer_block(x, p):
    """x: (B, S, D) float32 or bfloat16.  p: kernel-layout params from prepare_params().
    Returns bf16 (activation I/O crosses HBM in bf16; internal math is f32)."""
    B, S, D = x.shape
    assert D == DIM
    DH = D * EXPAND
    TB = _choose_tb(B, S)

    x = x.astype(jnp.bfloat16)

    in_specs = [
        pl.BlockSpec((TB, S, D), lambda b: (b, 0, 0)),   # x
        _const_spec((1, D)), _const_spec((1, D)),        # ln1 gamma, beta
        _const_spec((D, 3 * D)), _const_spec((1, 3 * D)),# wqkv, bqkv
        _const_spec((D, D)), _const_spec((1, D)),        # wo, bo
        _const_spec((1, D)), _const_spec((1, D)),        # ln2 gamma, beta
        _const_spec((D, DH)),                            # w1
        _const_spec((DH, D)),                            # w2
    ]

    fn = pl.pallas_call(
        transformer_block_kernel,
        out_shape=jax.ShapeDtypeStruct((B, S, D), jnp.bfloat16),
        grid_spec=pltpu.PrefetchScalarGridSpec(
            num_scalar_prefetch=0,
            grid=(B // TB,),
            in_specs=in_specs,
            out_specs=pl.BlockSpec((TB, S, D), lambda b: (b, 0, 0)),
        ),
        compiler_params=pltpu.CompilerParams(
            dimension_semantics=("parallel",),
            vmem_limit_bytes=_vmem_limit_bytes(TB, S),
        ),
    )
    return fn(
        x,
        p["ln1_g"], p["ln1_b"],
        p["wqkv"], p["bqkv"],
        p["wo"], p["bo"],
        p["ln2_g"], p["ln2_b"],
        p["w1"], p["w2"],
    )


def init_raw_params(key):
    """Deterministic synthetic parameters in PyTorch layout (f32)."""
    ks = jax.random.split(key, 6)
    f32 = jnp.float32
    return {
        "in_proj_w": 0.02 * jax.random.normal(ks[0], (3 * DIM, DIM), f32),   # (3D, D)
        "in_proj_b": 0.02 * jax.random.normal(ks[1], (3 * DIM,), f32),
        "out_w": 0.02 * jax.random.normal(ks[2], (DIM, DIM), f32),           # (out, in)
        "out_b": 0.02 * jax.random.normal(ks[3], (DIM,), f32),
        "lin1_w": 0.02 * jax.random.normal(ks[4], (DIM * EXPAND, DIM), f32), # (out, in)
        "lin2_w": 0.02 * jax.random.normal(ks[5], (DIM, DIM * EXPAND), f32), # (out, in)
        "ln1_g": jnp.ones((DIM,), f32), "ln1_b": jnp.zeros((DIM,), f32),
        "ln2_g": jnp.ones((DIM,), f32), "ln2_b": jnp.zeros((DIM,), f32),
    }


def prepare_params(raw):
    """Host-side weight prep: transpose to y=x@W, fuse QKV, fold the attention
    scale into wq/bq, cast matmul weights to bf16 (biases / LN params stay f32)."""
    bf16 = jnp.bfloat16
    wq, wk, wv = jnp.split(raw["in_proj_w"], 3, axis=0)      # each (D, D) (out, in)
    bq, bk, bv = jnp.split(raw["in_proj_b"], 3)
    scale = 1.0 / jnp.sqrt(jnp.float32(HEAD_DIM))
    wqkv = jnp.concatenate([wq.T * scale, wk.T, wv.T], axis=1)        # (D, 3D)
    bqkv = jnp.concatenate([bq * scale, bk, bv]).reshape(1, 3 * DIM)  # (1, 3D)
    return {
        "ln1_g": raw["ln1_g"].reshape(1, DIM), "ln1_b": raw["ln1_b"].reshape(1, DIM),
        "wqkv": wqkv.astype(bf16), "bqkv": bqkv,
        "wo": raw["out_w"].T.astype(bf16), "bo": raw["out_b"].reshape(1, DIM),
        "ln2_g": raw["ln2_g"].reshape(1, DIM), "ln2_b": raw["ln2_b"].reshape(1, DIM),
        "w1": raw["lin1_w"].T.astype(bf16),    # (D, D*EXPAND)
        "w2": raw["lin2_w"].T.astype(bf16),    # (D*EXPAND, D)
    }


def reference(x, raw):
    """Pure-JAX f32 reference of the same forward (inference mode, PyTorch semantics)."""
    def ln(v, g, b):
        m = jnp.mean(v, axis=-1, keepdims=True)
        c = v - m
        var = jnp.mean(c * c, axis=-1, keepdims=True)
        return c * jax.lax.rsqrt(var + LN_EPS) * g + b

    h = ln(x, raw["ln1_g"], raw["ln1_b"])
    wq, wk, wv = jnp.split(raw["in_proj_w"], 3, axis=0)
    bq, bk, bv = jnp.split(raw["in_proj_b"], 3)
    q = h @ wq.T + bq
    k = h @ wk.T + bk
    v = h @ wv.T + bv
    B, S, D = x.shape

    def split_heads(t):
        return t.reshape(B, S, NUM_HEADS, HEAD_DIM).transpose(0, 2, 1, 3)

    qh, kh, vh = split_heads(q), split_heads(k), split_heads(v)
    sc = jnp.einsum("bhqd,bhkd->bhqk", qh, kh) / jnp.sqrt(jnp.float32(HEAD_DIM))
    pw = jax.nn.softmax(sc, axis=-1)
    att = jnp.einsum("bhqk,bhkd->bhqd", pw, vh).transpose(0, 2, 1, 3).reshape(B, S, D)
    att = att @ raw["out_w"].T + raw["out_b"]
    r1 = att + x
    h2 = ln(r1, raw["ln2_g"], raw["ln2_b"])
    ff = h2 @ raw["lin1_w"].T
    ff = ff * jax.nn.sigmoid(ff)
    ff = ff @ raw["lin2_w"].T
    return ff + r1


if __name__ == "__main__":
    key = jax.random.PRNGKey(0)
    kx, kp = jax.random.split(key)
    B, S = 2, 8
    x = jax.random.normal(kx, (B, S, DIM), jnp.float32)

    raw = init_raw_params(kp)
    params = prepare_params(raw)

    out = jax.block_until_ready(transformer_block(x, params))
    ref = jax.block_until_ready(reference(x, raw))

    assert out.shape == (B, S, DIM)
    out_f32 = out.astype(jnp.float32)
    max_err = float(jnp.max(jnp.abs(out_f32 - ref)))
    # bf16 activation I/O + bf16 MXU inputs + approx softmax reciprocal -> relaxed tolerance.
    assert jnp.allclose(out_f32, ref, atol=2e-2, rtol=3e-2), max_err
    print("KERNEL_OK")
</pallas_src>

<mosaic_0001>
module attributes {stable_mosaic.version = 11 : i64} {
  func.func @transformer_block_kernel(%arg0: i32, %arg1: memref<1x8x256xbf16, #tpu.memory_space<vmem>>, %arg2: memref<1x256xf32, #tpu.memory_space<vmem>>, %arg3: memref<1x256xf32, #tpu.memory_space<vmem>>, %arg4: memref<256x768xbf16, #tpu.memory_space<vmem>>, %arg5: memref<1x768xf32, #tpu.memory_space<vmem>>, %arg6: memref<256x256xbf16, #tpu.memory_space<vmem>>, %arg7: memref<1x256xf32, #tpu.memory_space<vmem>>, %arg8: memref<1x256xf32, #tpu.memory_space<vmem>>, %arg9: memref<1x256xf32, #tpu.memory_space<vmem>>, %arg10: memref<256x512xbf16, #tpu.memory_space<vmem>>, %arg11: memref<512x256xbf16, #tpu.memory_space<vmem>>, %arg12: memref<1x8x256xbf16, #tpu.memory_space<vmem>>) attributes {dimension_semantics = [#tpu.dimension_semantics<parallel>], iteration_bounds = array<i64: 2>, scalar_prefetch = 0 : i64, scratch_operands = 0 : i64, tpu.core_type = #tpu.core_type<tc>, window_params = [{transform_indices = @transform_0, window_bounds = array<i64: 1, 8, 256>}, {pipeline_mode = #tpu.pipeline_mode<synchronous>, transform_indices = @transform_1, window_bounds = array<i64: 1, 256>}, {pipeline_mode = #tpu.pipeline_mode<synchronous>, transform_indices = @transform_2, window_bounds = array<i64: 1, 256>}, {pipeline_mode = #tpu.pipeline_mode<synchronous>, transform_indices = @transform_3, window_bounds = array<i64: 256, 768>}, {pipeline_mode = #tpu.pipeline_mode<synchronous>, transform_indices = @transform_4, window_bounds = array<i64: 1, 768>}, {pipeline_mode = #tpu.pipeline_mode<synchronous>, transform_indices = @transform_5, window_bounds = array<i64: 256, 256>}, {pipeline_mode = #tpu.pipeline_mode<synchronous>, transform_indices = @transform_6, window_bounds = array<i64: 1, 256>}, {pipeline_mode = #tpu.pipeline_mode<synchronous>, transform_indices = @transform_7, window_bounds = array<i64: 1, 256>}, {pipeline_mode = #tpu.pipeline_mode<synchronous>, transform_indices = @transform_8, window_bounds = array<i64: 1, 256>}, {pipeline_mode = #tpu.pipeline_mode<synchronous>, transform_indices = @transform_9, window_bounds = array<i64: 256, 512>}, {pipeline_mode = #tpu.pipeline_mode<synchronous>, transform_indices = @transform_10, window_bounds = array<i64: 512, 256>}, {transform_indices = @transform_11, window_bounds = array<i64: 1, 8, 256>}]} {
    %c0 = arith.constant 0 : index
    %c0_0 = arith.constant 0 : index
    %c0_1 = arith.constant 0 : index
    %0 = vector.load %arg1[%c0, %c0_0, %c0_1] : memref<1x8x256xbf16, #tpu.memory_space<vmem>>, vector<1x8x256xbf16>
    %1 = arith.extf %0 : vector<1x8x256xbf16> to vector<1x8x256xf32>
    %2 = vector.shape_cast %1 : vector<1x8x256xf32> to vector<8x256xf32>
    %c0_2 = arith.constant 0 : index
    %c0_3 = arith.constant 0 : index
    %3 = vector.load %arg2[%c0_2, %c0_3] : memref<1x256xf32, #tpu.memory_space<vmem>>, vector<1x256xf32>
    %4 = vector.shape_cast %3 : vector<1x256xf32> to vector<256xf32>
    %c0_4 = arith.constant 0 : index
    %c0_5 = arith.constant 0 : index
    %5 = vector.load %arg3[%c0_4, %c0_5] : memref<1x256xf32, #tpu.memory_space<vmem>>, vector<1x256xf32>
    %6 = vector.shape_cast %5 : vector<1x256xf32> to vector<256xf32>
    %cst = arith.constant dense<0.000000e+00> : vector<8xf32>
    %7 = vector.multi_reduction <add>, %2, %cst [1] : vector<8x256xf32> to vector<8xf32>
    %8 = vector.shape_cast %7 : vector<8xf32> to vector<8x1xf32>
    %cst_6 = arith.constant 2.560000e+02 : f32
    %9 = vector.broadcast %cst_6 : f32 to vector<8x1xf32>
    %10 = arith.divf %8, %9 : vector<8x1xf32>
    %11 = vector.broadcast %10 : vector<8x1xf32> to vector<8x256xf32>
    %12 = arith.subf %2, %11 : vector<8x256xf32>
    %13 = arith.mulf %12, %12 : vector<8x256xf32>
    %cst_7 = arith.constant dense<0.000000e+00> : vector<8xf32>
    %14 = vector.multi_reduction <add>, %13, %cst_7 [1] : vector<8x256xf32> to vector<8xf32>
    %15 = vector.shape_cast %14 : vector<8xf32> to vector<8x1xf32>
    %cst_8 = arith.constant 2.560000e+02 : f32
    %16 = vector.broadcast %cst_8 : f32 to vector<8x1xf32>
    %17 = arith.divf %15, %16 : vector<8x1xf32>
    %cst_9 = arith.constant 9.99999974E-6 : f32
    %18 = vector.broadcast %cst_9 : f32 to vector<8x1xf32>
    %19 = arith.addf %17, %18 : vector<8x1xf32>
    %20 = math.rsqrt %19 : vector<8x1xf32>
    %21 = vector.broadcast %20 : vector<8x1xf32> to vector<8x256xf32>
    %22 = arith.mulf %12, %21 : vector<8x256xf32>
    %23 = vector.shape_cast %4 : vector<256xf32> to vector<1x256xf32>
    %24 = vector.broadcast %23 : vector<1x256xf32> to vector<8x256xf32>
    %25 = arith.mulf %22, %24 : vector<8x256xf32>
    %26 = vector.shape_cast %6 : vector<256xf32> to vector<1x256xf32>
    %27 = vector.broadcast %26 : vector<1x256xf32> to vector<8x256xf32>
    %28 = arith.addf %25, %27 : vector<8x256xf32>
    %29 = arith.truncf %28 : vector<8x256xf32> to vector<8x256xbf16>
    %c0_10 = arith.constant 0 : index
    %c0_11 = arith.constant 0 : index
    %30 = vector.load %arg4[%c0_10, %c0_11] : memref<256x768xbf16, #tpu.memory_space<vmem>>, vector<256x768xbf16>
    %cst_12 = arith.constant dense<0.000000e+00> : vector<8x768xf32>
    %31 = tpu.matmul %29, %30, %cst_12 {dimension_numbers = #tpu.dot_dimension_numbers<[1], [0], [0], [1], [0, 0, 1, 1], [], []>} : vector<8x256xbf16>, vector<256x768xbf16>, vector<8x768xf32> -> vector<8x768xf32>
    %c0_13 = arith.constant 0 : index
    %c0_14 = arith.constant 0 : index
    %32 = vector.load %arg5[%c0_13, %c0_14] : memref<1x768xf32, #tpu.memory_space<vmem>>, vector<1x768xf32>
    %33 = vector.shape_cast %32 : vector<1x768xf32> to vector<768xf32>
    %34 = vector.shape_cast %33 : vector<768xf32> to vector<1x768xf32>
    %35 = vector.broadcast %34 : vector<1x768xf32> to vector<8x768xf32>
    %36 = arith.addf %31, %35 : vector<8x768xf32>
    %37 = vector.extract_strided_slice %36 {offsets = [0, 0], sizes = [8, 256], strides = [1, 1]} : vector<8x768xf32> to vector<8x256xf32>
    %38 = arith.truncf %37 : vector<8x256xf32> to vector<8x256xbf16>
    %39 = vector.shape_cast %38 : vector<8x256xbf16> to vector<1x8x256xbf16>
    %40 = vector.extract_strided_slice %36 {offsets = [0, 256], sizes = [8, 256], strides = [1, 1]} : vector<8x768xf32> to vector<8x256xf32>
    %41 = arith.truncf %40 : vector<8x256xf32> to vector<8x256xbf16>
    %42 = vector.shape_cast %41 : vector<8x256xbf16> to vector<1x8x256xbf16>
    %43 = vector.extract_strided_slice %36 {offsets = [0, 512], sizes = [8, 256], strides = [1, 1]} : vector<8x768xf32> to vector<8x256xf32>
    %44 = arith.truncf %43 : vector<8x256xf32> to vector<8x256xbf16>
    %45 = vector.shape_cast %44 : vector<8x256xbf16> to vector<1x8x256xbf16>
    %46 = vector.extract_strided_slice %39 {offsets = [0, 0, 0], sizes = [1, 8, 64], strides = [1, 1, 1]} : vector<1x8x256xbf16> to vector<1x8x64xbf16>
    %47 = vector.extract_strided_slice %42 {offsets = [0, 0, 0], sizes = [1, 8, 64], strides = [1, 1, 1]} : vector<1x8x256xbf16> to vector<1x8x64xbf16>
    %48 = vector.extract_strided_slice %45 {offsets = [0, 0, 0], sizes = [1, 8, 64], strides = [1, 1, 1]} : vector<1x8x256xbf16> to vector<1x8x64xbf16>
    "tpu.trace_start"() <{level = 10 : i32, message = "bqc,bkc->bqk"}> : () -> ()
    %cst_15 = arith.constant dense<0.000000e+00> : vector<1x8x8xf32>
    %49 = tpu.matmul %46, %47, %cst_15 {dimension_numbers = #tpu.dot_dimension_numbers<[2], [2], [1], [1], [0, 0, 0, 1, 1, 1], [0], [0]>} : vector<1x8x64xbf16>, vector<1x8x64xbf16>, vector<1x8x8xf32> -> vector<1x8x8xf32>
    "tpu.trace_stop"() : () -> ()
    %cst_16 = arith.constant dense<0xFF800000> : vector<1x8xf32>
    %50 = vector.multi_reduction <maximumf>, %49, %cst_16 [2] : vector<1x8x8xf32> to vector<1x8xf32>
    %51 = vector.shape_cast %50 : vector<1x8xf32> to vector<1x8x1xf32>
    %52 = vector.broadcast %51 : vector<1x8x1xf32> to vector<1x8x8xf32>
    %53 = arith.subf %49, %52 : vector<1x8x8xf32>
    %54 = math.exp %53 : vector<1x8x8xf32>
    %cst_17 = arith.constant dense<0.000000e+00> : vector<1x8xf32>
    %55 = vector.multi_reduction <add>, %54, %cst_17 [2] : vector<1x8x8xf32> to vector<1x8xf32>
    %56 = vector.shape_cast %55 : vector<1x8xf32> to vector<1x8x1xf32>
    %57 = tpu.reciprocal %56 {approx = true} : vector<1x8x1xf32> -> vector<1x8x1xf32>
    %58 = vector.broadcast %57 : vector<1x8x1xf32> to vector<1x8x8xf32>
    %59 = arith.mulf %54, %58 : vector<1x8x8xf32>
    %60 = arith.truncf %59 : vector<1x8x8xf32> to vector<1x8x8xbf16>
    "tpu.trace_start"() <{level = 10 : i32, message = "bqk,bkc->bqc"}> : () -> ()
    %cst_18 = arith.constant dense<0.000000e+00> : vector<1x8x64xf32>
    %61 = tpu.matmul %60, %48, %cst_18 {dimension_numbers = #tpu.dot_dimension_numbers<[2], [1], [1], [2], [0, 0, 0, 1, 1, 2], [0], [0]>} : vector<1x8x8xbf16>, vector<1x8x64xbf16>, vector<1x8x64xf32> -> vector<1x8x64xf32>
    "tpu.trace_stop"() : () -> ()
    %62 = vector.extract_strided_slice %39 {offsets = [0, 0, 64], sizes = [1, 8, 64], strides = [1, 1, 1]} : vector<1x8x256xbf16> to vector<1x8x64xbf16>
    %63 = vector.extract_strided_slice %42 {offsets = [0, 0, 64], sizes = [1, 8, 64], strides = [1, 1, 1]} : vector<1x8x256xbf16> to vector<1x8x64xbf16>
    %64 = vector.extract_strided_slice %45 {offsets = [0, 0, 64], sizes = [1, 8, 64], strides = [1, 1, 1]} : vector<1x8x256xbf16> to vector<1x8x64xbf16>
    "tpu.trace_start"() <{level = 10 : i32, message = "bqc,bkc->bqk"}> : () -> ()
    %cst_19 = arith.constant dense<0.000000e+00> : vector<1x8x8xf32>
    %65 = tpu.matmul %62, %63, %cst_19 {dimension_numbers = #tpu.dot_dimension_numbers<[2], [2], [1], [1], [0, 0, 0, 1, 1, 1], [0], [0]>} : vector<1x8x64xbf16>, vector<1x8x64xbf16>, vector<1x8x8xf32> -> vector<1x8x8xf32>
    "tpu.trace_stop"() : () -> ()
    %cst_20 = arith.constant dense<0xFF800000> : vector<1x8xf32>
    %66 = vector.multi_reduction <maximumf>, %65, %cst_20 [2] : vector<1x8x8xf32> to vector<1x8xf32>
    %67 = vector.shape_cast %66 : vector<1x8xf32> to vector<1x8x1xf32>
    %68 = vector.broadcast %67 : vector<1x8x1xf32> to vector<1x8x8xf32>
    %69 = arith.subf %65, %68 : vector<1x8x8xf32>
    %70 = math.exp %69 : vector<1x8x8xf32>
    %cst_21 = arith.constant dense<0.000000e+00> : vector<1x8xf32>
    %71 = vector.multi_reduction <add>, %70, %cst_21 [2] : vector<1x8x8xf32> to vector<1x8xf32>
    %72 = vector.shape_cast %71 : vector<1x8xf32> to vector<1x8x1xf32>
    %73 = tpu.reciprocal %72 {approx = true} : vector<1x8x1xf32> -> vector<1x8x1xf32>
    %74 = vector.broadcast %73 : vector<1x8x1xf32> to vector<1x8x8xf32>
    %75 = arith.mulf %70, %74 : vector<1x8x8xf32>
    %76 = arith.truncf %75 : vector<1x8x8xf32> to vector<1x8x8xbf16>
    "tpu.trace_start"() <{level = 10 : i32, message = "bqk,bkc->bqc"}> : () -> ()
    %cst_22 = arith.constant dense<0.000000e+00> : vector<1x8x64xf32>
    %77 = tpu.matmul %76, %64, %cst_22 {dimension_numbers = #tpu.dot_dimension_numbers<[2], [1], [1], [2], [0, 0, 0, 1, 1, 2], [0], [0]>} : vector<1x8x8xbf16>, vector<1x8x64xbf16>, vector<1x8x64xf32> -> vector<1x8x64xf32>
    "tpu.trace_stop"() : () -> ()
    %78 = vector.extract_strided_slice %39 {offsets = [0, 0, 128], sizes = [1, 8, 64], strides = [1, 1, 1]} : vector<1x8x256xbf16> to vector<1x8x64xbf16>
    %79 = vector.extract_strided_slice %42 {offsets = [0, 0, 128], sizes = [1, 8, 64], strides = [1, 1, 1]} : vector<1x8x256xbf16> to vector<1x8x64xbf16>
    %80 = vector.extract_strided_slice %45 {offsets = [0, 0, 128], sizes = [1, 8, 64], strides = [1, 1, 1]} : vector<1x8x256xbf16> to vector<1x8x64xbf16>
    "tpu.trace_start"() <{level = 10 : i32, message = "bqc,bkc->bqk"}> : () -> ()
    %cst_23 = arith.constant dense<0.000000e+00> : vector<1x8x8xf32>
    %81 = tpu.matmul %78, %79, %cst_23 {dimension_numbers = #tpu.dot_dimension_numbers<[2], [2], [1], [1], [0, 0, 0, 1, 1, 1], [0], [0]>} : vector<1x8x64xbf16>, vector<1x8x64xbf16>, vector<1x8x8xf32> -> vector<1x8x8xf32>
    "tpu.trace_stop"() : () -> ()
    %cst_24 = arith.constant dense<0xFF800000> : vector<1x8xf32>
    %82 = vector.multi_reduction <maximumf>, %81, %cst_24 [2] : vector<1x8x8xf32> to vector<1x8xf32>
    %83 = vector.shape_cast %82 : vector<1x8xf32> to vector<1x8x1xf32>
    %84 = vector.broadcast %83 : vector<1x8x1xf32> to vector<1x8x8xf32>
    %85 = arith.subf %81, %84 : vector<1x8x8xf32>
    %86 = math.exp %85 : vector<1x8x8xf32>
    %cst_25 = arith.constant dense<0.000000e+00> : vector<1x8xf32>
    %87 = vector.multi_reduction <add>, %86, %cst_25 [2] : vector<1x8x8xf32> to vector<1x8xf32>
    %88 = vector.shape_cast %87 : vector<1x8xf32> to vector<1x8x1xf32>
    %89 = tpu.reciprocal %88 {approx = true} : vector<1x8x1xf32> -> vector<1x8x1xf32>
    %90 = vector.broadcast %89 : vector<1x8x1xf32> to vector<1x8x8xf32>
    %91 = arith.mulf %86, %90 : vector<1x8x8xf32>
    %92 = arith.truncf %91 : vector<1x8x8xf32> to vector<1x8x8xbf16>
    "tpu.trace_start"() <{level = 10 : i32, message = "bqk,bkc->bqc"}> : () -> ()
    %cst_26 = arith.constant dense<0.000000e+00> : vector<1x8x64xf32>
    %93 = tpu.matmul %92, %80, %cst_26 {dimension_numbers = #tpu.dot_dimension_numbers<[2], [1], [1], [2], [0, 0, 0, 1, 1, 2], [0], [0]>} : vector<1x8x8xbf16>, vector<1x8x64xbf16>, vector<1x8x64xf32> -> vector<1x8x64xf32>
    "tpu.trace_stop"() : () -> ()
    %94 = vector.extract_strided_slice %39 {offsets = [0, 0, 192], sizes = [1, 8, 64], strides = [1, 1, 1]} : vector<1x8x256xbf16> to vector<1x8x64xbf16>
    %95 = vector.extract_strided_slice %42 {offsets = [0, 0, 192], sizes = [1, 8, 64], strides = [1, 1, 1]} : vector<1x8x256xbf16> to vector<1x8x64xbf16>
    %96 = vector.extract_strided_slice %45 {offsets = [0, 0, 192], sizes = [1, 8, 64], strides = [1, 1, 1]} : vector<1x8x256xbf16> to vector<1x8x64xbf16>
    "tpu.trace_start"() <{level = 10 : i32, message = "bqc,bkc->bqk"}> : () -> ()
    %cst_27 = arith.constant dense<0.000000e+00> : vector<1x8x8xf32>
    %97 = tpu.matmul %94, %95, %cst_27 {dimension_numbers = #tpu.dot_dimension_numbers<[2], [2], [1], [1], [0, 0, 0, 1, 1, 1], [0], [0]>} : vector<1x8x64xbf16>, vector<1x8x64xbf16>, vector<1x8x8xf32> -> vector<1x8x8xf32>
    "tpu.trace_stop"() : () -> ()
    %cst_28 = arith.constant dense<0xFF800000> : vector<1x8xf32>
    %98 = vector.multi_reduction <maximumf>, %97, %cst_28 [2] : vector<1x8x8xf32> to vector<1x8xf32>
    %99 = vector.shape_cast %98 : vector<1x8xf32> to vector<1x8x1xf32>
    %100 = vector.broadcast %99 : vector<1x8x1xf32> to vector<1x8x8xf32>
    %101 = arith.subf %97, %100 : vector<1x8x8xf32>
    %102 = math.exp %101 : vector<1x8x8xf32>
    %cst_29 = arith.constant dense<0.000000e+00> : vector<1x8xf32>
    %103 = vector.multi_reduction <add>, %102, %cst_29 [2] : vector<1x8x8xf32> to vector<1x8xf32>
    %104 = vector.shape_cast %103 : vector<1x8xf32> to vector<1x8x1xf32>
    %105 = tpu.reciprocal %104 {approx = true} : vector<1x8x1xf32> -> vector<1x8x1xf32>
    %106 = vector.broadcast %105 : vector<1x8x1xf32> to vector<1x8x8xf32>
    %107 = arith.mulf %102, %106 : vector<1x8x8xf32>
    %108 = arith.truncf %107 : vector<1x8x8xf32> to vector<1x8x8xbf16>
    "tpu.trace_start"() <{level = 10 : i32, message = "bqk,bkc->bqc"}> : () -> ()
    %cst_30 = arith.constant dense<0.000000e+00> : vector<1x8x64xf32>
    %109 = tpu.matmul %108, %96, %cst_30 {dimension_numbers = #tpu.dot_dimension_numbers<[2], [1], [1], [2], [0, 0, 0, 1, 1, 2], [0], [0]>} : vector<1x8x8xbf16>, vector<1x8x64xbf16>, vector<1x8x64xf32> -> vector<1x8x64xf32>
    "tpu.trace_stop"() : () -> ()
    %110 = tpu.concatenate %61, %77, %93, %109 in 2 : vector<1x8x64xf32>, vector<1x8x64xf32>, vector<1x8x64xf32>, vector<1x8x64xf32> -> vector<1x8x256xf32>
    %111 = vector.shape_cast %110 : vector<1x8x256xf32> to vector<8x256xf32>
    %112 = arith.truncf %111 : vector<8x256xf32> to vector<8x256xbf16>
    %c0_31 = arith.constant 0 : index
    %c0_32 = arith.constant 0 : index
    %113 = vector.load %arg6[%c0_31, %c0_32] : memref<256x256xbf16, #tpu.memory_space<vmem>>, vector<256x256xbf16>
    %cst_33 = arith.constant dense<0.000000e+00> : vector<8x256xf32>
    %114 = tpu.matmul %112, %113, %cst_33 {dimension_numbers = #tpu.dot_dimension_numbers<[1], [0], [0], [1], [0, 0, 1, 1], [], []>} : vector<8x256xbf16>, vector<256x256xbf16>, vector<8x256xf32> -> vector<8x256xf32>
    %c0_34 = arith.constant 0 : index
    %c0_35 = arith.constant 0 : index
    %115 = vector.load %arg7[%c0_34, %c0_35] : memref<1x256xf32, #tpu.memory_space<vmem>>, vector<1x256xf32>
    %116 = vector.shape_cast %115 : vector<1x256xf32> to vector<256xf32>
    %117 = vector.shape_cast %116 : vector<256xf32> to vector<1x256xf32>
    %118 = vector.broadcast %117 : vector<1x256xf32> to vector<8x256xf32>
    %119 = arith.addf %114, %118 : vector<8x256xf32>
    %120 = arith.addf %119, %2 : vector<8x256xf32>
    %c0_36 = arith.constant 0 : index
    %c0_37 = arith.constant 0 : index
    %121 = vector.load %arg8[%c0_36, %c0_37] : memref<1x256xf32, #tpu.memory_space<vmem>>, vector<1x256xf32>
    %122 = vector.shape_cast %121 : vector<1x256xf32> to vector<256xf32>
    %c0_38 = arith.constant 0 : index
    %c0_39 = arith.constant 0 : index
    %123 = vector.load %arg9[%c0_38, %c0_39] : memref<1x256xf32, #tpu.memory_space<vmem>>, vector<1x256xf32>
    %124 = vector.shape_cast %123 : vector<1x256xf32> to vector<256xf32>
    %cst_40 = arith.constant dense<0.000000e+00> : vector<8xf32>
    %125 = vector.multi_reduction <add>, %120, %cst_40 [1] : vector<8x256xf32> to vector<8xf32>
    %126 = vector.shape_cast %125 : vector<8xf32> to vector<8x1xf32>
    %cst_41 = arith.constant 2.560000e+02 : f32
    %127 = vector.broadcast %cst_41 : f32 to vector<8x1xf32>
    %128 = arith.divf %126, %127 : vector<8x1xf32>
    %129 = vector.broadcast %128 : vector<8x1xf32> to vector<8x256xf32>
    %130 = arith.subf %120, %129 : vector<8x256xf32>
    %131 = arith.mulf %130, %130 : vector<8x256xf32>
    %cst_42 = arith.constant dense<0.000000e+00> : vector<8xf32>
    %132 = vector.multi_reduction <add>, %131, %cst_42 [1] : vector<8x256xf32> to vector<8xf32>
    %133 = vector.shape_cast %132 : vector<8xf32> to vector<8x1xf32>
    %cst_43 = arith.constant 2.560000e+02 : f32
    %134 = vector.broadcast %cst_43 : f32 to vector<8x1xf32>
    %135 = arith.divf %133, %134 : vector<8x1xf32>
    %cst_44 = arith.constant 9.99999974E-6 : f32
    %136 = vector.broadcast %cst_44 : f32 to vector<8x1xf32>
    %137 = arith.addf %135, %136 : vector<8x1xf32>
    %138 = math.rsqrt %137 : vector<8x1xf32>
    %139 = vector.broadcast %138 : vector<8x1xf32> to vector<8x256xf32>
    %140 = arith.mulf %130, %139 : vector<8x256xf32>
    %141 = vector.shape_cast %122 : vector<256xf32> to vector<1x256xf32>
    %142 = vector.broadcast %141 : vector<1x256xf32> to vector<8x256xf32>
    %143 = arith.mulf %140, %142 : vector<8x256xf32>
    %144 = vector.shape_cast %124 : vector<256xf32> to vector<1x256xf32>
    %145 = vector.broadcast %144 : vector<1x256xf32> to vector<8x256xf32>
    %146 = arith.addf %143, %145 : vector<8x256xf32>
    %147 = arith.truncf %146 : vector<8x256xf32> to vector<8x256xbf16>
    %c0_45 = arith.constant 0 : index
    %c0_46 = arith.constant 0 : index
    %148 = vector.load %arg10[%c0_45, %c0_46] : memref<256x512xbf16, #tpu.memory_space<vmem>>, vector<256x512xbf16>
    %cst_47 = arith.constant dense<0.000000e+00> : vector<8x512xf32>
    %149 = tpu.matmul %147, %148, %cst_47 {dimension_numbers = #tpu.dot_dimension_numbers<[1], [0], [0], [1], [0, 0, 1, 1], [], []>} : vector<8x256xbf16>, vector<256x512xbf16>, vector<8x512xf32> -> vector<8x512xf32>
    %150 = arith.negf %149 : vector<8x512xf32>
    %151 = math.exp %150 : vector<8x512xf32>
    %cst_48 = arith.constant 1.000000e+00 : f32
    %152 = vector.broadcast %cst_48 : f32 to vector<8x512xf32>
    %153 = arith.addf %152, %151 : vector<8x512xf32>
    %154 = arith.divf %152, %153 : vector<8x512xf32>
    %155 = arith.mulf %149, %154 : vector<8x512xf32>
    %156 = arith.truncf %155 : vector<8x512xf32> to vector<8x512xbf16>
    %c0_49 = arith.constant 0 : index
    %c0_50 = arith.constant 0 : index
    %157 = vector.load %arg11[%c0_49, %c0_50] : memref<512x256xbf16, #tpu.memory_space<vmem>>, vector<512x256xbf16>
    %cst_51 = arith.constant dense<0.000000e+00> : vector<8x256xf32>
    %158 = tpu.matmul %156, %157, %cst_51 {dimension_numbers = #tpu.dot_dimension_numbers<[1], [0], [0], [1], [0, 0, 1, 1], [], []>} : vector<8x512xbf16>, vector<512x256xbf16>, vector<8x256xf32> -> vector<8x256xf32>
    %159 = arith.addf %158, %120 : vector<8x256xf32>
    %160 = vector.shape_cast %159 : vector<8x256xf32> to vector<1x8x256xf32>
    %161 = arith.truncf %160 : vector<1x8x256xf32> to vector<1x8x256xbf16>
    %c0_52 = arith.constant 0 : index
    %c0_53 = arith.constant 0 : index
    %c0_54 = arith.constant 0 : index
    %162 = vector.load %arg12[%c0_52, %c0_53, %c0_54] : memref<1x8x256xbf16, #tpu.memory_space<vmem>>, vector<1x8x256xbf16>
    tpu.vector_store %arg12[%c0_52, %c0_53, %c0_54], %161 {strides = array<i32>} : memref<1x8x256xbf16, #tpu.memory_space<vmem>>, vector<1x8x256xbf16>,
    return
  }
  func.func @transform_0(%arg0: i32) -> (i32, i32, i32) {
    %c0_i32 = arith.constant 0 : i32
    %c0_i32_0 = arith.constant 0 : i32
    %c0_i32_1 = arith.constant 0 : i32
    return %arg0, %c0_i32, %c0_i32_0 : i32, i32, i32
  }
  func.func @transform_1(%arg0: i32) -> (i32, i32) {
    %c0_i32 = arith.constant 0 : i32
    %c0_i32_0 = arith.constant 0 : i32
    %c0_i32_1 = arith.constant 0 : i32
    return %c0_i32, %c0_i32_0 : i32, i32
  }
  func.func @transform_2(%arg0: i32) -> (i32, i32) {
    %c0_i32 = arith.constant 0 : i32
    %c0_i32_0 = arith.constant 0 : i32
    %c0_i32_1 = arith.constant 0 : i32
    return %c0_i32, %c0_i32_0 : i32, i32
  }
  func.func @transform_3(%arg0: i32) -> (i32, i32) {
    %c0_i32 = arith.constant 0 : i32
    %c0_i32_0 = arith.constant 0 : i32
    %c0_i32_1 = arith.constant 0 : i32
    return %c0_i32, %c0_i32_0 : i32, i32
  }
  func.func @transform_4(%arg0: i32) -> (i32, i32) {
    %c0_i32 = arith.constant 0 : i32
    %c0_i32_0 = arith.constant 0 : i32
    %c0_i32_1 = arith.constant 0 : i32
    return %c0_i32, %c0_i32_0 : i32, i32
  }
  func.func @transform_5(%arg0: i32) -> (i32, i32) {
    %c0_i32 = arith.constant 0 : i32
    %c0_i32_0 = arith.constant 0 : i32
    %c0_i32_1 = arith.constant 0 : i32
    return %c0_i32, %c0_i32_0 : i32, i32
  }
  func.func @transform_6(%arg0: i32) -> (i32, i32) {
    %c0_i32 = arith.constant 0 : i32
    %c0_i32_0 = arith.constant 0 : i32
    %c0_i32_1 = arith.constant 0 : i32
    return %c0_i32, %c0_i32_0 : i32, i32
  }
  func.func @transform_7(%arg0: i32) -> (i32, i32) {
    %c0_i32 = arith.constant 0 : i32
    %c0_i32_0 = arith.constant 0 : i32
    %c0_i32_1 = arith.constant 0 : i32
    return %c0_i32, %c0_i32_0 : i32, i32
  }
  func.func @transform_8(%arg0: i32) -> (i32, i32) {
    %c0_i32 = arith.constant 0 : i32
    %c0_i32_0 = arith.constant 0 : i32
    %c0_i32_1 = arith.constant 0 : i32
    return %c0_i32, %c0_i32_0 : i32, i32
  }
  func.func @transform_9(%arg0: i32) -> (i32, i32) {
    %c0_i32 = arith.constant 0 : i32
    %c0_i32_0 = arith.constant 0 : i32
    %c0_i32_1 = arith.constant 0 : i32
    return %c0_i32, %c0_i32_0 : i32, i32
  }
  func.func @transform_10(%arg0: i32) -> (i32, i32) {
    %c0_i32 = arith.constant 0 : i32
    %c0_i32_0 = arith.constant 0 : i32
    %c0_i32_1 = arith.constant 0 : i32
    return %c0_i32, %c0_i32_0 : i32, i32
  }
  func.func @transform_11(%arg0: i32) -> (i32, i32, i32) {
    %c0_i32 = arith.constant 0 : i32
    %c0_i32_0 = arith.constant 0 : i32
    %c0_i32_1 = arith.constant 0 : i32
    return %arg0, %c0_i32, %c0_i32_0 : i32, i32, i32
  }
}

</mosaic_0001>

<llo_original>
// kernel: tpu_custom_call.1
$region0: #{tpu_custom_call.1}
  #allocation0 [shape = 'u32[]', space=smem, size = 0x4, offset = 0x4, fixed_abs, tag = 'smem constant byte address 0x4 - core index']
  #allocation1 [shape = 'u32[144,128]{1,0:T(1,128)}', space=vmem, size = 0x12000, scoped, tag = 'internal scratch']
  %s0 = inlined_call_operand.hbm [shape: bf16[2,8,256], index: 0, kind: input, shape index: {}]
  %s1 = inlined_call_operand.hbm [shape: f32[1,256], index: 1, kind: input, shape index: {}]
  %s2 = inlined_call_operand.hbm [shape: f32[1,256], index: 2, kind: input, shape index: {}]
  %s3 = inlined_call_operand.hbm [shape: bf16[256,768], index: 3, kind: input, shape index: {}]
  %s4 = inlined_call_operand.vmem [shape: f32[1,768], index: 4, kind: input, shape index: {}]
  %s5 = inlined_call_operand.hbm [shape: bf16[256,256], index: 5, kind: input, shape index: {}]
  %s6 = inlined_call_operand.vmem [shape: f32[1,256], index: 6, kind: input, shape index: {}]
  %s7 = inlined_call_operand.vmem [shape: f32[1,256], index: 7, kind: input, shape index: {}]
  %s8 = inlined_call_operand.vmem [shape: f32[1,256], index: 8, kind: input, shape index: {}]
  %s9 = inlined_call_operand.hbm [shape: bf16[256,512], index: 9, kind: input, shape index: {}]
  %s10 = inlined_call_operand.hbm [shape: bf16[512,256], index: 10, kind: input, shape index: {}]
  %s11 = inlined_call_operand.hbm [shape: bf16[2,8,256], index: 11, kind: output, shape index: {}]
  %s12 = sld [smem:[#allocation0]]
  $region105: #{tpu_custom_call.1} parent=0
    _
  %s14 = ssub.s32 1, %s12
  %s15 = scalar_select 0, %s14, %s12
  $region1: #{tpu_custom_call.1} parent=0
    #allocation2 [shape = 'u8[8192]{0}', space=vmem, size = 0x2000, scoped, tag = 'input window, operand 0']
    #allocation3 [shape = 's32[2]{0}', space=sflag, size = 0x8, scoped, tag = 'scoped memory for tpu_custom_call.1']
    #allocation4 [shape = 's32[2]{0}', space=sflag, size = 0x8, scoped, tag = 'scoped memory for tpu_custom_call.1']
    #allocation5 [shape = 'u8[1024]{0}', space=vmem, size = 0x400, scoped, tag = 'input window, operand 1, single buffered']
    #allocation6 [shape = 's32[1]{0}', space=sflag, size = 0x4, scoped, tag = 'scoped memory for tpu_custom_call.1']
    #allocation7 [shape = 'u8[1024]{0}', space=vmem, size = 0x400, scoped, tag = 'input window, operand 2, single buffered']
    #allocation8 [shape = 'u8[393216]{0}', space=vmem, size = 0x60000, scoped, tag = 'input window, operand 3, single buffered']
    #allocation9 [shape = 's32[1]{0}', space=sflag, size = 0x4, scoped, tag = 'scoped memory for tpu_custom_call.1']
    #allocation10 [shape = 'u8[131072]{0}', space=vmem, size = 0x20000, scoped, tag = 'input window, operand 5, single buffered']
    #allocation11 [shape = 'u8[262144]{0}', space=vmem, size = 0x40000, scoped, tag = 'input window, operand 9, single buffered']
    #allocation12 [shape = 's32[1]{0}', space=sflag, size = 0x4, scoped, tag = 'scoped memory for tpu_custom_call.1']
    #allocation13 [shape = 'u8[262144]{0}', space=vmem, size = 0x40000, scoped, tag = 'input window, operand 10, single buffered']
    #allocation14 [shape = 'u8[8192]{0}', space=vmem, size = 0x2000, scoped, tag = 'output window, operand 0']
    %16 = vsyncpa [#allocation3], 0
    %s17 = scalar_lea.sflag [#allocation3], 1
    %18 = vsyncpa %s17, 0
    %19 = vsyncpa [#allocation6], 0
    %20 = vsyncpa [#allocation9], 0
    %21 = vsyncpa [#allocation12], 0
    %22 = vsyncpa [#allocation4], 0
    %s23 = scalar_lea.sflag [#allocation4], 1
    %24 = vsyncpa %s23, 0
    loop: start=0, step=1, limit=4
    $region2: #{tpu_custom_call.1} parent=1 // loop_pre_header
      _
    $region3: #{tpu_custom_call.1} parent=1 // loop_header
      %s26 = sphi 0, %s30
      %p27 = scmp.ge.s32.totalorder %s26, 4
      %s36 = sphi 0, %s38
      %s39 = sphi 0, %s36
      %s40 = sphi 0, %s39
      %s56 = sphi 0, %s40
      %s60 = sphi 0, %s60
      %s62 = sphi 0, %s60
      %s63 = sphi 0, %s62
      %s77 = sphi 0, %s63
      %s81 = sphi 0, %s81
      %s83 = sphi 0, %s81
      %s84 = sphi 0, %s83
      %s98 = sphi 0, %s84
      %s102 = sphi 0, %s102
      %s104 = sphi 0, %s102
      %s105 = sphi 0, %s104
      %s119 = sphi 0, %s105
      %s123 = sphi 0, %s123
      %s125 = sphi 0, %s123
      %s126 = sphi 0, %s125
      %s140 = sphi 0, %s126
      %s144 = sphi 0, %s144
      %s146 = sphi 0, %s144
      %s147 = sphi 0, %s146
      %s161 = sphi 0, %s147
      %s165 = sphi 0, %s165
      %s167 = sphi 0, %s165
      %s168 = sphi 0, %s167
      %s182 = sphi 0, %s168
      %s186 = sphi 0, %s186
      %s188 = sphi 0, %s186
      %s189 = sphi 0, %s188
      %s203 = sphi 0, %s189
      %s207 = sphi 0, %s207
      %s209 = sphi 0, %s207
      %s210 = sphi 0, %s209
      %s224 = sphi 0, %s210
      %s228 = sphi 0, %s228
      %s230 = sphi 0, %s228
      %s231 = sphi 0, %s230
      %s245 = sphi 0, %s231
      %s249 = sphi 0, %s249
      %s251 = sphi 0, %s249
      %s252 = sphi 0, %s251
      %s266 = sphi 0, %s252
      %s272 = sphi 0, %s274
      %s275 = sphi 0, %s272
      %s276 = sphi 0, %s275
      %s292 = sphi 0, %s276
    $region4: #{tpu_custom_call.1} parent=1 // loop_header_branch
      %29 = sbr.rel (%p27) target = $region8
    $region5: #{tpu_custom_call.1} parent=1 // loop_body
      %s31 = ssub.s32 %s26, 1
      %s32 = ssub.s32 %s26, 2
      %s33 = sadd.s32 %s26, 1
      %s34 = ssub.s32 %s26, %s33
      %p35 = scmp.eq.s32.totalorder %s34, 0
      %s37 = sadd.s32 %s36, 1
      %s38 = scalar_select %p35, %s36, %s37
      %p41 = pneg %p35
      %p42 = scmp.eq.s32.totalorder %s26, 1
      %p43 = por %p41, %p42
      %p44 = scmp.ne.s32.totalorder %s36, %s39
      %p45 = scmp.eq.s32.totalorder %s26, 0
      %p46 = por %p44, %p45
      %p47 = scmp.ne.s32.totalorder %s36, %s39
      %p48 = scmp.eq.s32.totalorder %s31, 1
      %p49 = por %p47, %p48
      %p50 = scmp.ne.s32.totalorder %s39, %s40
      %p51 = scmp.eq.s32.totalorder %s31, 0
      %p52 = por %p50, %p51
      %p53 = scmp.ne.s32.totalorder %s39, %s40
      %p54 = scmp.eq.s32.totalorder %s32, 1
      %p55 = por %p53, %p54
      %p57 = scmp.ne.s32.totalorder %s40, %s56
      %p58 = scmp.eq.s32.totalorder %s32, 0
      %p59 = por %p57, %p58
      %s61 = sadd.s32 %s60, 1
      %p64 = scmp.eq.s32.totalorder %s26, 1
      %p65 = scmp.ne.s32.totalorder %s60, %s62
      %p66 = scmp.eq.s32.totalorder %s26, 0
      %p67 = por %p65, %p66
      %p68 = scmp.ne.s32.totalorder %s60, %s62
      %p69 = scmp.eq.s32.totalorder %s31, 1
      %p70 = por %p68, %p69
      %p71 = scmp.ne.s32.totalorder %s62, %s63
      %p72 = scmp.eq.s32.totalorder %s31, 0
      %p73 = por %p71, %p72
      %p74 = scmp.ne.s32.totalorder %s62, %s63
      %p75 = scmp.eq.s32.totalorder %s32, 1
      %p76 = por %p74, %p75
      %p78 = scmp.ne.s32.totalorder %s63, %s77
      %p79 = scmp.eq.s32.totalorder %s32, 0
      %p80 = por %p78, %p79
      %s82 = sadd.s32 %s81, 1
      %p85 = scmp.eq.s32.totalorder %s26, 1
      %p86 = scmp.ne.s32.totalorder %s81, %s83
      %p87 = scmp.eq.s32.totalorder %s26, 0
      %p88 = por %p86, %p87
      %p89 = scmp.ne.s32.totalorder %s81, %s83
      %p90 = scmp.eq.s32.totalorder %s31, 1
      %p91 = por %p89, %p90
      %p92 = scmp.ne.s32.totalorder %s83, %s84
      %p93 = scmp.eq.s32.totalorder %s31, 0
      %p94 = por %p92, %p93
      %p95 = scmp.ne.s32.totalorder %s83, %s84
      %p96 = scmp.eq.s32.totalorder %s32, 1
      %p97 = por %p95, %p96
      %p99 = scmp.ne.s32.totalorder %s84, %s98
      %p100 = scmp.eq.s32.totalorder %s32, 0
      %p101 = por %p99, %p100
      %s103 = sadd.s32 %s102, 1
      %p106 = scmp.eq.s32.totalorder %s26, 1
      %p107 = scmp.ne.s32.totalorder %s102, %s104
      %p108 = scmp.eq.s32.totalorder %s26, 0
      %p109 = por %p107, %p108
      %p110 = scmp.ne.s32.totalorder %s102, %s104
      %p111 = scmp.eq.s32.totalorder %s31, 1
      %p112 = por %p110, %p111
      %p113 = scmp.ne.s32.totalorder %s104, %s105
      %p114 = scmp.eq.s32.totalorder %s31, 0
      %p115 = por %p113, %p114
      %p116 = scmp.ne.s32.totalorder %s104, %s105
      %p117 = scmp.eq.s32.totalorder %s32, 1
      %p118 = por %p116, %p117
      %p120 = scmp.ne.s32.totalorder %s105, %s119
      %p121 = scmp.eq.s32.totalorder %s32, 0
      %p122 = por %p120, %p121
      %s124 = sadd.s32 %s123, 1
      %p127 = scmp.eq.s32.totalorder %s26, 1
      %p128 = scmp.ne.s32.totalorder %s123, %s125
      %p129 = scmp.eq.s32.totalorder %s26, 0
      %p130 = por %p128, %p129
      %p131 = scmp.ne.s32.totalorder %s123, %s125
      %p132 = scmp.eq.s32.totalorder %s31, 1
      %p133 = por %p131, %p132
      %p134 = scmp.ne.s32.totalorder %s125, %s126
      %p135 = scmp.eq.s32.totalorder %s31, 0
      %p136 = por %p134, %p135
      %p137 = scmp.ne.s32.totalorder %s125, %s126
      %p138 = scmp.eq.s32.totalorder %s32, 1
      %p139 = por %p137, %p138
      %p141 = scmp.ne.s32.totalorder %s126, %s140
      %p142 = scmp.eq.s32.totalorder %s32, 0
      %p143 = por %p141, %p142
      %s145 = sadd.s32 %s144, 1
      %p148 = scmp.eq.s32.totalorder %s26, 1
      %p149 = scmp.ne.s32.totalorder %s144, %s146
      %p150 = scmp.eq.s32.totalorder %s26, 0
      %p151 = por %p149, %p150
      %p152 = scmp.ne.s32.totalorder %s144, %s146
      %p153 = scmp.eq.s32.totalorder %s31, 1
      %p154 = por %p152, %p153
      %p155 = scmp.ne.s32.totalorder %s146, %s147
      %p156 = scmp.eq.s32.totalorder %s31, 0
      %p157 = por %p155, %p156
      %p158 = scmp.ne.s32.totalorder %s146, %s147
      %p159 = scmp.eq.s32.totalorder %s32, 1
      %p160 = por %p158, %p159
      %p162 = scmp.ne.s32.totalorder %s147, %s161
      %p163 = scmp.eq.s32.totalorder %s32, 0
      %p164 = por %p162, %p163
      %s166 = sadd.s32 %s165, 1
      %p169 = scmp.eq.s32.totalorder %s26, 1
      %p170 = scmp.ne.s32.totalorder %s165, %s167
      %p171 = scmp.eq.s32.totalorder %s26, 0
      %p172 = por %p170, %p171
      %p173 = scmp.ne.s32.totalorder %s165, %s167
      %p174 = scmp.eq.s32.totalorder %s31, 1
      %p175 = por %p173, %p174
      %p176 = scmp.ne.s32.totalorder %s167, %s168
      %p177 = scmp.eq.s32.totalorder %s31, 0
      %p178 = por %p176, %p177
      %p179 = scmp.ne.s32.totalorder %s167, %s168
      %p180 = scmp.eq.s32.totalorder %s32, 1
      %p181 = por %p179, %p180
      %p183 = scmp.ne.s32.totalorder %s168, %s182
      %p184 = scmp.eq.s32.totalorder %s32, 0
      %p185 = por %p183, %p184
      %s187 = sadd.s32 %s186, 1
      %p190 = scmp.eq.s32.totalorder %s26, 1
      %p191 = scmp.ne.s32.totalorder %s186, %s188
      %p192 = scmp.eq.s32.totalorder %s26, 0
      %p193 = por %p191, %p192
      %p194 = scmp.ne.s32.totalorder %s186, %s188
      %p195 = scmp.eq.s32.totalorder %s31, 1
      %p196 = por %p194, %p195
      %p197 = scmp.ne.s32.totalorder %s188, %s189
      %p198 = scmp.eq.s32.totalorder %s31, 0
      %p199 = por %p197, %p198
      %p200 = scmp.ne.s32.totalorder %s188, %s189
      %p201 = scmp.eq.s32.totalorder %s32, 1
      %p202 = por %p200, %p201
      %p204 = scmp.ne.s32.totalorder %s189, %s203
      %p205 = scmp.eq.s32.totalorder %s32, 0
      %p206 = por %p204, %p205
      %s208 = sadd.s32 %s207, 1
      %p211 = scmp.eq.s32.totalorder %s26, 1
      %p212 = scmp.ne.s32.totalorder %s207, %s209
      %p213 = scmp.eq.s32.totalorder %s26, 0
      %p214 = por %p212, %p213
      %p215 = scmp.ne.s32.totalorder %s207, %s209
      %p216 = scmp.eq.s32.totalorder %s31, 1
      %p217 = por %p215, %p216
      %p218 = scmp.ne.s32.totalorder %s209, %s210
      %p219 = scmp.eq.s32.totalorder %s31, 0
      %p220 = por %p218, %p219
      %p221 = scmp.ne.s32.totalorder %s209, %s210
      %p222 = scmp.eq.s32.totalorder %s32, 1
      %p223 = por %p221, %p222
      %p225 = scmp.ne.s32.totalorder %s210, %s224
      %p226 = scmp.eq.s32.totalorder %s32, 0
      %p227 = por %p225, %p226
      %s229 = sadd.s32 %s228, 1
      %p232 = scmp.eq.s32.totalorder %s26, 1
      %p233 = scmp.ne.s32.totalorder %s228, %s230
      %p234 = scmp.eq.s32.totalorder %s26, 0
      %p235 = por %p233, %p234
      %p236 = scmp.ne.s32.totalorder %s228, %s230
      %p237 = scmp.eq.s32.totalorder %s31, 1
      %p238 = por %p236, %p237
      %p239 = scmp.ne.s32.totalorder %s230, %s231
      %p240 = scmp.eq.s32.totalorder %s31, 0
      %p241 = por %p239, %p240
      %p242 = scmp.ne.s32.totalorder %s230, %s231
      %p243 = scmp.eq.s32.totalorder %s32, 1
      %p244 = por %p242, %p243
      %p246 = scmp.ne.s32.totalorder %s231, %s245
      %p247 = scmp.eq.s32.totalorder %s32, 0
      %p248 = por %p246, %p247
      %s250 = sadd.s32 %s249, 1
      %p253 = scmp.eq.s32.totalorder %s26, 1
      %p254 = scmp.ne.s32.totalorder %s249, %s251
      %p255 = scmp.eq.s32.totalorder %s26, 0
      %p256 = por %p254, %p255
      %p257 = scmp.ne.s32.totalorder %s249, %s251
      %p258 = scmp.eq.s32.totalorder %s31, 1
      %p259 = por %p257, %p258
      %p260 = scmp.ne.s32.totalorder %s251, %s252
      %p261 = scmp.eq.s32.totalorder %s31, 0
      %p262 = por %p260, %p261
      %p263 = scmp.ne.s32.totalorder %s251, %s252
      %p264 = scmp.eq.s32.totalorder %s32, 1
      %p265 = por %p263, %p264
      %p267 = scmp.ne.s32.totalorder %s252, %s266
      %p268 = scmp.eq.s32.totalorder %s32, 0
      %p269 = por %p267, %p268
      %s270 = ssub.s32 %s26, %s33
      %p271 = scmp.eq.s32.totalorder %s270, 0
      %s273 = sadd.s32 %s272, 1
      %s274 = scalar_select %p271, %s272, %s273
      %p277 = pneg %p271
      %p278 = scmp.eq.s32.totalorder %s26, 1
      %p279 = por %p277, %p278
      %p280 = scmp.ne.s32.totalorder %s272, %s275
      %p281 = scmp.eq.s32.totalorder %s26, 0
      %p282 = por %p280, %p281
      %p283 = scmp.ne.s32.totalorder %s272, %s275
      %p284 = scmp.eq.s32.totalorder %s31, 1
      %p285 = por %p283, %p284
      %p286 = scmp.ne.s32.totalorder %s275, %s276
      %p287 = scmp.eq.s32.totalorder %s31, 0
      %p288 = por %p286, %p287
      %p289 = scmp.ne.s32.totalorder %s275, %s276
      %p290 = scmp.eq.s32.totalorder %s32, 1
      %p291 = por %p289, %p290
      %p293 = scmp.ne.s32.totalorder %s276, %s292
      %p294 = scmp.eq.s32.totalorder %s32, 0
      %p295 = por %p293, %p294
      %p296 = scmp.le.s32.totalorder 1, %s26
      %p297 = scmp.lt.s32.totalorder %s26, 3
      %p298 = pnand %p296, %p297
      %p299 = pneg %p298
      // Predicated region
      $region9: #{tpu_custom_call.1} parent=5 // pred_check
        _
      $region10: #{tpu_custom_call.1} parent=5 // pred_check_branch
        %301 = sbr.rel (%p298) target = $region12
      $region11: #{tpu_custom_call.1} parent=5 // pred_region
        %s302 = ssub.s32 %s26, 1
        // Predicated region
        $region13: #{tpu_custom_call.1} parent=11 // pred_check
          %p303 = pneg %p73
        $region14: #{tpu_custom_call.1} parent=11 // pred_check_branch
          %305 = sbr.rel (%p303) target = $region16
        $region15: #{tpu_custom_call.1} parent=11 // pred_region
          %s307 = ssub.s32 32, 32
          %308 = vsyncadd [#allocation6], %s307
          %s310 = sshll.u32 [#allocation5], 4
          %s311 = int_to_ptr.vmem [resolvable:$true] %s310
          %313 = dma.hbm_to_vmem [thread:$0]  %s1, 32, %s311, [#allocation6]
        $region16: #{tpu_custom_call.1} parent=11 // pred_fallthru
          _
        // Predicated region
        $region17: #{tpu_custom_call.1} parent=11 // pred_check
          %p314 = pneg %p94
        $region18: #{tpu_custom_call.1} parent=11 // pred_check_branch
          %316 = sbr.rel (%p314) target = $region20
        $region19: #{tpu_custom_call.1} parent=11 // pred_region
          %s318 = ssub.s32 32, 32
          %319 = vsyncadd [#allocation6], %s318
          %s321 = sshll.u32 [#allocation7], 4
          %s322 = int_to_ptr.vmem [resolvable:$true] %s321
          %324 = dma.hbm_to_vmem [thread:$0]  %s2, 32, %s322, [#allocation6]
        $region20: #{tpu_custom_call.1} parent=11 // pred_fallthru
          _
        // Predicated region
        $region21: #{tpu_custom_call.1} parent=11 // pred_check
          %p325 = pneg %p115
        $region22: #{tpu_custom_call.1} parent=11 // pred_check_branch
          %327 = sbr.rel (%p325) target = $region24
        $region23: #{tpu_custom_call.1} parent=11 // pred_region
          %s329 = ssub.s32 12288, 12288
          %330 = vsyncadd [#allocation9], %s329
          %s331 = sshll.u32 [#allocation8], 4
          %s332 = int_to_ptr.vmem [resolvable:$true] %s331
          %337 = dma.hbm_to_vmem [thread:$0]  %s3, 12288, %s332, [#allocation9], 384, 384, 24
        $region24: #{tpu_custom_call.1} parent=11 // pred_fallthru
          _
        // Predicated region
        $region25: #{tpu_custom_call.1} parent=11 // pred_check
          %p338 = pneg %p136
        $region26: #{tpu_custom_call.1} parent=11 // pred_check_branch
          %340 = sbr.rel (%p338) target = $region28
        $region27: #{tpu_custom_call.1} parent=11 // pred_region
          _
        $region28: #{tpu_custom_call.1} parent=11 // pred_fallthru
          _
        // Predicated region
        $region29: #{tpu_custom_call.1} parent=11 // pred_check
          %p341 = pneg %p157
        $region30: #{tpu_custom_call.1} parent=11 // pred_check_branch
          %343 = sbr.rel (%p341) target = $region32
        $region31: #{tpu_custom_call.1} parent=11 // pred_region
          %s345 = ssub.s32 4096, 4096
          %346 = vsyncadd [#allocation9], %s345
          %s347 = sshll.u32 [#allocation10], 4
          %s348 = int_to_ptr.vmem [resolvable:$true] %s347
          %353 = dma.hbm_to_vmem [thread:$0]  %s5, 4096, %s348, [#allocation9], 128, 128, 8
        $region32: #{tpu_custom_call.1} parent=11 // pred_fallthru
          _
        // Predicated region
        $region33: #{tpu_custom_call.1} parent=11 // pred_check
          %p354 = pneg %p178
        $region34: #{tpu_custom_call.1} parent=11 // pred_check_branch
          %356 = sbr.rel (%p354) target = $region36
        $region35: #{tpu_custom_call.1} parent=11 // pred_region
          _
        $region36: #{tpu_custom_call.1} parent=11 // pred_fallthru
          _
        // Predicated region
        $region37: #{tpu_custom_call.1} parent=11 // pred_check
          %p357 = pneg %p199
        $region38: #{tpu_custom_call.1} parent=11 // pred_check_branch
          %359 = sbr.rel (%p357) target = $region40
        $region39: #{tpu_custom_call.1} parent=11 // pred_region
          _
        $region40: #{tpu_custom_call.1} parent=11 // pred_fallthru
          _
        // Predicated region
        $region41: #{tpu_custom_call.1} parent=11 // pred_check
          %p360 = pneg %p220
        $region42: #{tpu_custom_call.1} parent=11 // pred_check_branch
          %362 = sbr.rel (%p360) target = $region44
        $region43: #{tpu_custom_call.1} parent=11 // pred_region
          _
        $region44: #{tpu_custom_call.1} parent=11 // pred_fallthru
          _
        // Predicated region
        $region45: #{tpu_custom_call.1} parent=11 // pred_check
          %p363 = pneg %p241
        $region46: #{tpu_custom_call.1} parent=11 // pred_check_branch
          %365 = sbr.rel (%p363) target = $region48
        $region47: #{tpu_custom_call.1} parent=11 // pred_region
          %s367 = ssub.s32 8192, 8192
          %368 = vsyncadd [#allocation12], %s367
          %s369 = sshll.u32 [#allocation11], 4
          %s370 = int_to_ptr.vmem [resolvable:$true] %s369
          %375 = dma.hbm_to_vmem [thread:$0]  %s9, 8192, %s370, [#allocation12], 256, 256, 16
        $region48: #{tpu_custom_call.1} parent=11 // pred_fallthru
          _
        // Predicated region
        $region49: #{tpu_custom_call.1} parent=11 // pred_check
          %p376 = pneg %p262
        $region50: #{tpu_custom_call.1} parent=11 // pred_check_branch
          %378 = sbr.rel (%p376) target = $region52
        $region51: #{tpu_custom_call.1} parent=11 // pred_region
          %s380 = ssub.s32 8192, 8192
          %381 = vsyncadd [#allocation12], %s380
          %s382 = sshll.u32 [#allocation13], 4
          %s383 = int_to_ptr.vmem [resolvable:$true] %s382
          %388 = dma.hbm_to_vmem [thread:$0]  %s10, 8192, %s383, [#allocation12], 128, 128, 8
        $region52: #{tpu_custom_call.1} parent=11 // pred_fallthru
          _
      $region12: #{tpu_custom_call.1} parent=5 // pred_fallthru
        _
      %p389 = scmp.lt.s32.totalorder %s26, 2
      // Predicated region
      $region53: #{tpu_custom_call.1} parent=5 // pred_check
        %p390 = pneg %p389
      $region54: #{tpu_custom_call.1} parent=5 // pred_check_branch
        %392 = sbr.rel (%p390) target = $region56
      $region55: #{tpu_custom_call.1} parent=5 // pred_region
        // Predicated region
        $region57: #{tpu_custom_call.1} parent=55 // pred_check
          %p393 = pneg %p46
        $region58: #{tpu_custom_call.1} parent=55 // pred_check_branch
          %395 = sbr.rel (%p393) target = $region60
        $region59: #{tpu_custom_call.1} parent=55 // pred_region
          %s396 = sand.u32 %s36, 1
          %s397 = scalar_lea.sflag [#allocation3], %s396
          %s398 = sand.u32 %s36, 1
          %s399 = smul.addr %s398, 8
          %s400 = scalar_lea.vmem [#allocation2], %s399
          %s402 = ssub.s32 128, 128
          %403 = vsyncadd %s397, %s402
          %s404 = smul.addr %s26, 2
          %s405 = smul.addr %s404, 64
          %s406 = scalar_lea.hbm %s0, %s405
          %s408 = sshll.u32 %s400, 4
          %s409 = int_to_ptr.vmem [resolvable:$true] %s408
          %411 = dma.hbm_to_vmem [thread:$0]  %s406, 128, %s409, %s397
        $region60: #{tpu_custom_call.1} parent=55 // pred_fallthru
          _
      $region56: #{tpu_custom_call.1} parent=5 // pred_fallthru
        _
      %p412 = scmp.le.s32.totalorder 1, %s26
      %p413 = scmp.lt.s32.totalorder %s26, 3
      %p414 = pnand %p412, %p413
      %p415 = pneg %p414
      // Predicated region
      $region61: #{tpu_custom_call.1} parent=5 // pred_check
        _
      $region62: #{tpu_custom_call.1} parent=5 // pred_check_branch
        %417 = sbr.rel (%p414) target = $region64
      $region63: #{tpu_custom_call.1} parent=5 // pred_region
        %s418 = ssub.s32 %s26, 1
        %s419 = sand.u32 %s39, 1
        %s420 = scalar_lea.sflag [#allocation3], %s419
        %s421 = sand.u32 %s39, 1
        %s422 = smul.addr %s421, 8
        %s423 = scalar_lea.vmem [#allocation2], %s422
        // Predicated region
        $region65: #{tpu_custom_call.1} parent=63 // pred_check
          %p424 = pneg %p52
        $region66: #{tpu_custom_call.1} parent=63 // pred_check_branch
          %426 = sbr.rel (%p424) target = $region68
        $region67: #{tpu_custom_call.1} parent=63 // pred_region
          %427 = dma.done %s420, 128
        $region68: #{tpu_custom_call.1} parent=63 // pred_fallthru
          _
        // Predicated region
        $region69: #{tpu_custom_call.1} parent=63 // pred_check
          %p428 = pneg %p73
        $region70: #{tpu_custom_call.1} parent=63 // pred_check_branch
          %430 = sbr.rel (%p428) target = $region72
        $region71: #{tpu_custom_call.1} parent=63 // pred_region
          %431 = dma.done [#allocation6], 32
        $region72: #{tpu_custom_call.1} parent=63 // pred_fallthru
          _
        // Predicated region
        $region73: #{tpu_custom_call.1} parent=63 // pred_check
          %p432 = pneg %p94
        $region74: #{tpu_custom_call.1} parent=63 // pred_check_branch
          %434 = sbr.rel (%p432) target = $region76
        $region75: #{tpu_custom_call.1} parent=63 // pred_region
          %435 = dma.done [#allocation6], 32
        $region76: #{tpu_custom_call.1} parent=63 // pred_fallthru
          _
        // Predicated region
        $region77: #{tpu_custom_call.1} parent=63 // pred_check
          %p436 = pneg %p115
        $region78: #{tpu_custom_call.1} parent=63 // pred_check_branch
          %438 = sbr.rel (%p436) target = $region80
        $region79: #{tpu_custom_call.1} parent=63 // pred_region
          %439 = dma.done [#allocation9], 12288
        $region80: #{tpu_custom_call.1} parent=63 // pred_fallthru
          _
        // Predicated region
        $region81: #{tpu_custom_call.1} parent=63 // pred_check
          %p440 = pneg %p157
        $region82: #{tpu_custom_call.1} parent=63 // pred_check_branch
          %442 = sbr.rel (%p440) target = $region84
        $region83: #{tpu_custom_call.1} parent=63 // pred_region
          %443 = dma.done [#allocation9], 4096
        $region84: #{tpu_custom_call.1} parent=63 // pred_fallthru
          _
        // Predicated region
        $region85: #{tpu_custom_call.1} parent=63 // pred_check
          %p444 = pneg %p241
        $region86: #{tpu_custom_call.1} parent=63 // pred_check_branch
          %446 = sbr.rel (%p444) target = $region88
        $region87: #{tpu_custom_call.1} parent=63 // pred_region
          %447 = dma.done [#allocation12], 8192
        $region88: #{tpu_custom_call.1} parent=63 // pred_fallthru
          _
        // Predicated region
        $region89: #{tpu_custom_call.1} parent=63 // pred_check
          %p448 = pneg %p262
        $region90: #{tpu_custom_call.1} parent=63 // pred_check_branch
          %450 = sbr.rel (%p448) target = $region92
        $region91: #{tpu_custom_call.1} parent=63 // pred_region
          %451 = dma.done [#allocation12], 8192
        $region92: #{tpu_custom_call.1} parent=63 // pred_fallthru
          _
        %s452 = sand.u32 %s39, 1
        %s453 = scalar_lea.sflag [#allocation3], %s452
        %s454 = sand.u32 %s39, 1
        %s455 = smul.addr %s454, 8
        %s456 = scalar_lea.vmem [#allocation2], %s455
        %p457 = pneg %p52
        %p458 = pneg %p49
        %p459 = pneg %p73
        %p460 = pneg %p70
        %p461 = pneg %p94
        %p462 = pneg %p91
        %p463 = pneg %p115
        %p464 = pneg %p112
        %p465 = pneg %p136
        %p466 = pneg %p133
        %p467 = pneg %p157
        %p468 = pneg %p154
        %p469 = pneg %p178
        %p470 = pneg %p175
        %p471 = pneg %p199
        %p472 = pneg %p196
        %p473 = pneg %p220
        %p474 = pneg %p217
        %p475 = pneg %p241
        %p476 = pneg %p238
        %p477 = pneg %p262
        %p478 = pneg %p259
        %p479 = pneg %p288
        %p480 = pneg %p285
        %s481 = sand.u32 %s275, 1
        %s482 = scalar_lea.sflag [#allocation4], %s481
        %s483 = sand.u32 %s275, 1
        %s484 = smul.addr %s483, 8
        %s485 = scalar_lea.vmem [#allocation14], %s484
        %v487 = vld [vmem:[%s423] sm:$0xff]
        %v488 = vunpack.c.l.bf16 %v487
        %v489 = vunpack.c.h.bf16 %v487
        %v490 = vld [vmem:[#allocation5] sm:$0x3]
        %v491 = vld [vmem:[#allocation7] sm:$0x3]
        %v492 = vadd.f32 %v488, %v489
        %493 = vadd.xlane.f32.xlu0 %v492
        %v494 = vpop.xlane.xlu0 %493
        %v495 = vrcp.pop 256.0
        %v496 = vmul.f32 %v494, %v495
        %v497 = vsub.f32 %v488, %v496
        %v498 = vsub.f32 %v489, %v496
        %v499 = vmul.f32 %v497, %v497
        %v500 = vmul.f32 %v498, %v498
        %v501 = vadd.f32 %v499, %v500
        %502 = vadd.xlane.f32.xlu0 %v501
        %v503 = vpop.xlane.xlu0 %502
        %v504 = vmul.f32 %v503, %v495
        %v505 = vadd.f32 %v504, 1e-05
        %v506 = vrsqrt.pop %v505
        %v507 = vmul.f32 %v497, %v506
        %v508 = vmul.f32 %v498, %v506
        %v510 = vlaneseq
        %v511 = vshrl.u32 %v510, 7
        %v512 = vsub.s32 0, %v511
        %v513 = vrot.slane %v490, %v512
        %v514 = vlaneseq
        %v515 = vshrl.u32 %v514, 7
        %v516 = vsub.s32 1, %v515
        %v517 = vrot.slane %v490, %v516
        %v520 = vmul.f32 %v507, %v513
        %v521 = vmul.f32 %v508, %v517
        %v523 = vlaneseq
        %v524 = vshrl.u32 %v523, 7
        %v525 = vsub.s32 0, %v524
        %v526 = vrot.slane %v491, %v525
        %v527 = vlaneseq
        %v528 = vshrl.u32 %v527, 7
        %v529 = vsub.s32 1, %v528
        %v530 = vrot.slane %v491, %v529
        %v533 = vadd.f32 %v520, %v526
        %v534 = vadd.f32 %v521, %v530
        %v535 = vpack.c.bf16 %v533, %v533
        %v536 = vpack.c.bf16 %v534, %v534
        %v537 = vld [vmem:[#allocation8] sm:$0xff]
        %v538 = vld [vmem:[#allocation8 + $0x8] sm:$0xff]
        %v539 = vld [vmem:[#allocation8 + $0x10] sm:$0xff]
        %v540 = vld [vmem:[#allocation8 + $0x18] sm:$0xff]
        %v541 = vld [vmem:[#allocation8 + $0x20] sm:$0xff]
        %v542 = vld [vmem:[#allocation8 + $0x28] sm:$0xff]
        %v543 = vld [vmem:[#allocation8 + $0x30] sm:$0xff]
        %v544 = vld [vmem:[#allocation8 + $0x38] sm:$0xff]
        %v545 = vld [vmem:[#allocation8 + $0x40] sm:$0xff]
        %v546 = vld [vmem:[#allocation8 + $0x48] sm:$0xff]
        %v547 = vld [vmem:[#allocation8 + $0x50] sm:$0xff]
        %v548 = vld [vmem:[#allocation8 + $0x58] sm:$0xff]
        %v549 = vld [vmem:[#allocation8 + $0x60] sm:$0xff]
        %v550 = vld [vmem:[#allocation8 + $0x68] sm:$0xff]
        %v551 = vld [vmem:[#allocation8 + $0x70] sm:$0xff]
        %v552 = vld [vmem:[#allocation8 + $0x78] sm:$0xff]
        %v553 = vld [vmem:[#allocation8 + $0x80] sm:$0xff]
        %v554 = vld [vmem:[#allocation8 + $0x88] sm:$0xff]
        %v555 = vld [vmem:[#allocation8 + $0x90] sm:$0xff]
        %v556 = vld [vmem:[#allocation8 + $0x98] sm:$0xff]
        %v557 = vld [vmem:[#allocation8 + $0xa0] sm:$0xff]
        %v558 = vld [vmem:[#allocation8 + $0xa8] sm:$0xff]
        %v559 = vld [vmem:[#allocation8 + $0xb0] sm:$0xff]
        %v560 = vld [vmem:[#allocation8 + $0xb8] sm:$0xff]
        %v561 = vld [vmem:[#allocation8 + $0xc0] sm:$0xff]
        %v562 = vld [vmem:[#allocation8 + $0xc8] sm:$0xff]
        %v563 = vld [vmem:[#allocation8 + $0xd0] sm:$0xff]
        %v564 = vld [vmem:[#allocation8 + $0xd8] sm:$0xff]
        %v565 = vld [vmem:[#allocation8 + $0xe0] sm:$0xff]
        %v566 = vld [vmem:[#allocation8 + $0xe8] sm:$0xff]
        %v567 = vld [vmem:[#allocation8 + $0xf0] sm:$0xff]
        %v568 = vld [vmem:[#allocation8 + $0xf8] sm:$0xff]
        %v569 = vld [vmem:[#allocation8 + $0x100] sm:$0xff]
        %v570 = vld [vmem:[#allocation8 + $0x108] sm:$0xff]
        %v571 = vld [vmem:[#allocation8 + $0x110] sm:$0xff]
        %v572 = vld [vmem:[#allocation8 + $0x118] sm:$0xff]
        %v573 = vld [vmem:[#allocation8 + $0x120] sm:$0xff]
        %v574 = vld [vmem:[#allocation8 + $0x128] sm:$0xff]
        %v575 = vld [vmem:[#allocation8 + $0x130] sm:$0xff]
        %v576 = vld [vmem:[#allocation8 + $0x138] sm:$0xff]
        %v577 = vld [vmem:[#allocation8 + $0x140] sm:$0xff]
        %v578 = vld [vmem:[#allocation8 + $0x148] sm:$0xff]
        %v579 = vld [vmem:[#allocation8 + $0x150] sm:$0xff]
        %v580 = vld [vmem:[#allocation8 + $0x158] sm:$0xff]
        %v581 = vld [vmem:[#allocation8 + $0x160] sm:$0xff]
        %v582 = vld [vmem:[#allocation8 + $0x168] sm:$0xff]
        %v583 = vld [vmem:[#allocation8 + $0x170] sm:$0xff]
        %v584 = vld [vmem:[#allocation8 + $0x178] sm:$0xff]
        %v585 = vld [vmem:[#allocation8 + $0x180] sm:$0xff]
        %v586 = vld [vmem:[#allocation8 + $0x188] sm:$0xff]
        %v587 = vld [vmem:[#allocation8 + $0x190] sm:$0xff]
        %v588 = vld [vmem:[#allocation8 + $0x198] sm:$0xff]
        %v589 = vld [vmem:[#allocation8 + $0x1a0] sm:$0xff]
        %v590 = vld [vmem:[#allocation8 + $0x1a8] sm:$0xff]
        %v591 = vld [vmem:[#allocation8 + $0x1b0] sm:$0xff]
        %v592 = vld [vmem:[#allocation8 + $0x1b8] sm:$0xff]
        %v593 = vld [vmem:[#allocation8 + $0x1c0] sm:$0xff]
        %v594 = vld [vmem:[#allocation8 + $0x1c8] sm:$0xff]
        %v595 = vld [vmem:[#allocation8 + $0x1d0] sm:$0xff]
        %v596 = vld [vmem:[#allocation8 + $0x1d8] sm:$0xff]
        %v597 = vld [vmem:[#allocation8 + $0x1e0] sm:$0xff]
        %v598 = vld [vmem:[#allocation8 + $0x1e8] sm:$0xff]
        %v599 = vld [vmem:[#allocation8 + $0x1f0] sm:$0xff]
        %v600 = vld [vmem:[#allocation8 + $0x1f8] sm:$0xff]
        %v601 = vld [vmem:[#allocation8 + $0x200] sm:$0xff]
        %v602 = vld [vmem:[#allocation8 + $0x208] sm:$0xff]
        %v603 = vld [vmem:[#allocation8 + $0x210] sm:$0xff]
        %v604 = vld [vmem:[#allocation8 + $0x218] sm:$0xff]
        %v605 = vld [vmem:[#allocation8 + $0x220] sm:$0xff]
        %v606 = vld [vmem:[#allocation8 + $0x228] sm:$0xff]
        %v607 = vld [vmem:[#allocation8 + $0x230] sm:$0xff]
        %v608 = vld [vmem:[#allocation8 + $0x238] sm:$0xff]
        %v609 = vld [vmem:[#allocation8 + $0x240] sm:$0xff]
        %v610 = vld [vmem:[#allocation8 + $0x248] sm:$0xff]
        %v611 = vld [vmem:[#allocation8 + $0x250] sm:$0xff]
        %v612 = vld [vmem:[#allocation8 + $0x258] sm:$0xff]
        %v613 = vld [vmem:[#allocation8 + $0x260] sm:$0xff]
        %v614 = vld [vmem:[#allocation8 + $0x268] sm:$0xff]
        %v615 = vld [vmem:[#allocation8 + $0x270] sm:$0xff]
        %v616 = vld [vmem:[#allocation8 + $0x278] sm:$0xff]
        %v617 = vld [vmem:[#allocation8 + $0x280] sm:$0xff]
        %v618 = vld [vmem:[#allocation8 + $0x288] sm:$0xff]
        %v619 = vld [vmem:[#allocation8 + $0x290] sm:$0xff]
        %v620 = vld [vmem:[#allocation8 + $0x298] sm:$0xff]
        %v621 = vld [vmem:[#allocation8 + $0x2a0] sm:$0xff]
        %v622 = vld [vmem:[#allocation8 + $0x2a8] sm:$0xff]
        %v623 = vld [vmem:[#allocation8 + $0x2b0] sm:$0xff]
        %v624 = vld [vmem:[#allocation8 + $0x2b8] sm:$0xff]
        %v625 = vld [vmem:[#allocation8 + $0x2c0] sm:$0xff]
        %v626 = vld [vmem:[#allocation8 + $0x2c8] sm:$0xff]
        %v627 = vld [vmem:[#allocation8 + $0x2d0] sm:$0xff]
        %v628 = vld [vmem:[#allocation8 + $0x2d8] sm:$0xff]
        %v629 = vld [vmem:[#allocation8 + $0x2e0] sm:$0xff]
        %v630 = vld [vmem:[#allocation8 + $0x2e8] sm:$0xff]
        %v631 = vld [vmem:[#allocation8 + $0x2f0] sm:$0xff]
        %v632 = vld [vmem:[#allocation8 + $0x2f8] sm:$0xff]
        %v633 = vld [vmem:[%s4] sm:$0x3f]
        %v635 = vlaneseq
        %v636 = vshrl.u32 %v635, 7
        %v637 = vsub.s32 0, %v636
        %v638 = vrot.slane %v633, %v637
        %v639 = vlaneseq
        %v640 = vshrl.u32 %v639, 7
        %v641 = vsub.s32 1, %v640
        %v642 = vrot.slane %v633, %v641
        %v643 = vlaneseq
        %v644 = vshrl.u32 %v643, 7
        %v645 = vsub.s32 2, %v644
        %v646 = vrot.slane %v633, %v645
        %v647 = vlaneseq
        %v648 = vshrl.u32 %v647, 7
        %v649 = vsub.s32 3, %v648
        %v650 = vrot.slane %v633, %v649
        %v651 = vlaneseq
        %v652 = vshrl.u32 %v651, 7
        %v653 = vsub.s32 4, %v652
        %v654 = vrot.slane %v633, %v653
        %v655 = vlaneseq
        %v656 = vshrl.u32 %v655, 7
        %v657 = vsub.s32 5, %v656
        %v658 = vrot.slane %v633, %v657
        %v761 = vunpack.c.l.b16 %v537
        %v762 = vunpack.c.h.b16 %v537
        %v763 = vunpack.c.l.b16 %v538
        %v764 = vunpack.c.h.b16 %v538
        %v765 = vunpack.c.l.b16 %v539
        %v766 = vunpack.c.h.b16 %v539
        %v767 = vunpack.c.l.b16 %v540
        %v768 = vunpack.c.h.b16 %v540
        %v769 = vunpack.c.l.b16 %v541
        %v770 = vunpack.c.h.b16 %v541
        %v771 = vunpack.c.l.b16 %v542
        %v772 = vunpack.c.h.b16 %v542
        %v773 = vunpack.c.l.b16 %v543
        %v774 = vunpack.c.h.b16 %v543
        %v775 = vunpack.c.l.b16 %v544
        %v776 = vunpack.c.h.b16 %v544
        %v777 = vunpack.c.l.b16 %v545
        %v778 = vunpack.c.h.b16 %v545
        %v779 = vunpack.c.l.b16 %v546
        %v780 = vunpack.c.h.b16 %v546
        %v781 = vunpack.c.l.b16 %v547
        %v782 = vunpack.c.h.b16 %v547
        %v783 = vunpack.c.l.b16 %v548
        %v784 = vunpack.c.h.b16 %v548
        %v785 = vunpack.c.l.b16 %v549
        %v786 = vunpack.c.h.b16 %v549
        %v787 = vunpack.c.l.b16 %v550
        %v788 = vunpack.c.h.b16 %v550
        %v789 = vunpack.c.l.b16 %v551
        %v790 = vunpack.c.h.b16 %v551
        %v791 = vunpack.c.l.b16 %v552
        %v792 = vunpack.c.h.b16 %v552
        %v793 = vunpack.c.l.b16 %v553
        %v794 = vunpack.c.h.b16 %v553
        %v795 = vunpack.c.l.b16 %v554
        %v796 = vunpack.c.h.b16 %v554
        %v797 = vunpack.c.l.b16 %v555
        %v798 = vunpack.c.h.b16 %v555
        %v799 = vunpack.c.l.b16 %v556
        %v800 = vunpack.c.h.b16 %v556
        %v801 = vunpack.c.l.b16 %v557
        %v802 = vunpack.c.h.b16 %v557
        %v803 = vunpack.c.l.b16 %v558
        %v804 = vunpack.c.h.b16 %v558
        %v805 = vunpack.c.l.b16 %v559
        %v806 = vunpack.c.h.b16 %v559
        %v807 = vunpack.c.l.b16 %v560
        %v808 = vunpack.c.h.b16 %v560
        %v809 = vunpack.c.l.b16 %v561
        %v810 = vunpack.c.h.b16 %v561
        %v811 = vunpack.c.l.b16 %v562
        %v812 = vunpack.c.h.b16 %v562
        %v813 = vunpack.c.l.b16 %v563
        %v814 = vunpack.c.h.b16 %v563
        %v815 = vunpack.c.l.b16 %v564
        %v816 = vunpack.c.h.b16 %v564
        %v817 = vunpack.c.l.b16 %v565
        %v818 = vunpack.c.h.b16 %v565
        %v819 = vunpack.c.l.b16 %v566
        %v820 = vunpack.c.h.b16 %v566
        %v821 = vunpack.c.l.b16 %v567
        %v822 = vunpack.c.h.b16 %v567
        %v823 = vunpack.c.l.b16 %v568
        %v824 = vunpack.c.h.b16 %v568
        %v825 = vunpack.c.l.b16 %v569
        %v826 = vunpack.c.h.b16 %v569
        %v827 = vunpack.c.l.b16 %v570
        %v828 = vunpack.c.h.b16 %v570
        %v829 = vunpack.c.l.b16 %v571
        %v830 = vunpack.c.h.b16 %v571
        %v831 = vunpack.c.l.b16 %v572
        %v832 = vunpack.c.h.b16 %v572
        %v833 = vunpack.c.l.b16 %v573
        %v834 = vunpack.c.h.b16 %v573
        %v835 = vunpack.c.l.b16 %v574
        %v836 = vunpack.c.h.b16 %v574
        %v837 = vunpack.c.l.b16 %v575
        %v838 = vunpack.c.h.b16 %v575
        %v839 = vunpack.c.l.b16 %v576
        %v840 = vunpack.c.h.b16 %v576
        %v841 = vunpack.c.l.b16 %v577
        %v842 = vunpack.c.h.b16 %v577
        %v843 = vunpack.c.l.b16 %v578
        %v844 = vunpack.c.h.b16 %v578
        %v845 = vunpack.c.l.b16 %v579
        %v846 = vunpack.c.h.b16 %v579
        %v847 = vunpack.c.l.b16 %v580
        %v848 = vunpack.c.h.b16 %v580
        %v849 = vunpack.c.l.b16 %v581
        %v850 = vunpack.c.h.b16 %v581
        %v851 = vunpack.c.l.b16 %v582
        %v852 = vunpack.c.h.b16 %v582
        %v853 = vunpack.c.l.b16 %v583
        %v854 = vunpack.c.h.b16 %v583
        %v855 = vunpack.c.l.b16 %v584
        %v856 = vunpack.c.h.b16 %v584
        %v857 = vunpack.c.l.b16 %v585
        %v858 = vunpack.c.h.b16 %v585
        %v859 = vunpack.c.l.b16 %v586
        %v860 = vunpack.c.h.b16 %v586
        %v861 = vunpack.c.l.b16 %v587
        %v862 = vunpack.c.h.b16 %v587
        %v863 = vunpack.c.l.b16 %v588
        %v864 = vunpack.c.h.b16 %v588
        %v865 = vunpack.c.l.b16 %v589
        %v866 = vunpack.c.h.b16 %v589
        %v867 = vunpack.c.l.b16 %v590
        %v868 = vunpack.c.h.b16 %v590
        %v869 = vunpack.c.l.b16 %v591
        %v870 = vunpack.c.h.b16 %v591
        %v871 = vunpack.c.l.b16 %v592
        %v872 = vunpack.c.h.b16 %v592
        %v873 = vunpack.c.l.b16 %v593
        %v874 = vunpack.c.h.b16 %v593
        %v875 = vunpack.c.l.b16 %v594
        %v876 = vunpack.c.h.b16 %v594
        %v877 = vunpack.c.l.b16 %v595
        %v878 = vunpack.c.h.b16 %v595
        %v879 = vunpack.c.l.b16 %v596
        %v880 = vunpack.c.h.b16 %v596
        %v881 = vunpack.c.l.b16 %v597
        %v882 = vunpack.c.h.b16 %v597
        %v883 = vunpack.c.l.b16 %v598
        %v884 = vunpack.c.h.b16 %v598
        %v885 = vunpack.c.l.b16 %v599
        %v886 = vunpack.c.h.b16 %v599
        %v887 = vunpack.c.l.b16 %v600
        %v888 = vunpack.c.h.b16 %v600
        %v889 = vunpack.c.l.b16 %v601
        %v890 = vunpack.c.h.b16 %v601
        %v891 = vunpack.c.l.b16 %v602
        %v892 = vunpack.c.h.b16 %v602
        %v893 = vunpack.c.l.b16 %v603
        %v894 = vunpack.c.h.b16 %v603
        %v895 = vunpack.c.l.b16 %v604
        %v896 = vunpack.c.h.b16 %v604
        %v897 = vunpack.c.l.b16 %v605
        %v898 = vunpack.c.h.b16 %v605
        %v899 = vunpack.c.l.b16 %v606
        %v900 = vunpack.c.h.b16 %v606
        %v901 = vunpack.c.l.b16 %v607
        %v902 = vunpack.c.h.b16 %v607
        %v903 = vunpack.c.l.b16 %v608
        %v904 = vunpack.c.h.b16 %v608
        %v905 = vunpack.c.l.b16 %v609
        %v906 = vunpack.c.h.b16 %v609
        %v907 = vunpack.c.l.b16 %v610
        %v908 = vunpack.c.h.b16 %v610
        %v909 = vunpack.c.l.b16 %v611
        %v910 = vunpack.c.h.b16 %v611
        %v911 = vunpack.c.l.b16 %v612
        %v912 = vunpack.c.h.b16 %v612
        %v913 = vunpack.c.l.b16 %v613
        %v914 = vunpack.c.h.b16 %v613
        %v915 = vunpack.c.l.b16 %v614
        %v916 = vunpack.c.h.b16 %v614
        %v917 = vunpack.c.l.b16 %v615
        %v918 = vunpack.c.h.b16 %v615
        %v919 = vunpack.c.l.b16 %v616
        %v920 = vunpack.c.h.b16 %v616
        %v921 = vunpack.c.l.b16 %v617
        %v922 = vunpack.c.h.b16 %v617
        %v923 = vunpack.c.l.b16 %v618
        %v924 = vunpack.c.h.b16 %v618
        %v925 = vunpack.c.l.b16 %v619
        %v926 = vunpack.c.h.b16 %v619
        %v927 = vunpack.c.l.b16 %v620
        %v928 = vunpack.c.h.b16 %v620
        %v929 = vunpack.c.l.b16 %v621
        %v930 = vunpack.c.h.b16 %v621
        %v931 = vunpack.c.l.b16 %v622
        %v932 = vunpack.c.h.b16 %v622
        %v933 = vunpack.c.l.b16 %v623
        %v934 = vunpack.c.h.b16 %v623
        %v935 = vunpack.c.l.b16 %v624
        %v936 = vunpack.c.h.b16 %v624
        %v937 = vunpack.c.l.b16 %v625
        %v938 = vunpack.c.h.b16 %v625
        %v939 = vunpack.c.l.b16 %v626
        %v940 = vunpack.c.h.b16 %v626
        %v941 = vunpack.c.l.b16 %v627
        %v942 = vunpack.c.h.b16 %v627
        %v943 = vunpack.c.l.b16 %v628
        %v944 = vunpack.c.h.b16 %v628
        %v945 = vunpack.c.l.b16 %v629
        %v946 = vunpack.c.h.b16 %v629
        %v947 = vunpack.c.l.b16 %v630
        %v948 = vunpack.c.h.b16 %v630
        %v949 = vunpack.c.l.b16 %v631
        %v950 = vunpack.c.h.b16 %v631
        %v951 = vunpack.c.l.b16 %v632
        %v952 = vunpack.c.h.b16 %v632
        %v953 = vpack.c.b16 %v767, %v761
        %v954 = vpack.c.b16 %v768, %v762
        %v955 = vpack.c.b16 %v769, %v763
        %v956 = vpack.c.b16 %v770, %v764
        %v957 = vpack.c.b16 %v771, %v765
        %v958 = vpack.c.b16 %v772, %v766
        %v959 = vpack.c.b16 %v779, %v773
        %v960 = vpack.c.b16 %v780, %v774
        %v961 = vpack.c.b16 %v781, %v775
        %v962 = vpack.c.b16 %v782, %v776
        %v963 = vpack.c.b16 %v783, %v777
        %v964 = vpack.c.b16 %v784, %v778
        %v965 = vpack.c.b16 %v791, %v785
        %v966 = vpack.c.b16 %v792, %v786
        %v967 = vpack.c.b16 %v793, %v787
        %v968 = vpack.c.b16 %v794, %v788
        %v969 = vpack.c.b16 %v795, %v789
        %v970 = vpack.c.b16 %v796, %v790
        %v971 = vpack.c.b16 %v803, %v797
        %v972 = vpack.c.b16 %v804, %v798
        %v973 = vpack.c.b16 %v805, %v799
        %v974 = vpack.c.b16 %v806, %v800
        %v975 = vpack.c.b16 %v807, %v801
        %v976 = vpack.c.b16 %v808, %v802
        %v977 = vpack.c.b16 %v815, %v809
        %v978 = vpack.c.b16 %v816, %v810
        %v979 = vpack.c.b16 %v817, %v811
        %v980 = vpack.c.b16 %v818, %v812
        %v981 = vpack.c.b16 %v819, %v813
        %v982 = vpack.c.b16 %v820, %v814
        %v983 = vpack.c.b16 %v827, %v821
        %v984 = vpack.c.b16 %v828, %v822
        %v985 = vpack.c.b16 %v829, %v823
        %v986 = vpack.c.b16 %v830, %v824
        %v987 = vpack.c.b16 %v831, %v825
        %v988 = vpack.c.b16 %v832, %v826
        %v989 = vpack.c.b16 %v839, %v833
        %v990 = vpack.c.b16 %v840, %v834
        %v991 = vpack.c.b16 %v841, %v835
        %v992 = vpack.c.b16 %v842, %v836
        %v993 = vpack.c.b16 %v843, %v837
        %v994 = vpack.c.b16 %v844, %v838
        %v995 = vpack.c.b16 %v851, %v845
        %v996 = vpack.c.b16 %v852, %v846
        %v997 = vpack.c.b16 %v853, %v847
        %v998 = vpack.c.b16 %v854, %v848
        %v999 = vpack.c.b16 %v855, %v849
        %v1000 = vpack.c.b16 %v856, %v850
        %v1001 = vpack.c.b16 %v863, %v857
        %v1002 = vpack.c.b16 %v864, %v858
        %v1003 = vpack.c.b16 %v865, %v859
        %v1004 = vpack.c.b16 %v866, %v860
        %v1005 = vpack.c.b16 %v867, %v861
        %v1006 = vpack.c.b16 %v868, %v862
        %v1007 = vpack.c.b16 %v875, %v869
        %v1008 = vpack.c.b16 %v876, %v870
        %v1009 = vpack.c.b16 %v877, %v871
        %v1010 = vpack.c.b16 %v878, %v872
        %v1011 = vpack.c.b16 %v879, %v873
        %v1012 = vpack.c.b16 %v880, %v874
        %v1013 = vpack.c.b16 %v887, %v881
        %v1014 = vpack.c.b16 %v888, %v882
        %v1015 = vpack.c.b16 %v889, %v883
        %v1016 = vpack.c.b16 %v890, %v884
        %v1017 = vpack.c.b16 %v891, %v885
        %v1018 = vpack.c.b16 %v892, %v886
        %v1019 = vpack.c.b16 %v899, %v893
        %v1020 = vpack.c.b16 %v900, %v894
        %v1021 = vpack.c.b16 %v901, %v895
        %v1022 = vpack.c.b16 %v902, %v896
        %v1023 = vpack.c.b16 %v903, %v897
        %v1024 = vpack.c.b16 %v904, %v898
        %v1025 = vpack.c.b16 %v911, %v905
        %v1026 = vpack.c.b16 %v912, %v906
        %v1027 = vpack.c.b16 %v913, %v907
        %v1028 = vpack.c.b16 %v914, %v908
        %v1029 = vpack.c.b16 %v915, %v909
        %v1030 = vpack.c.b16 %v916, %v910
        %v1031 = vpack.c.b16 %v923, %v917
        %v1032 = vpack.c.b16 %v924, %v918
        %v1033 = vpack.c.b16 %v925, %v919
        %v1034 = vpack.c.b16 %v926, %v920
        %v1035 = vpack.c.b16 %v927, %v921
        %v1036 = vpack.c.b16 %v928, %v922
        %v1037 = vpack.c.b16 %v935, %v929
        %v1038 = vpack.c.b16 %v936, %v930
        %v1039 = vpack.c.b16 %v937, %v931
        %v1040 = vpack.c.b16 %v938, %v932
        %v1041 = vpack.c.b16 %v939, %v933
        %v1042 = vpack.c.b16 %v940, %v934
        %v1043 = vpack.c.b16 %v947, %v941
        %v1044 = vpack.c.b16 %v948, %v942
        %v1045 = vpack.c.b16 %v949, %v943
        %v1046 = vpack.c.b16 %v950, %v944
        %v1047 = vpack.c.b16 %v951, %v945
        %v1048 = vpack.c.b16 %v952, %v946
        %1145 = vmatprep.subr.bf16.mxu0 %v996
        %1146 = vmatpush1.bf16.msra.mxu0 %v995
        %1147 = vmatprep.subr.bf16.mxu0 %v990
        %1148 = vmatpush1.bf16.msra.mxu0 %v989
        %1149 = vmatprep.subr.bf16.mxu0 %v984
        %1150 = vmatpush1.bf16.msra.mxu0 %v983
        %1151 = vmatprep.subr.bf16.mxu0 %v978
        %1152 = vmatpush1.bf16.msra.mxu0 %v977
        %1153 = vmatprep.subr.bf16.mxu0 %v972
        %1154 = vmatpush1.bf16.msra.mxu0 %v971
        %1155 = vmatprep.subr.bf16.mxu0 %v966
        %1156 = vmatpush1.bf16.msra.mxu0 %v965
        %1157 = vmatprep.subr.bf16.mxu0 %v960
        %1158 = vmatpush1.bf16.msra.mxu0 %v959
        %1159 = vmatprep.subr.bf16.mxu0 %v954
        %1160 = vmatpush1.bf16.msra.mxu0 %v953
        %1161 = vmatprep.subr.bf16.mxu0 %v1044
        %1162 = vmatpush2.bf16.msra.mxu0 %v1043
        %1163 = vmatprep.subr.bf16.mxu0 %v1038
        %1164 = vmatpush2.bf16.msra.mxu0 %v1037
        %1165 = vmatprep.subr.bf16.mxu0 %v1032
        %1166 = vmatpush2.bf16.msra.mxu0 %v1031
        %1167 = vmatprep.subr.bf16.mxu0 %v1026
        %1168 = vmatpush2.bf16.msra.mxu0 %v1025
        %1169 = vmatprep.subr.bf16.mxu0 %v1020
        %1170 = vmatpush2.bf16.msra.mxu0 %v1019
        %1171 = vmatprep.subr.bf16.mxu0 %v1014
        %1172 = vmatpush2.bf16.msra.mxu0 %v1013
        %1173 = vmatprep.subr.bf16.mxu0 %v1008
        %1174 = vmatpush2.bf16.msra.mxu0 %v1007
        %1175 = vmatprep.subr.bf16.mxu0 %v1002
        %1176 = vmatpush2.bf16.msra.mxu0 %v1001
        %1177 = vmatprep.mubr.bf16.mxu0 %v536
        %1178 = vmatmul.mubr.bf16.gmra.mxu0 %v535
        %v1179 = vpop.f32.mrf.mxu0
        %v1180 = vadd.f32 %v638, %v1179
        %v1181 = vpop.f32.mrf.mxu0
        %v1182 = vadd.f32 %v642, %v1181
        %v1183 = vpop.f32.mrf.mxu0
        %v1184 = vpop.f32.mrf.mxu0
        %1185 = vdwg.mxu0
        %1186 = vmatprep.subr.bf16.mxu0 %v998
        %1187 = vmatpush1.bf16.msra.mxu0 %v997
        %1188 = vmatprep.subr.bf16.mxu0 %v992
        %1189 = vmatpush1.bf16.msra.mxu0 %v991
        %1190 = vmatprep.subr.bf16.mxu0 %v986
        %1191 = vmatpush1.bf16.msra.mxu0 %v985
        %1192 = vmatprep.subr.bf16.mxu0 %v980
        %1193 = vmatpush1.bf16.msra.mxu0 %v979
        %1194 = vmatprep.subr.bf16.mxu0 %v974
        %1195 = vmatpush1.bf16.msra.mxu0 %v973
        %1196 = vmatprep.subr.bf16.mxu0 %v968
        %1197 = vmatpush1.bf16.msra.mxu0 %v967
        %1198 = vmatprep.subr.bf16.mxu0 %v962
        %1199 = vmatpush1.bf16.msra.mxu0 %v961
        %1200 = vmatprep.subr.bf16.mxu0 %v956
        %1201 = vmatpush1.bf16.msra.mxu0 %v955
        %1202 = vmatprep.subr.bf16.mxu0 %v1046
        %1203 = vmatpush2.bf16.msra.mxu0 %v1045
        %1204 = vmatprep.subr.bf16.mxu0 %v1040
        %1205 = vmatpush2.bf16.msra.mxu0 %v1039
        %1206 = vmatprep.subr.bf16.mxu0 %v1034
        %1207 = vmatpush2.bf16.msra.mxu0 %v1033
        %1208 = vmatprep.subr.bf16.mxu0 %v1028
        %1209 = vmatpush2.bf16.msra.mxu0 %v1027
        %1210 = vmatprep.subr.bf16.mxu0 %v1022
        %1211 = vmatpush2.bf16.msra.mxu0 %v1021
        %1212 = vmatprep.subr.bf16.mxu0 %v1016
        %1213 = vmatpush2.bf16.msra.mxu0 %v1015
        %1214 = vmatprep.subr.bf16.mxu0 %v1010
        %1215 = vmatpush2.bf16.msra.mxu0 %v1009
        %1216 = vmatprep.subr.bf16.mxu0 %v1004
        %1217 = vmatpush2.bf16.msra.mxu0 %v1003
        %1218 = vmatprep.mubr.bf16.mxu0 %v536
        %1219 = vmatmul.mubr.bf16.gmra.mxu0 %v535
        %v1220 = vpop.f32.mrf.mxu0
        %v1221 = vadd.f32 %v646, %v1220
        %v1222 = vpop.f32.mrf.mxu0
        %v1223 = vadd.f32 %v650, %v1222
        %v1224 = vpop.f32.mrf.mxu0
        %v1225 = vpop.f32.mrf.mxu0
        %1226 = vdwg.mxu0
        %1227 = vmatprep.subr.bf16.mxu0 %v1000
        %1228 = vmatpush1.bf16.msra.mxu0 %v999
        %1229 = vmatprep.subr.bf16.mxu0 %v994
        %1230 = vmatpush1.bf16.msra.mxu0 %v993
        %1231 = vmatprep.subr.bf16.mxu0 %v988
        %1232 = vmatpush1.bf16.msra.mxu0 %v987
        %1233 = vmatprep.subr.bf16.mxu0 %v982
        %1234 = vmatpush1.bf16.msra.mxu0 %v981
        %1235 = vmatprep.subr.bf16.mxu0 %v976
        %1236 = vmatpush1.bf16.msra.mxu0 %v975
        %1237 = vmatprep.subr.bf16.mxu0 %v970
        %1238 = vmatpush1.bf16.msra.mxu0 %v969
        %1239 = vmatprep.subr.bf16.mxu0 %v964
        %1240 = vmatpush1.bf16.msra.mxu0 %v963
        %1241 = vmatprep.subr.bf16.mxu0 %v958
        %1242 = vmatpush1.bf16.msra.mxu0 %v957
        %1243 = vmatprep.subr.bf16.mxu0 %v1048
        %1244 = vmatpush2.bf16.msra.mxu0 %v1047
        %1245 = vmatprep.subr.bf16.mxu0 %v1042
        %1246 = vmatpush2.bf16.msra.mxu0 %v1041
        %1247 = vmatprep.subr.bf16.mxu0 %v1036
        %1248 = vmatpush2.bf16.msra.mxu0 %v1035
        %1249 = vmatprep.subr.bf16.mxu0 %v1030
        %1250 = vmatpush2.bf16.msra.mxu0 %v1029
        %1251 = vmatprep.subr.bf16.mxu0 %v1024
        %1252 = vmatpush2.bf16.msra.mxu0 %v1023
        %1253 = vmatprep.subr.bf16.mxu0 %v1018
        %1254 = vmatpush2.bf16.msra.mxu0 %v1017
        %1255 = vmatprep.subr.bf16.mxu0 %v1012
        %1256 = vmatpush2.bf16.msra.mxu0 %v1011
        %1257 = vmatprep.subr.bf16.mxu0 %v1006
        %1258 = vmatpush2.bf16.msra.mxu0 %v1005
        %1259 = vmatprep.mubr.bf16.mxu0 %v536
        %1260 = vmatmul.mubr.bf16.gmra.mxu0 %v535
        %v1261 = vpop.f32.mrf.mxu0
        %v1262 = vadd.f32 %v654, %v1261
        %v1263 = vpop.f32.mrf.mxu0
        %v1264 = vadd.f32 %v658, %v1263
        %v1265 = vpop.f32.mrf.mxu0
        %v1266 = vpop.f32.mrf.mxu0
        %1267 = vdwg.mxu0
        %v1268 = vpack.c.bf16 %v1180, %v1180
        %v1269 = vpack.c.bf16 %v1182, %v1182
        %v1270 = vpack.c.bf16 %v1221, %v1221
        %v1271 = vpack.c.bf16 %v1223, %v1223
        %v1272 = vpack.c.bf16 %v1262, %v1262
        %v1273 = vpack.c.bf16 %v1264, %v1264
        %vm1274 = vcmask 523264
        %v1276 = vsel %vm1274, %v1268, 0
        %v1279 = vsel %vm1274, %v1270, 0
        %1281 = vmatprep.subr.bf16.mxu0 0
        %1282 = vmatpush1.bf16.xpose.msra.mxu0 0
        %1283 = vmatprep.subr.bf16.mxu0 0
        %1284 = vmatpush1.bf16.xpose.msra.mxu0 0
        %1285 = vmatprep.subr.bf16.mxu0 0
        %1286 = vmatpush1.bf16.xpose.msra.mxu0 0
        %1287 = vmatprep.subr.bf16.mxu0 0
        %1288 = vmatpush1.bf16.xpose.msra.mxu0 0
        %1289 = vmatprep.subr.bf16.mxu0 0
        %1290 = vmatpush1.bf16.xpose.msra.mxu0 0
        %1291 = vmatprep.subr.bf16.mxu0 0
        %1292 = vmatpush1.bf16.xpose.msra.mxu0 0
        %1293 = vmatprep.subr.bf16.mxu0 0
        %1294 = vmatpush1.bf16.xpose.msra.mxu0 0
        %1295 = vmatprep.subr.bf16.mxu0 0
        %1296 = vmatpush1.bf16.xpose.msra.mxu0 %v1279
        %1297 = vmatprep.subr.bf16.mxu0 0
        %1298 = vmatpush2.bf16.xpose.msra.mxu0 0
        %1299 = vmatprep.subr.bf16.mxu0 0
        %1300 = vmatpush2.bf16.xpose.msra.mxu0 0
        %1301 = vmatprep.subr.bf16.mxu0 0
        %1302 = vmatpush2.bf16.xpose.msra.mxu0 0
        %1303 = vmatprep.subr.bf16.mxu0 0
        %1304 = vmatpush2.bf16.xpose.msra.mxu0 0
        %1305 = vmatprep.subr.bf16.mxu0 0
        %1306 = vmatpush2.bf16.xpose.msra.mxu0 0
        %1307 = vmatprep.subr.bf16.mxu0 0
        %1308 = vmatpush2.bf16.xpose.msra.mxu0 0
        %1309 = vmatprep.subr.bf16.mxu0 0
        %1310 = vmatpush2.bf16.xpose.msra.mxu0 0
        %1311 = vmatprep.subr.bf16.mxu0 0
        %1312 = vmatpush2.bf16.xpose.msra.mxu0 0
        %1313 = vmatprep.mubr.bf16.mxu0 0
        %1314 = vmatmul.mubr.bf16.gmra.mxu0 %v1276
        %v1315 = vpop.f32.mrf.mxu0
        %v1316 = vadd.f32 0.0, %v1315
        %v1317 = vpop.f32.mrf.mxu0
        %v1318 = vpop.f32.mrf.mxu0
        %v1319 = vpop.f32.mrf.mxu0
        %1320 = vdwg.mxu0
        %vm1321 = vcmask 64512
        %v1322 = vsel %vm1321, %v1316, -inf
        %1323 = vmax.xlane.f32.xlu0 %v1322
        %v1324 = vpop.xlane.xlu0 %1323
        %v1325 = vsub.f32 %v1316, %v1324
        %v1326 = vmul.f32 %v1325, 1.442695
        %v1327 = vpow.pop %v1326
        %v1328 = vsel %vm1321, %v1327, 0.0
        %1329 = vadd.xlane.f32.xlu0 %v1328
        %v1330 = vpop.xlane.xlu0 %1329
        %v1331 = vrcp.pop %v1330
        %v1332 = vmul.f32 %v1327, %v1331
        %v1333 = vpack.c.bf16 %v1332, %v1332
        %v1335 = vsel %vm1321, %v1333, 0
        %vm1337 = vcmask 1043456
        %v1339 = vsel %vm1337, %v1272, 0
        %1341 = vmatprep.subr.bf16.mxu0 0
        %1342 = vmatpush1.bf16.msra.mxu0 0
        %1343 = vmatprep.subr.bf16.mxu0 0
        %1344 = vmatpush1.bf16.msra.mxu0 0
        %1345 = vmatprep.subr.bf16.mxu0 0
        %1346 = vmatpush1.bf16.msra.mxu0 0
        %1347 = vmatprep.subr.bf16.mxu0 0
        %1348 = vmatpush1.bf16.msra.mxu0 0
        %1349 = vmatprep.subr.bf16.mxu0 0
        %1350 = vmatpush1.bf16.msra.mxu0 0
        %1351 = vmatprep.subr.bf16.mxu0 0
        %1352 = vmatpush1.bf16.msra.mxu0 0
        %1353 = vmatprep.subr.bf16.mxu0 0
        %1354 = vmatpush1.bf16.msra.mxu0 0
        %1355 = vmatprep.subr.bf16.mxu0 0
        %1356 = vmatpush1.bf16.msra.mxu0 %v1339
        %1357 = vmatprep.subr.bf16.mxu0 0
        %1358 = vmatpush2.bf16.msra.mxu0 0
        %1359 = vmatprep.subr.bf16.mxu0 0
        %1360 = vmatpush2.bf16.msra.mxu0 0
        %1361 = vmatprep.subr.bf16.mxu0 0
        %1362 = vmatpush2.bf16.msra.mxu0 0
        %1363 = vmatprep.subr.bf16.mxu0 0
        %1364 = vmatpush2.bf16.msra.mxu0 0
        %1365 = vmatprep.subr.bf16.mxu0 0
        %1366 = vmatpush2.bf16.msra.mxu0 0
        %1367 = vmatprep.subr.bf16.mxu0 0
        %1368 = vmatpush2.bf16.msra.mxu0 0
        %1369 = vmatprep.subr.bf16.mxu0 0
        %1370 = vmatpush2.bf16.msra.mxu0 0
        %1371 = vmatprep.subr.bf16.mxu0 0
        %1372 = vmatpush2.bf16.msra.mxu0 0
        %1373 = vmatprep.mubr.bf16.mxu0 0
        %1374 = vmatmul.mubr.bf16.gmra.mxu0 %v1335
        %v1375 = vpop.f32.mrf.mxu0
        %v1376 = vadd.f32 0.0, %v1375
        %v1377 = vpop.f32.mrf.mxu0
        %v1378 = vpop.f32.mrf.mxu0
        %v1379 = vpop.f32.mrf.mxu0
        %1380 = vdwg.mxu0
        %1382 = vrot.lane.b32.xlu0 %v1268, 64
        %v1383 = vpop.permute.xlu0 %1382
        %1385 = vrot.lane.b32.xlu0 %v1270, 64
        %v1386 = vpop.permute.xlu0 %1385
        %v1388 = vsel %vm1274, %v1383, 0
        %v1391 = vsel %vm1274, %v1386, 0
        %1393 = vmatprep.subr.bf16.mxu0 0
        %1394 = vmatpush1.bf16.xpose.msra.mxu0 0
        %1395 = vmatprep.subr.bf16.mxu0 0
        %1396 = vmatpush1.bf16.xpose.msra.mxu0 0
        %1397 = vmatprep.subr.bf16.mxu0 0
        %1398 = vmatpush1.bf16.xpose.msra.mxu0 0
        %1399 = vmatprep.subr.bf16.mxu0 0
        %1400 = vmatpush1.bf16.xpose.msra.mxu0 0
        %1401 = vmatprep.subr.bf16.mxu0 0
        %1402 = vmatpush1.bf16.xpose.msra.mxu0 0
        %1403 = vmatprep.subr.bf16.mxu0 0
        %1404 = vmatpush1.bf16.xpose.msra.mxu0 0
        %1405 = vmatprep.subr.bf16.mxu0 0
        %1406 = vmatpush1.bf16.xpose.msra.mxu0 0
        %1407 = vmatprep.subr.bf16.mxu0 0
        %1408 = vmatpush1.bf16.xpose.msra.mxu0 %v1391
        %1409 = vmatprep.subr.bf16.mxu0 0
        %1410 = vmatpush2.bf16.xpose.msra.mxu0 0
        %1411 = vmatprep.subr.bf16.mxu0 0
        %1412 = vmatpush2.bf16.xpose.msra.mxu0 0
        %1413 = vmatprep.subr.bf16.mxu0 0
        %1414 = vmatpush2.bf16.xpose.msra.mxu0 0
        %1415 = vmatprep.subr.bf16.mxu0 0
        %1416 = vmatpush2.bf16.xpose.msra.mxu0 0
        %1417 = vmatprep.subr.bf16.mxu0 0
        %1418 = vmatpush2.bf16.xpose.msra.mxu0 0
        %1419 = vmatprep.subr.bf16.mxu0 0
        %1420 = vmatpush2.bf16.xpose.msra.mxu0 0
        %1421 = vmatprep.subr.bf16.mxu0 0
        %1422 = vmatpush2.bf16.xpose.msra.mxu0 0
        %1423 = vmatprep.subr.bf16.mxu0 0
        %1424 = vmatpush2.bf16.xpose.msra.mxu0 0
        %1425 = vmatprep.mubr.bf16.mxu0 0
        %1426 = vmatmul.mubr.bf16.gmra.mxu0 %v1388
        %v1427 = vpop.f32.mrf.mxu0
        %v1428 = vadd.f32 0.0, %v1427
        %v1429 = vpop.f32.mrf.mxu0
        %v1430 = vpop.f32.mrf.mxu0
        %v1431 = vpop.f32.mrf.mxu0
        %1432 = vdwg.mxu0
        %v1433 = vsel %vm1321, %v1428, -inf
        %1434 = vmax.xlane.f32.xlu0 %v1433
        %v1435 = vpop.xlane.xlu0 %1434
        %v1436 = vsub.f32 %v1428, %v1435
        %v1437 = vmul.f32 %v1436, 1.442695
        %v1438 = vpow.pop %v1437
        %v1439 = vsel %vm1321, %v1438, 0.0
        %1440 = vadd.xlane.f32.xlu0 %v1439
        %v1441 = vpop.xlane.xlu0 %1440
        %v1442 = vrcp.pop %v1441
        %v1443 = vmul.f32 %v1438, %v1442
        %v1444 = vpack.c.bf16 %v1443, %v1443
        %1446 = vrot.lane.b32.xlu0 %v1272, 64
        %v1447 = vpop.permute.xlu0 %1446
        %v1449 = vsel %vm1321, %v1444, 0
        %v1452 = vsel %vm1337, %v1447, 0
        %1454 = vmatprep.subr.bf16.mxu0 0
        %1455 = vmatpush1.bf16.msra.mxu0 0
        %1456 = vmatprep.subr.bf16.mxu0 0
        %1457 = vmatpush1.bf16.msra.mxu0 0
        %1458 = vmatprep.subr.bf16.mxu0 0
        %1459 = vmatpush1.bf16.msra.mxu0 0
        %1460 = vmatprep.subr.bf16.mxu0 0
        %1461 = vmatpush1.bf16.msra.mxu0 0
        %1462 = vmatprep.subr.bf16.mxu0 0
        %1463 = vmatpush1.bf16.msra.mxu0 0
        %1464 = vmatprep.subr.bf16.mxu0 0
        %1465 = vmatpush1.bf16.msra.mxu0 0
        %1466 = vmatprep.subr.bf16.mxu0 0
        %1467 = vmatpush1.bf16.msra.mxu0 0
        %1468 = vmatprep.subr.bf16.mxu0 0
        %1469 = vmatpush1.bf16.msra.mxu0 %v1452
        %1470 = vmatprep.subr.bf16.mxu0 0
        %1471 = vmatpush2.bf16.msra.mxu0 0
        %1472 = vmatprep.subr.bf16.mxu0 0
        %1473 = vmatpush2.bf16.msra.mxu0 0
        %1474 = vmatprep.subr.bf16.mxu0 0
        %1475 = vmatpush2.bf16.msra.mxu0 0
        %1476 = vmatprep.subr.bf16.mxu0 0
        %1477 = vmatpush2.bf16.msra.mxu0 0
        %1478 = vmatprep.subr.bf16.mxu0 0
        %1479 = vmatpush2.bf16.msra.mxu0 0
        %1480 = vmatprep.subr.bf16.mxu0 0
        %1481 = vmatpush2.bf16.msra.mxu0 0
        %1482 = vmatprep.subr.bf16.mxu0 0
        %1483 = vmatpush2.bf16.msra.mxu0 0
        %1484 = vmatprep.subr.bf16.mxu0 0
        %1485 = vmatpush2.bf16.msra.mxu0 0
        %1486 = vmatprep.mubr.bf16.mxu0 0
        %1487 = vmatmul.mubr.bf16.gmra.mxu0 %v1449
        %v1488 = vpop.f32.mrf.mxu0
        %v1489 = vadd.f32 0.0, %v1488
        %v1490 = vpop.f32.mrf.mxu0
        %v1491 = vpop.f32.mrf.mxu0
        %v1492 = vpop.f32.mrf.mxu0
        %1493 = vdwg.mxu0
        %v1495 = vsel %vm1274, %v1269, 0
        %v1498 = vsel %vm1274, %v1271, 0
        %1500 = vmatprep.subr.bf16.mxu0 0
        %1501 = vmatpush1.bf16.xpose.msra.mxu0 0
        %1502 = vmatprep.subr.bf16.mxu0 0
        %1503 = vmatpush1.bf16.xpose.msra.mxu0 0
        %1504 = vmatprep.subr.bf16.mxu0 0
        %1505 = vmatpush1.bf16.xpose.msra.mxu0 0
        %1506 = vmatprep.subr.bf16.mxu0 0
        %1507 = vmatpush1.bf16.xpose.msra.mxu0 0
        %1508 = vmatprep.subr.bf16.mxu0 0
        %1509 = vmatpush1.bf16.xpose.msra.mxu0 0
        %1510 = vmatprep.subr.bf16.mxu0 0
        %1511 = vmatpush1.bf16.xpose.msra.mxu0 0
        %1512 = vmatprep.subr.bf16.mxu0 0
        %1513 = vmatpush1.bf16.xpose.msra.mxu0 0
        %1514 = vmatprep.subr.bf16.mxu0 0
        %1515 = vmatpush1.bf16.xpose.msra.mxu0 %v1498
        %1516 = vmatprep.subr.bf16.mxu0 0
        %1517 = vmatpush2.bf16.xpose.msra.mxu0 0
        %1518 = vmatprep.subr.bf16.mxu0 0
        %1519 = vmatpush2.bf16.xpose.msra.mxu0 0
        %1520 = vmatprep.subr.bf16.mxu0 0
        %1521 = vmatpush2.bf16.xpose.msra.mxu0 0
        %1522 = vmatprep.subr.bf16.mxu0 0
        %1523 = vmatpush2.bf16.xpose.msra.mxu0 0
        %1524 = vmatprep.subr.bf16.mxu0 0
        %1525 = vmatpush2.bf16.xpose.msra.mxu0 0
        %1526 = vmatprep.subr.bf16.mxu0 0
        %1527 = vmatpush2.bf16.xpose.msra.mxu0 0
        %1528 = vmatprep.subr.bf16.mxu0 0
        %1529 = vmatpush2.bf16.xpose.msra.mxu0 0
        %1530 = vmatprep.subr.bf16.mxu0 0
        %1531 = vmatpush2.bf16.xpose.msra.mxu0 0
        %1532 = vmatprep.mubr.bf16.mxu0 0
        %1533 = vmatmul.mubr.bf16.gmra.mxu0 %v1495
        %v1534 = vpop.f32.mrf.mxu0
        %v1535 = vadd.f32 0.0, %v1534
        %v1536 = vpop.f32.mrf.mxu0
        %v1537 = vpop.f32.mrf.mxu0
        %v1538 = vpop.f32.mrf.mxu0
        %1539 = vdwg.mxu0
        %v1540 = vsel %vm1321, %v1535, -inf
        %1541 = vmax.xlane.f32.xlu0 %v1540
        %v1542 = vpop.xlane.xlu0 %1541
        %v1543 = vsub.f32 %v1535, %v1542
        %v1544 = vmul.f32 %v1543, 1.442695
        %v1545 = vpow.pop %v1544
        %v1546 = vsel %vm1321, %v1545, 0.0
        %1547 = vadd.xlane.f32.xlu0 %v1546
        %v1548 = vpop.xlane.xlu0 %1547
        %v1549 = vrcp.pop %v1548
        %v1550 = vmul.f32 %v1545, %v1549
        %v1551 = vpack.c.bf16 %v1550, %v1550
        %v1553 = vsel %vm1321, %v1551, 0
        %v1556 = vsel %vm1337, %v1273, 0
        %1558 = vmatprep.subr.bf16.mxu0 0
        %1559 = vmatpush1.bf16.msra.mxu0 0
        %1560 = vmatprep.subr.bf16.mxu0 0
        %1561 = vmatpush1.bf16.msra.mxu0 0
        %1562 = vmatprep.subr.bf16.mxu0 0
        %1563 = vmatpush1.bf16.msra.mxu0 0
        %1564 = vmatprep.subr.bf16.mxu0 0
        %1565 = vmatpush1.bf16.msra.mxu0 0
        %1566 = vmatprep.subr.bf16.mxu0 0
        %1567 = vmatpush1.bf16.msra.mxu0 0
        %1568 = vmatprep.subr.bf16.mxu0 0
        %1569 = vmatpush1.bf16.msra.mxu0 0
        %1570 = vmatprep.subr.bf16.mxu0 0
        %1571 = vmatpush1.bf16.msra.mxu0 0
        %1572 = vmatprep.subr.bf16.mxu0 0
        %1573 = vmatpush1.bf16.msra.mxu0 %v1556
        %1574 = vmatprep.subr.bf16.mxu0 0
        %1575 = vmatpush2.bf16.msra.mxu0 0
        %1576 = vmatprep.subr.bf16.mxu0 0
        %1577 = vmatpush2.bf16.msra.mxu0 0
        %1578 = vmatprep.subr.bf16.mxu0 0
        %1579 = vmatpush2.bf16.msra.mxu0 0
        %1580 = vmatprep.subr.bf16.mxu0 0
        %1581 = vmatpush2.bf16.msra.mxu0 0
        %1582 = vmatprep.subr.bf16.mxu0 0
        %1583 = vmatpush2.bf16.msra.mxu0 0
        %1584 = vmatprep.subr.bf16.mxu0 0
        %1585 = vmatpush2.bf16.msra.mxu0 0
        %1586 = vmatprep.subr.bf16.mxu0 0
        %1587 = vmatpush2.bf16.msra.mxu0 0
        %1588 = vmatprep.subr.bf16.mxu0 0
        %1589 = vmatpush2.bf16.msra.mxu0 0
        %1590 = vmatprep.mubr.bf16.mxu0 0
        %1591 = vmatmul.mubr.bf16.gmra.mxu0 %v1553
        %v1592 = vpop.f32.mrf.mxu0
        %v1593 = vadd.f32 0.0, %v1592
        %v1594 = vpop.f32.mrf.mxu0
        %v1595 = vpop.f32.mrf.mxu0
        %v1596 = vpop.f32.mrf.mxu0
        %1597 = vdwg.mxu0
        %1599 = vrot.lane.b32.xlu0 %v1269, 64
        %v1600 = vpop.permute.xlu0 %1599
        %1602 = vrot.lane.b32.xlu0 %v1271, 64
        %v1603 = vpop.permute.xlu0 %1602
        %v1605 = vsel %vm1274, %v1600, 0
        %v1608 = vsel %vm1274, %v1603, 0
        %1610 = vmatprep.subr.bf16.mxu0 0
        %1611 = vmatpush1.bf16.xpose.msra.mxu0 0
        %1612 = vmatprep.subr.bf16.mxu0 0
        %1613 = vmatpush1.bf16.xpose.msra.mxu0 0
        %1614 = vmatprep.subr.bf16.mxu0 0
        %1615 = vmatpush1.bf16.xpose.msra.mxu0 0
        %1616 = vmatprep.subr.bf16.mxu0 0
        %1617 = vmatpush1.bf16.xpose.msra.mxu0 0
        %1618 = vmatprep.subr.bf16.mxu0 0
        %1619 = vmatpush1.bf16.xpose.msra.mxu0 0
        %1620 = vmatprep.subr.bf16.mxu0 0
        %1621 = vmatpush1.bf16.xpose.msra.mxu0 0
        %1622 = vmatprep.subr.bf16.mxu0 0
        %1623 = vmatpush1.bf16.xpose.msra.mxu0 0
        %1624 = vmatprep.subr.bf16.mxu0 0
        %1625 = vmatpush1.bf16.xpose.msra.mxu0 %v1608
        %1626 = vmatprep.subr.bf16.mxu0 0
        %1627 = vmatpush2.bf16.xpose.msra.mxu0 0
        %1628 = vmatprep.subr.bf16.mxu0 0
        %1629 = vmatpush2.bf16.xpose.msra.mxu0 0
        %1630 = vmatprep.subr.bf16.mxu0 0
        %1631 = vmatpush2.bf16.xpose.msra.mxu0 0
        %1632 = vmatprep.subr.bf16.mxu0 0
        %1633 = vmatpush2.bf16.xpose.msra.mxu0 0
        %1634 = vmatprep.subr.bf16.mxu0 0
        %1635 = vmatpush2.bf16.xpose.msra.mxu0 0
        %1636 = vmatprep.subr.bf16.mxu0 0
        %1637 = vmatpush2.bf16.xpose.msra.mxu0 0
        %1638 = vmatprep.subr.bf16.mxu0 0
        %1639 = vmatpush2.bf16.xpose.msra.mxu0 0
        %1640 = vmatprep.subr.bf16.mxu0 0
        %1641 = vmatpush2.bf16.xpose.msra.mxu0 0
        %1642 = vmatprep.mubr.bf16.mxu0 0
        %1643 = vmatmul.mubr.bf16.gmra.mxu0 %v1605
        %v1644 = vpop.f32.mrf.mxu0
        %v1645 = vadd.f32 0.0, %v1644
        %v1646 = vpop.f32.mrf.mxu0
        %v1647 = vpop.f32.mrf.mxu0
        %v1648 = vpop.f32.mrf.mxu0
        %1649 = vdwg.mxu0
        %v1650 = vsel %vm1321, %v1645, -inf
        %1651 = vmax.xlane.f32.xlu0 %v1650
        %v1652 = vpop.xlane.xlu0 %1651
        %v1653 = vsub.f32 %v1645, %v1652
        %v1654 = vmul.f32 %v1653, 1.442695
        %v1655 = vpow.pop %v1654
        %v1656 = vsel %vm1321, %v1655, 0.0
        %1657 = vadd.xlane.f32.xlu0 %v1656
        %v1658 = vpop.xlane.xlu0 %1657
        %v1659 = vrcp.pop %v1658
        %v1660 = vmul.f32 %v1655, %v1659
        %v1661 = vpack.c.bf16 %v1660, %v1660
        %1663 = vrot.lane.b32.xlu0 %v1273, 64
        %v1664 = vpop.permute.xlu0 %1663
        %v1666 = vsel %vm1321, %v1661, 0
        %v1669 = vsel %vm1337, %v1664, 0
        %1671 = vmatprep.subr.bf16.mxu0 0
        %1672 = vmatpush1.bf16.msra.mxu0 0
        %1673 = vmatprep.subr.bf16.mxu0 0
        %1674 = vmatpush1.bf16.msra.mxu0 0
        %1675 = vmatprep.subr.bf16.mxu0 0
        %1676 = vmatpush1.bf16.msra.mxu0 0
        %1677 = vmatprep.subr.bf16.mxu0 0
        %1678 = vmatpush1.bf16.msra.mxu0 0
        %1679 = vmatprep.subr.bf16.mxu0 0
        %1680 = vmatpush1.bf16.msra.mxu0 0
        %1681 = vmatprep.subr.bf16.mxu0 0
        %1682 = vmatpush1.bf16.msra.mxu0 0
        %1683 = vmatprep.subr.bf16.mxu0 0
        %1684 = vmatpush1.bf16.msra.mxu0 0
        %1685 = vmatprep.subr.bf16.mxu0 0
        %1686 = vmatpush1.bf16.msra.mxu0 %v1669
        %1687 = vmatprep.subr.bf16.mxu0 0
        %1688 = vmatpush2.bf16.msra.mxu0 0
        %1689 = vmatprep.subr.bf16.mxu0 0
        %1690 = vmatpush2.bf16.msra.mxu0 0
        %1691 = vmatprep.subr.bf16.mxu0 0
        %1692 = vmatpush2.bf16.msra.mxu0 0
        %1693 = vmatprep.subr.bf16.mxu0 0
        %1694 = vmatpush2.bf16.msra.mxu0 0
        %1695 = vmatprep.subr.bf16.mxu0 0
        %1696 = vmatpush2.bf16.msra.mxu0 0
        %1697 = vmatprep.subr.bf16.mxu0 0
        %1698 = vmatpush2.bf16.msra.mxu0 0
        %1699 = vmatprep.subr.bf16.mxu0 0
        %1700 = vmatpush2.bf16.msra.mxu0 0
        %1701 = vmatprep.subr.bf16.mxu0 0
        %1702 = vmatpush2.bf16.msra.mxu0 0
        %1703 = vmatprep.mubr.bf16.mxu0 0
        %1704 = vmatmul.mubr.bf16.gmra.mxu0 %v1666
        %v1705 = vpop.f32.mrf.mxu0
        %v1706 = vadd.f32 0.0, %v1705
        %v1707 = vpop.f32.mrf.mxu0
        %v1708 = vpop.f32.mrf.mxu0
        %v1709 = vpop.f32.mrf.mxu0
        %1710 = vdwg.mxu0
        %1712 = vrot.lane.b32.xlu0 %v1489, 64
        %v1713 = vpop.permute.xlu0 %1712
        %1716 = vrot.lane.b32.xlu0 %v1706, 64
        %v1717 = vpop.permute.xlu0 %1716
        %v1719 = vsel %vm1274, %v1376, %v1713
        %v1720 = vsel %vm1274, %v1593, %v1717
        %v1721 = vpack.c.bf16 %v1719, %v1719
        %v1722 = vpack.c.bf16 %v1720, %v1720
        %v1723 = vld [vmem:[#allocation10] sm:$0xff]
        %v1724 = vld [vmem:[#allocation10 + $0x8] sm:$0xff]
        %v1725 = vld [vmem:[#allocation10 + $0x10] sm:$0xff]
        %v1726 = vld [vmem:[#allocation10 + $0x18] sm:$0xff]
        %v1727 = vld [vmem:[#allocation10 + $0x20] sm:$0xff]
        %v1728 = vld [vmem:[#allocation10 + $0x28] sm:$0xff]
        %v1729 = vld [vmem:[#allocation10 + $0x30] sm:$0xff]
        %v1730 = vld [vmem:[#allocation10 + $0x38] sm:$0xff]
        %v1731 = vld [vmem:[#allocation10 + $0x40] sm:$0xff]
        %v1732 = vld [vmem:[#allocation10 + $0x48] sm:$0xff]
        %v1733 = vld [vmem:[#allocation10 + $0x50] sm:$0xff]
        %v1734 = vld [vmem:[#allocation10 + $0x58] sm:$0xff]
        %v1735 = vld [vmem:[#allocation10 + $0x60] sm:$0xff]
        %v1736 = vld [vmem:[#allocation10 + $0x68] sm:$0xff]
        %v1737 = vld [vmem:[#allocation10 + $0x70] sm:$0xff]
        %v1738 = vld [vmem:[#allocation10 + $0x78] sm:$0xff]
        %v1739 = vld [vmem:[#allocation10 + $0x80] sm:$0xff]
        %v1740 = vld [vmem:[#allocation10 + $0x88] sm:$0xff]
        %v1741 = vld [vmem:[#allocation10 + $0x90] sm:$0xff]
        %v1742 = vld [vmem:[#allocation10 + $0x98] sm:$0xff]
        %v1743 = vld [vmem:[#allocation10 + $0xa0] sm:$0xff]
        %v1744 = vld [vmem:[#allocation10 + $0xa8] sm:$0xff]
        %v1745 = vld [vmem:[#allocation10 + $0xb0] sm:$0xff]
        %v1746 = vld [vmem:[#allocation10 + $0xb8] sm:$0xff]
        %v1747 = vld [vmem:[#allocation10 + $0xc0] sm:$0xff]
        %v1748 = vld [vmem:[#allocation10 + $0xc8] sm:$0xff]
        %v1749 = vld [vmem:[#allocation10 + $0xd0] sm:$0xff]
        %v1750 = vld [vmem:[#allocation10 + $0xd8] sm:$0xff]
        %v1751 = vld [vmem:[#allocation10 + $0xe0] sm:$0xff]
        %v1752 = vld [vmem:[#allocation10 + $0xe8] sm:$0xff]
        %v1753 = vld [vmem:[#allocation10 + $0xf0] sm:$0xff]
        %v1754 = vld [vmem:[#allocation10 + $0xf8] sm:$0xff]
        %v1755 = vld [vmem:[%s6] sm:$0x3]
        %v1757 = vlaneseq
        %v1758 = vshrl.u32 %v1757, 7
        %v1759 = vsub.s32 0, %v1758
        %v1760 = vrot.slane %v1755, %v1759
        %v1761 = vlaneseq
        %v1762 = vshrl.u32 %v1761, 7
        %v1763 = vsub.s32 1, %v1762
        %v1764 = vrot.slane %v1755, %v1763
        %v1799 = vunpack.c.l.b16 %v1723
        %v1800 = vunpack.c.h.b16 %v1723
        %v1801 = vunpack.c.l.b16 %v1724
        %v1802 = vunpack.c.h.b16 %v1724
        %v1803 = vunpack.c.l.b16 %v1725
        %v1804 = vunpack.c.h.b16 %v1725
        %v1805 = vunpack.c.l.b16 %v1726
        %v1806 = vunpack.c.h.b16 %v1726
        %v1807 = vunpack.c.l.b16 %v1727
        %v1808 = vunpack.c.h.b16 %v1727
        %v1809 = vunpack.c.l.b16 %v1728
        %v1810 = vunpack.c.h.b16 %v1728
        %v1811 = vunpack.c.l.b16 %v1729
        %v1812 = vunpack.c.h.b16 %v1729
        %v1813 = vunpack.c.l.b16 %v1730
        %v1814 = vunpack.c.h.b16 %v1730
        %v1815 = vunpack.c.l.b16 %v1731
        %v1816 = vunpack.c.h.b16 %v1731
        %v1817 = vunpack.c.l.b16 %v1732
        %v1818 = vunpack.c.h.b16 %v1732
        %v1819 = vunpack.c.l.b16 %v1733
        %v1820 = vunpack.c.h.b16 %v1733
        %v1821 = vunpack.c.l.b16 %v1734
        %v1822 = vunpack.c.h.b16 %v1734
        %v1823 = vunpack.c.l.b16 %v1735
        %v1824 = vunpack.c.h.b16 %v1735
        %v1825 = vunpack.c.l.b16 %v1736
        %v1826 = vunpack.c.h.b16 %v1736
        %v1827 = vunpack.c.l.b16 %v1737
        %v1828 = vunpack.c.h.b16 %v1737
        %v1829 = vunpack.c.l.b16 %v1738
        %v1830 = vunpack.c.h.b16 %v1738
        %v1831 = vunpack.c.l.b16 %v1739
        %v1832 = vunpack.c.h.b16 %v1739
        %v1833 = vunpack.c.l.b16 %v1740
        %v1834 = vunpack.c.h.b16 %v1740
        %v1835 = vunpack.c.l.b16 %v1741
        %v1836 = vunpack.c.h.b16 %v1741
        %v1837 = vunpack.c.l.b16 %v1742
        %v1838 = vunpack.c.h.b16 %v1742
        %v1839 = vunpack.c.l.b16 %v1743
        %v1840 = vunpack.c.h.b16 %v1743
        %v1841 = vunpack.c.l.b16 %v1744
        %v1842 = vunpack.c.h.b16 %v1744
        %v1843 = vunpack.c.l.b16 %v1745
        %v1844 = vunpack.c.h.b16 %v1745
        %v1845 = vunpack.c.l.b16 %v1746
        %v1846 = vunpack.c.h.b16 %v1746
        %v1847 = vunpack.c.l.b16 %v1747
        %v1848 = vunpack.c.h.b16 %v1747
        %v1849 = vunpack.c.l.b16 %v1748
        %v1850 = vunpack.c.h.b16 %v1748
        %v1851 = vunpack.c.l.b16 %v1749
        %v1852 = vunpack.c.h.b16 %v1749
        %v1853 = vunpack.c.l.b16 %v1750
        %v1854 = vunpack.c.h.b16 %v1750
        %v1855 = vunpack.c.l.b16 %v1751
        %v1856 = vunpack.c.h.b16 %v1751
        %v1857 = vunpack.c.l.b16 %v1752
        %v1858 = vunpack.c.h.b16 %v1752
        %v1859 = vunpack.c.l.b16 %v1753
        %v1860 = vunpack.c.h.b16 %v1753
        %v1861 = vunpack.c.l.b16 %v1754
        %v1862 = vunpack.c.h.b16 %v1754
        %v1863 = vpack.c.b16 %v1801, %v1799
        %v1864 = vpack.c.b16 %v1802, %v1800
        %v1865 = vpack.c.b16 %v1805, %v1803
        %v1866 = vpack.c.b16 %v1806, %v1804
        %v1867 = vpack.c.b16 %v1809, %v1807
        %v1868 = vpack.c.b16 %v1810, %v1808
        %v1869 = vpack.c.b16 %v1813, %v1811
        %v1870 = vpack.c.b16 %v1814, %v1812
        %v1871 = vpack.c.b16 %v1817, %v1815
        %v1872 = vpack.c.b16 %v1818, %v1816
        %v1873 = vpack.c.b16 %v1821, %v1819
        %v1874 = vpack.c.b16 %v1822, %v1820
        %v1875 = vpack.c.b16 %v1825, %v1823
        %v1876 = vpack.c.b16 %v1826, %v1824
        %v1877 = vpack.c.b16 %v1829, %v1827
        %v1878 = vpack.c.b16 %v1830, %v1828
        %v1879 = vpack.c.b16 %v1833, %v1831
        %v1880 = vpack.c.b16 %v1834, %v1832
        %v1881 = vpack.c.b16 %v1837, %v1835
        %v1882 = vpack.c.b16 %v1838, %v1836
        %v1883 = vpack.c.b16 %v1841, %v1839
        %v1884 = vpack.c.b16 %v1842, %v1840
        %v1885 = vpack.c.b16 %v1845, %v1843
        %v1886 = vpack.c.b16 %v1846, %v1844
        %v1887 = vpack.c.b16 %v1849, %v1847
        %v1888 = vpack.c.b16 %v1850, %v1848
        %v1889 = vpack.c.b16 %v1853, %v1851
        %v1890 = vpack.c.b16 %v1854, %v1852
        %v1891 = vpack.c.b16 %v1857, %v1855
        %v1892 = vpack.c.b16 %v1858, %v1856
        %v1893 = vpack.c.b16 %v1861, %v1859
        %v1894 = vpack.c.b16 %v1862, %v1860
        %1927 = vmatprep.subr.bf16.mxu0 %v1878
        %1928 = vmatpush1.bf16.msra.mxu0 %v1877
        %1929 = vmatprep.subr.bf16.mxu0 %v1876
        %1930 = vmatpush1.bf16.msra.mxu0 %v1875
        %1931 = vmatprep.subr.bf16.mxu0 %v1874
        %1932 = vmatpush1.bf16.msra.mxu0 %v1873
        %1933 = vmatprep.subr.bf16.mxu0 %v1872
        %1934 = vmatpush1.bf16.msra.mxu0 %v1871
        %1935 = vmatprep.subr.bf16.mxu0 %v1870
        %1936 = vmatpush1.bf16.msra.mxu0 %v1869
        %1937 = vmatprep.subr.bf16.mxu0 %v1868
        %1938 = vmatpush1.bf16.msra.mxu0 %v1867
        %1939 = vmatprep.subr.bf16.mxu0 %v1866
        %1940 = vmatpush1.bf16.msra.mxu0 %v1865
        %1941 = vmatprep.subr.bf16.mxu0 %v1864
        %1942 = vmatpush1.bf16.msra.mxu0 %v1863
        %1943 = vmatprep.subr.bf16.mxu0 %v1894
        %1944 = vmatpush2.bf16.msra.mxu0 %v1893
        %1945 = vmatprep.subr.bf16.mxu0 %v1892
        %1946 = vmatpush2.bf16.msra.mxu0 %v1891
        %1947 = vmatprep.subr.bf16.mxu0 %v1890
        %1948 = vmatpush2.bf16.msra.mxu0 %v1889
        %1949 = vmatprep.subr.bf16.mxu0 %v1888
        %1950 = vmatpush2.bf16.msra.mxu0 %v1887
        %1951 = vmatprep.subr.bf16.mxu0 %v1886
        %1952 = vmatpush2.bf16.msra.mxu0 %v1885
        %1953 = vmatprep.subr.bf16.mxu0 %v1884
        %1954 = vmatpush2.bf16.msra.mxu0 %v1883
        %1955 = vmatprep.subr.bf16.mxu0 %v1882
        %1956 = vmatpush2.bf16.msra.mxu0 %v1881
        %1957 = vmatprep.subr.bf16.mxu0 %v1880
        %1958 = vmatpush2.bf16.msra.mxu0 %v1879
        %1959 = vmatprep.mubr.bf16.mxu0 %v1722
        %1960 = vmatmul.mubr.bf16.gmra.mxu0 %v1721
        %v1961 = vpop.f32.mrf.mxu0
        %v1962 = vadd.f32 %v1760, %v1961
        %v1963 = vpop.f32.mrf.mxu0
        %v1964 = vadd.f32 %v1764, %v1963
        %v1965 = vpop.f32.mrf.mxu0
        %v1966 = vpop.f32.mrf.mxu0
        %1967 = vdwg.mxu0
        %v1968 = vadd.f32 %v1962, %v488
        %v1969 = vadd.f32 %v1964, %v489
        %v1970 = vld [vmem:[%s7] sm:$0x3]
        %v1971 = vld [vmem:[%s8] sm:$0x3]
        %v1972 = vadd.f32 %v1968, %v1969
        %1973 = vadd.xlane.f32.xlu0 %v1972
        %v1974 = vpop.xlane.xlu0 %1973
        %v1975 = vmul.f32 %v1974, %v495
        %v1976 = vsub.f32 %v1968, %v1975
        %v1977 = vsub.f32 %v1969, %v1975
        %v1978 = vmul.f32 %v1976, %v1976
        %v1979 = vmul.f32 %v1977, %v1977
        %v1980 = vadd.f32 %v1978, %v1979
        %1981 = vadd.xlane.f32.xlu0 %v1980
        %v1982 = vpop.xlane.xlu0 %1981
        %v1983 = vmul.f32 %v1982, %v495
        %v1984 = vadd.f32 %v1983, 1e-05
        %v1985 = vrsqrt.pop %v1984
        %v1986 = vmul.f32 %v1976, %v1985
        %v1987 = vmul.f32 %v1977, %v1985
        %v1989 = vlaneseq
        %v1990 = vshrl.u32 %v1989, 7
        %v1991 = vsub.s32 0, %v1990
        %v1992 = vrot.slane %v1970, %v1991
        %v1993 = vlaneseq
        %v1994 = vshrl.u32 %v1993, 7
        %v1995 = vsub.s32 1, %v1994
        %v1996 = vrot.slane %v1970, %v1995
        %v1999 = vmul.f32 %v1986, %v1992
        %v2000 = vmul.f32 %v1987, %v1996
        %v2002 = vlaneseq
        %v2003 = vshrl.u32 %v2002, 7
        %v2004 = vsub.s32 0, %v2003
        %v2005 = vrot.slane %v1971, %v2004
        %v2006 = vlaneseq
        %v2007 = vshrl.u32 %v2006, 7
        %v2008 = vsub.s32 1, %v2007
        %v2009 = vrot.slane %v1971, %v2008
        %v2012 = vadd.f32 %v1999, %v2005
        %v2013 = vadd.f32 %v2000, %v2009
        %v2014 = vpack.c.bf16 %v2012, %v2012
        %v2015 = vpack.c.bf16 %v2013, %v2013
        %v2016 = vld [vmem:[#allocation11] sm:$0xff]
        %v2017 = vld [vmem:[#allocation11 + $0x8] sm:$0xff]
        %v2018 = vld [vmem:[#allocation11 + $0x10] sm:$0xff]
        %v2019 = vld [vmem:[#allocation11 + $0x18] sm:$0xff]
        %v2020 = vld [vmem:[#allocation11 + $0x20] sm:$0xff]
        %v2021 = vld [vmem:[#allocation11 + $0x28] sm:$0xff]
        %v2022 = vld [vmem:[#allocation11 + $0x30] sm:$0xff]
        %v2023 = vld [vmem:[#allocation11 + $0x38] sm:$0xff]
        %v2024 = vld [vmem:[#allocation11 + $0x40] sm:$0xff]
        %v2025 = vld [vmem:[#allocation11 + $0x48] sm:$0xff]
        %v2026 = vld [vmem:[#allocation11 + $0x50] sm:$0xff]
        %v2027 = vld [vmem:[#allocation11 + $0x58] sm:$0xff]
        %v2028 = vld [vmem:[#allocation11 + $0x60] sm:$0xff]
        %v2029 = vld [vmem:[#allocation11 + $0x68] sm:$0xff]
        %v2030 = vld [vmem:[#allocation11 + $0x70] sm:$0xff]
        %v2031 = vld [vmem:[#allocation11 + $0x78] sm:$0xff]
        %v2032 = vld [vmem:[#allocation11 + $0x80] sm:$0xff]
        %v2033 = vld [vmem:[#allocation11 + $0x88] sm:$0xff]
        %v2034 = vld [vmem:[#allocation11 + $0x90] sm:$0xff]
        %v2035 = vld [vmem:[#allocation11 + $0x98] sm:$0xff]
        %v2036 = vld [vmem:[#allocation11 + $0xa0] sm:$0xff]
        %v2037 = vld [vmem:[#allocation11 + $0xa8] sm:$0xff]
        %v2038 = vld [vmem:[#allocation11 + $0xb0] sm:$0xff]
        %v2039 = vld [vmem:[#allocation11 + $0xb8] sm:$0xff]
        %v2040 = vld [vmem:[#allocation11 + $0xc0] sm:$0xff]
        %v2041 = vld [vmem:[#allocation11 + $0xc8] sm:$0xff]
        %v2042 = vld [vmem:[#allocation11 + $0xd0] sm:$0xff]
        %v2043 = vld [vmem:[#allocation11 + $0xd8] sm:$0xff]
        %v2044 = vld [vmem:[#allocation11 + $0xe0] sm:$0xff]
        %v2045 = vld [vmem:[#allocation11 + $0xe8] sm:$0xff]
        %v2046 = vld [vmem:[#allocation11 + $0xf0] sm:$0xff]
        %v2047 = vld [vmem:[#allocation11 + $0xf8] sm:$0xff]
        %v2048 = vld [vmem:[#allocation11 + $0x100] sm:$0xff]
        %v2049 = vld [vmem:[#allocation11 + $0x108] sm:$0xff]
        %v2050 = vld [vmem:[#allocation11 + $0x110] sm:$0xff]
        %v2051 = vld [vmem:[#allocation11 + $0x118] sm:$0xff]
        %v2052 = vld [vmem:[#allocation11 + $0x120] sm:$0xff]
        %v2053 = vld [vmem:[#allocation11 + $0x128] sm:$0xff]
        %v2054 = vld [vmem:[#allocation11 + $0x130] sm:$0xff]
        %v2055 = vld [vmem:[#allocation11 + $0x138] sm:$0xff]
        %v2056 = vld [vmem:[#allocation11 + $0x140] sm:$0xff]
        %v2057 = vld [vmem:[#allocation11 + $0x148] sm:$0xff]
        %v2058 = vld [vmem:[#allocation11 + $0x150] sm:$0xff]
        %v2059 = vld [vmem:[#allocation11 + $0x158] sm:$0xff]
        %v2060 = vld [vmem:[#allocation11 + $0x160] sm:$0xff]
        %v2061 = vld [vmem:[#allocation11 + $0x168] sm:$0xff]
        %v2062 = vld [vmem:[#allocation11 + $0x170] sm:$0xff]
        %v2063 = vld [vmem:[#allocation11 + $0x178] sm:$0xff]
        %v2064 = vld [vmem:[#allocation11 + $0x180] sm:$0xff]
        %v2065 = vld [vmem:[#allocation11 + $0x188] sm:$0xff]
        %v2066 = vld [vmem:[#allocation11 + $0x190] sm:$0xff]
        %v2067 = vld [vmem:[#allocation11 + $0x198] sm:$0xff]
        %v2068 = vld [vmem:[#allocation11 + $0x1a0] sm:$0xff]
        %v2069 = vld [vmem:[#allocation11 + $0x1a8] sm:$0xff]
        %v2070 = vld [vmem:[#allocation11 + $0x1b0] sm:$0xff]
        %v2071 = vld [vmem:[#allocation11 + $0x1b8] sm:$0xff]
        %v2072 = vld [vmem:[#allocation11 + $0x1c0] sm:$0xff]
        %v2073 = vld [vmem:[#allocation11 + $0x1c8] sm:$0xff]
        %v2074 = vld [vmem:[#allocation11 + $0x1d0] sm:$0xff]
        %v2075 = vld [vmem:[#allocation11 + $0x1d8] sm:$0xff]
        %v2076 = vld [vmem:[#allocation11 + $0x1e0] sm:$0xff]
        %v2077 = vld [vmem:[#allocation11 + $0x1e8] sm:$0xff]
        %v2078 = vld [vmem:[#allocation11 + $0x1f0] sm:$0xff]
        %v2079 = vld [vmem:[#allocation11 + $0x1f8] sm:$0xff]
        %v2144 = vunpack.c.l.b16 %v2016
        %v2145 = vunpack.c.h.b16 %v2016
        %v2146 = vunpack.c.l.b16 %v2017
        %v2147 = vunpack.c.h.b16 %v2017
        %v2148 = vunpack.c.l.b16 %v2018
        %v2149 = vunpack.c.h.b16 %v2018
        %v2150 = vunpack.c.l.b16 %v2019
        %v2151 = vunpack.c.h.b16 %v2019
        %v2152 = vunpack.c.l.b16 %v2020
        %v2153 = vunpack.c.h.b16 %v2020
        %v2154 = vunpack.c.l.b16 %v2021
        %v2155 = vunpack.c.h.b16 %v2021
        %v2156 = vunpack.c.l.b16 %v2022
        %v2157 = vunpack.c.h.b16 %v2022
        %v2158 = vunpack.c.l.b16 %v2023
        %v2159 = vunpack.c.h.b16 %v2023
        %v2160 = vunpack.c.l.b16 %v2024
        %v2161 = vunpack.c.h.b16 %v2024
        %v2162 = vunpack.c.l.b16 %v2025
        %v2163 = vunpack.c.h.b16 %v2025
        %v2164 = vunpack.c.l.b16 %v2026
        %v2165 = vunpack.c.h.b16 %v2026
        %v2166 = vunpack.c.l.b16 %v2027
        %v2167 = vunpack.c.h.b16 %v2027
        %v2168 = vunpack.c.l.b16 %v2028
        %v2169 = vunpack.c.h.b16 %v2028
        %v2170 = vunpack.c.l.b16 %v2029
        %v2171 = vunpack.c.h.b16 %v2029
        %v2172 = vunpack.c.l.b16 %v2030
        %v2173 = vunpack.c.h.b16 %v2030
        %v2174 = vunpack.c.l.b16 %v2031
        %v2175 = vunpack.c.h.b16 %v2031
        %v2176 = vunpack.c.l.b16 %v2032
        %v2177 = vunpack.c.h.b16 %v2032
        %v2178 = vunpack.c.l.b16 %v2033
        %v2179 = vunpack.c.h.b16 %v2033
        %v2180 = vunpack.c.l.b16 %v2034
        %v2181 = vunpack.c.h.b16 %v2034
        %v2182 = vunpack.c.l.b16 %v2035
        %v2183 = vunpack.c.h.b16 %v2035
        %v2184 = vunpack.c.l.b16 %v2036
        %v2185 = vunpack.c.h.b16 %v2036
        %v2186 = vunpack.c.l.b16 %v2037
        %v2187 = vunpack.c.h.b16 %v2037
        %v2188 = vunpack.c.l.b16 %v2038
        %v2189 = vunpack.c.h.b16 %v2038
        %v2190 = vunpack.c.l.b16 %v2039
        %v2191 = vunpack.c.h.b16 %v2039
        %v2192 = vunpack.c.l.b16 %v2040
        %v2193 = vunpack.c.h.b16 %v2040
        %v2194 = vunpack.c.l.b16 %v2041
        %v2195 = vunpack.c.h.b16 %v2041
        %v2196 = vunpack.c.l.b16 %v2042
        %v2197 = vunpack.c.h.b16 %v2042
        %v2198 = vunpack.c.l.b16 %v2043
        %v2199 = vunpack.c.h.b16 %v2043
        %v2200 = vunpack.c.l.b16 %v2044
        %v2201 = vunpack.c.h.b16 %v2044
        %v2202 = vunpack.c.l.b16 %v2045
        %v2203 = vunpack.c.h.b16 %v2045
        %v2204 = vunpack.c.l.b16 %v2046
        %v2205 = vunpack.c.h.b16 %v2046
        %v2206 = vunpack.c.l.b16 %v2047
        %v2207 = vunpack.c.h.b16 %v2047
        %v2208 = vunpack.c.l.b16 %v2048
        %v2209 = vunpack.c.h.b16 %v2048
        %v2210 = vunpack.c.l.b16 %v2049
        %v2211 = vunpack.c.h.b16 %v2049
        %v2212 = vunpack.c.l.b16 %v2050
        %v2213 = vunpack.c.h.b16 %v2050
        %v2214 = vunpack.c.l.b16 %v2051
        %v2215 = vunpack.c.h.b16 %v2051
        %v2216 = vunpack.c.l.b16 %v2052
        %v2217 = vunpack.c.h.b16 %v2052
        %v2218 = vunpack.c.l.b16 %v2053
        %v2219 = vunpack.c.h.b16 %v2053
        %v2220 = vunpack.c.l.b16 %v2054
        %v2221 = vunpack.c.h.b16 %v2054
        %v2222 = vunpack.c.l.b16 %v2055
        %v2223 = vunpack.c.h.b16 %v2055
        %v2224 = vunpack.c.l.b16 %v2056
        %v2225 = vunpack.c.h.b16 %v2056
        %v2226 = vunpack.c.l.b16 %v2057
        %v2227 = vunpack.c.h.b16 %v2057
        %v2228 = vunpack.c.l.b16 %v2058
        %v2229 = vunpack.c.h.b16 %v2058
        %v2230 = vunpack.c.l.b16 %v2059
        %v2231 = vunpack.c.h.b16 %v2059
        %v2232 = vunpack.c.l.b16 %v2060
        %v2233 = vunpack.c.h.b16 %v2060
        %v2234 = vunpack.c.l.b16 %v2061
        %v2235 = vunpack.c.h.b16 %v2061
        %v2236 = vunpack.c.l.b16 %v2062
        %v2237 = vunpack.c.h.b16 %v2062
        %v2238 = vunpack.c.l.b16 %v2063
        %v2239 = vunpack.c.h.b16 %v2063
        %v2240 = vunpack.c.l.b16 %v2064
        %v2241 = vunpack.c.h.b16 %v2064
        %v2242 = vunpack.c.l.b16 %v2065
        %v2243 = vunpack.c.h.b16 %v2065
        %v2244 = vunpack.c.l.b16 %v2066
        %v2245 = vunpack.c.h.b16 %v2066
        %v2246 = vunpack.c.l.b16 %v2067
        %v2247 = vunpack.c.h.b16 %v2067
        %v2248 = vunpack.c.l.b16 %v2068
        %v2249 = vunpack.c.h.b16 %v2068
        %v2250 = vunpack.c.l.b16 %v2069
        %v2251 = vunpack.c.h.b16 %v2069
        %v2252 = vunpack.c.l.b16 %v2070
        %v2253 = vunpack.c.h.b16 %v2070
        %v2254 = vunpack.c.l.b16 %v2071
        %v2255 = vunpack.c.h.b16 %v2071
        %v2256 = vunpack.c.l.b16 %v2072
        %v2257 = vunpack.c.h.b16 %v2072
        %v2258 = vunpack.c.l.b16 %v2073
        %v2259 = vunpack.c.h.b16 %v2073
        %v2260 = vunpack.c.l.b16 %v2074
        %v2261 = vunpack.c.h.b16 %v2074
        %v2262 = vunpack.c.l.b16 %v2075
        %v2263 = vunpack.c.h.b16 %v2075
        %v2264 = vunpack.c.l.b16 %v2076
        %v2265 = vunpack.c.h.b16 %v2076
        %v2266 = vunpack.c.l.b16 %v2077
        %v2267 = vunpack.c.h.b16 %v2077
        %v2268 = vunpack.c.l.b16 %v2078
        %v2269 = vunpack.c.h.b16 %v2078
        %v2270 = vunpack.c.l.b16 %v2079
        %v2271 = vunpack.c.h.b16 %v2079
        %v2272 = vpack.c.b16 %v2148, %v2144
        %v2273 = vpack.c.b16 %v2149, %v2145
        %v2274 = vpack.c.b16 %v2150, %v2146
        %v2275 = vpack.c.b16 %v2151, %v2147
        %v2276 = vpack.c.b16 %v2156, %v2152
        %v2277 = vpack.c.b16 %v2157, %v2153
        %v2278 = vpack.c.b16 %v2158, %v2154
        %v2279 = vpack.c.b16 %v2159, %v2155
        %v2280 = vpack.c.b16 %v2164, %v2160
        %v2281 = vpack.c.b16 %v2165, %v2161
        %v2282 = vpack.c.b16 %v2166, %v2162
        %v2283 = vpack.c.b16 %v2167, %v2163
        %v2284 = vpack.c.b16 %v2172, %v2168
        %v2285 = vpack.c.b16 %v2173, %v2169
        %v2286 = vpack.c.b16 %v2174, %v2170
        %v2287 = vpack.c.b16 %v2175, %v2171
        %v2288 = vpack.c.b16 %v2180, %v2176
        %v2289 = vpack.c.b16 %v2181, %v2177
        %v2290 = vpack.c.b16 %v2182, %v2178
        %v2291 = vpack.c.b16 %v2183, %v2179
        %v2292 = vpack.c.b16 %v2188, %v2184
        %v2293 = vpack.c.b16 %v2189, %v2185
        %v2294 = vpack.c.b16 %v2190, %v2186
        %v2295 = vpack.c.b16 %v2191, %v2187
        %v2296 = vpack.c.b16 %v2196, %v2192
        %v2297 = vpack.c.b16 %v2197, %v2193
        %v2298 = vpack.c.b16 %v2198, %v2194
        %v2299 = vpack.c.b16 %v2199, %v2195
        %v2300 = vpack.c.b16 %v2204, %v2200
        %v2301 = vpack.c.b16 %v2205, %v2201
        %v2302 = vpack.c.b16 %v2206, %v2202
        %v2303 = vpack.c.b16 %v2207, %v2203
        %v2304 = vpack.c.b16 %v2212, %v2208
        %v2305 = vpack.c.b16 %v2213, %v2209
        %v2306 = vpack.c.b16 %v2214, %v2210
        %v2307 = vpack.c.b16 %v2215, %v2211
        %v2308 = vpack.c.b16 %v2220, %v2216
        %v2309 = vpack.c.b16 %v2221, %v2217
        %v2310 = vpack.c.b16 %v2222, %v2218
        %v2311 = vpack.c.b16 %v2223, %v2219
        %v2312 = vpack.c.b16 %v2228, %v2224
        %v2313 = vpack.c.b16 %v2229, %v2225
        %v2314 = vpack.c.b16 %v2230, %v2226
        %v2315 = vpack.c.b16 %v2231, %v2227
        %v2316 = vpack.c.b16 %v2236, %v2232
        %v2317 = vpack.c.b16 %v2237, %v2233
        %v2318 = vpack.c.b16 %v2238, %v2234
        %v2319 = vpack.c.b16 %v2239, %v2235
        %v2320 = vpack.c.b16 %v2244, %v2240
        %v2321 = vpack.c.b16 %v2245, %v2241
        %v2322 = vpack.c.b16 %v2246, %v2242
        %v2323 = vpack.c.b16 %v2247, %v2243
        %v2324 = vpack.c.b16 %v2252, %v2248
        %v2325 = vpack.c.b16 %v2253, %v2249
        %v2326 = vpack.c.b16 %v2254, %v2250
        %v2327 = vpack.c.b16 %v2255, %v2251
        %v2328 = vpack.c.b16 %v2260, %v2256
        %v2329 = vpack.c.b16 %v2261, %v2257
        %v2330 = vpack.c.b16 %v2262, %v2258
        %v2331 = vpack.c.b16 %v2263, %v2259
        %v2332 = vpack.c.b16 %v2268, %v2264
        %v2333 = vpack.c.b16 %v2269, %v2265
        %v2334 = vpack.c.b16 %v2270, %v2266
        %v2335 = vpack.c.b16 %v2271, %v2267
        %2400 = vmatprep.subr.bf16.mxu0 %v2301
        %2401 = vmatpush1.bf16.msra.mxu0 %v2300
        %2402 = vmatprep.subr.bf16.mxu0 %v2297
        %2403 = vmatpush1.bf16.msra.mxu0 %v2296
        %2404 = vmatprep.subr.bf16.mxu0 %v2293
        %2405 = vmatpush1.bf16.msra.mxu0 %v2292
        %2406 = vmatprep.subr.bf16.mxu0 %v2289
        %2407 = vmatpush1.bf16.msra.mxu0 %v2288
        %2408 = vmatprep.subr.bf16.mxu0 %v2285
        %2409 = vmatpush1.bf16.msra.mxu0 %v2284
        %2410 = vmatprep.subr.bf16.mxu0 %v2281
        %2411 = vmatpush1.bf16.msra.mxu0 %v2280
        %2412 = vmatprep.subr.bf16.mxu0 %v2277
        %2413 = vmatpush1.bf16.msra.mxu0 %v2276
        %2414 = vmatprep.subr.bf16.mxu0 %v2273
        %2415 = vmatpush1.bf16.msra.mxu0 %v2272
        %2416 = vmatprep.subr.bf16.mxu0 %v2333
        %2417 = vmatpush2.bf16.msra.mxu0 %v2332
        %2418 = vmatprep.subr.bf16.mxu0 %v2329
        %2419 = vmatpush2.bf16.msra.mxu0 %v2328
        %2420 = vmatprep.subr.bf16.mxu0 %v2325
        %2421 = vmatpush2.bf16.msra.mxu0 %v2324
        %2422 = vmatprep.subr.bf16.mxu0 %v2321
        %2423 = vmatpush2.bf16.msra.mxu0 %v2320
        %2424 = vmatprep.subr.bf16.mxu0 %v2317
        %2425 = vmatpush2.bf16.msra.mxu0 %v2316
        %2426 = vmatprep.subr.bf16.mxu0 %v2313
        %2427 = vmatpush2.bf16.msra.mxu0 %v2312
        %2428 = vmatprep.subr.bf16.mxu0 %v2309
        %2429 = vmatpush2.bf16.msra.mxu0 %v2308
        %2430 = vmatprep.subr.bf16.mxu0 %v2305
        %2431 = vmatpush2.bf16.msra.mxu0 %v2304
        %2432 = vmatprep.mubr.bf16.mxu0 %v2015
        %2433 = vmatmul.mubr.bf16.gmra.mxu0 %v2014
        %v2434 = vpop.f32.mrf.mxu0
        %v2435 = vadd.f32 0.0, %v2434
        %v2436 = vpop.f32.mrf.mxu0
        %v2437 = vadd.f32 0.0, %v2436
        %v2438 = vpop.f32.mrf.mxu0
        %v2439 = vpop.f32.mrf.mxu0
        %2440 = vdwg.mxu0
        %2441 = vmatprep.subr.bf16.mxu0 %v2303
        %2442 = vmatpush1.bf16.msra.mxu0 %v2302
        %2443 = vmatprep.subr.bf16.mxu0 %v2299
        %2444 = vmatpush1.bf16.msra.mxu0 %v2298
        %2445 = vmatprep.subr.bf16.mxu0 %v2295
        %2446 = vmatpush1.bf16.msra.mxu0 %v2294
        %2447 = vmatprep.subr.bf16.mxu0 %v2291
        %2448 = vmatpush1.bf16.msra.mxu0 %v2290
        %2449 = vmatprep.subr.bf16.mxu0 %v2287
        %2450 = vmatpush1.bf16.msra.mxu0 %v2286
        %2451 = vmatprep.subr.bf16.mxu0 %v2283
        %2452 = vmatpush1.bf16.msra.mxu0 %v2282
        %2453 = vmatprep.subr.bf16.mxu0 %v2279
        %2454 = vmatpush1.bf16.msra.mxu0 %v2278
        %2455 = vmatprep.subr.bf16.mxu0 %v2275
        %2456 = vmatpush1.bf16.msra.mxu0 %v2274
        %2457 = vmatprep.subr.bf16.mxu0 %v2335
        %2458 = vmatpush2.bf16.msra.mxu0 %v2334
        %2459 = vmatprep.subr.bf16.mxu0 %v2331
        %2460 = vmatpush2.bf16.msra.mxu0 %v2330
        %2461 = vmatprep.subr.bf16.mxu0 %v2327
        %2462 = vmatpush2.bf16.msra.mxu0 %v2326
        %2463 = vmatprep.subr.bf16.mxu0 %v2323
        %2464 = vmatpush2.bf16.msra.mxu0 %v2322
        %2465 = vmatprep.subr.bf16.mxu0 %v2319
        %2466 = vmatpush2.bf16.msra.mxu0 %v2318
        %2467 = vmatprep.subr.bf16.mxu0 %v2315
        %2468 = vmatpush2.bf16.msra.mxu0 %v2314
        %2469 = vmatprep.subr.bf16.mxu0 %v2311
        %2470 = vmatpush2.bf16.msra.mxu0 %v2310
        %2471 = vmatprep.subr.bf16.mxu0 %v2307
        %2472 = vmatpush2.bf16.msra.mxu0 %v2306
        %2473 = vmatprep.mubr.bf16.mxu0 %v2015
        %2474 = vmatmul.mubr.bf16.gmra.mxu0 %v2014
        %v2475 = vpop.f32.mrf.mxu0
        %v2476 = vadd.f32 0.0, %v2475
        %v2477 = vpop.f32.mrf.mxu0
        %v2478 = vadd.f32 0.0, %v2477
        %v2479 = vpop.f32.mrf.mxu0
        %v2480 = vpop.f32.mrf.mxu0
        %2481 = vdwg.mxu0
        %v2482 = vxor.u32 %v2435, 2147483648
        %v2483 = vxor.u32 %v2437, 2147483648
        %v2484 = vxor.u32 %v2476, 2147483648
        %v2485 = vxor.u32 %v2478, 2147483648
        %v2486 = vmul.f32 %v2482, 1.442695
        %v2487 = vpow.pop %v2486
        %v2488 = vmul.f32 %v2483, 1.442695
        %v2489 = vpow.pop %v2488
        %v2490 = vmul.f32 %v2484, 1.442695
        %v2491 = vpow.pop %v2490
        %v2492 = vmul.f32 %v2485, 1.442695
        %v2493 = vpow.pop %v2492
        %v2494 = vadd.f32 %v2487, 1.0
        %v2495 = vadd.f32 %v2489, 1.0
        %v2496 = vadd.f32 %v2491, 1.0
        %v2497 = vadd.f32 %v2493, 1.0
        %v2498 = vrcp.pop %v2494
        %v2499 = vmul.f32 1.0, %v2498
        %v2500 = vrcp.pop %v2495
        %v2501 = vmul.f32 1.0, %v2500
        %v2502 = vrcp.pop %v2496
        %v2503 = vmul.f32 1.0, %v2502
        %v2504 = vrcp.pop %v2497
        %v2505 = vmul.f32 1.0, %v2504
        %v2506 = vmul.f32 %v2435, %v2499
        %v2507 = vmul.f32 %v2437, %v2501
        %v2508 = vmul.f32 %v2476, %v2503
        %v2509 = vmul.f32 %v2478, %v2505
        %v2510 = vpack.c.bf16 %v2506, %v2506
        %v2511 = vpack.c.bf16 %v2507, %v2507
        %v2512 = vpack.c.bf16 %v2508, %v2508
        %v2513 = vpack.c.bf16 %v2509, %v2509
        %v2514 = vld [vmem:[#allocation13] sm:$0xff]
        %v2515 = vld [vmem:[#allocation13 + $0x8] sm:$0xff]
        %v2516 = vld [vmem:[#allocation13 + $0x10] sm:$0xff]
        %v2517 = vld [vmem:[#allocation13 + $0x18] sm:$0xff]
        %v2518 = vld [vmem:[#allocation13 + $0x20] sm:$0xff]
        %v2519 = vld [vmem:[#allocation13 + $0x28] sm:$0xff]
        %v2520 = vld [vmem:[#allocation13 + $0x30] sm:$0xff]
        %v2521 = vld [vmem:[#allocation13 + $0x38] sm:$0xff]
        %v2522 = vld [vmem:[#allocation13 + $0x40] sm:$0xff]
        %v2523 = vld [vmem:[#allocation13 + $0x48] sm:$0xff]
        %v2524 = vld [vmem:[#allocation13 + $0x50] sm:$0xff]
        %v2525 = vld [vmem:[#allocation13 + $0x58] sm:$0xff]
        %v2526 = vld [vmem:[#allocation13 + $0x60] sm:$0xff]
        %v2527 = vld [vmem:[#allocation13 + $0x68] sm:$0xff]
        %v2528 = vld [vmem:[#allocation13 + $0x70] sm:$0xff]
        %v2529 = vld [vmem:[#allocation13 + $0x78] sm:$0xff]
        %v2530 = vld [vmem:[#allocation13 + $0x80] sm:$0xff]
        %v2531 = vld [vmem:[#allocation13 + $0x88] sm:$0xff]
        %v2532 = vld [vmem:[#allocation13 + $0x90] sm:$0xff]
        %v2533 = vld [vmem:[#allocation13 + $0x98] sm:$0xff]
        %v2534 = vld [vmem:[#allocation13 + $0xa0] sm:$0xff]
        %v2535 = vld [vmem:[#allocation13 + $0xa8] sm:$0xff]
        %v2536 = vld [vmem:[#allocation13 + $0xb0] sm:$0xff]
        %v2537 = vld [vmem:[#allocation13 + $0xb8] sm:$0xff]
        %v2538 = vld [vmem:[#allocation13 + $0xc0] sm:$0xff]
        %v2539 = vld [vmem:[#allocation13 + $0xc8] sm:$0xff]
        %v2540 = vld [vmem:[#allocation13 + $0xd0] sm:$0xff]
        %v2541 = vld [vmem:[#allocation13 + $0xd8] sm:$0xff]
        %v2542 = vld [vmem:[#allocation13 + $0xe0] sm:$0xff]
        %v2543 = vld [vmem:[#allocation13 + $0xe8] sm:$0xff]
        %v2544 = vld [vmem:[#allocation13 + $0xf0] sm:$0xff]
        %v2545 = vld [vmem:[#allocation13 + $0xf8] sm:$0xff]
        %v2546 = vld [vmem:[#allocation13 + $0x100] sm:$0xff]
        %v2547 = vld [vmem:[#allocation13 + $0x108] sm:$0xff]
        %v2548 = vld [vmem:[#allocation13 + $0x110] sm:$0xff]
        %v2549 = vld [vmem:[#allocation13 + $0x118] sm:$0xff]
        %v2550 = vld [vmem:[#allocation13 + $0x120] sm:$0xff]
        %v2551 = vld [vmem:[#allocation13 + $0x128] sm:$0xff]
        %v2552 = vld [vmem:[#allocation13 + $0x130] sm:$0xff]
        %v2553 = vld [vmem:[#allocation13 + $0x138] sm:$0xff]
        %v2554 = vld [vmem:[#allocation13 + $0x140] sm:$0xff]
        %v2555 = vld [vmem:[#allocation13 + $0x148] sm:$0xff]
        %v2556 = vld [vmem:[#allocation13 + $0x150] sm:$0xff]
        %v2557 = vld [vmem:[#allocation13 + $0x158] sm:$0xff]
        %v2558 = vld [vmem:[#allocation13 + $0x160] sm:$0xff]
        %v2559 = vld [vmem:[#allocation13 + $0x168] sm:$0xff]
        %v2560 = vld [vmem:[#allocation13 + $0x170] sm:$0xff]
        %v2561 = vld [vmem:[#allocation13 + $0x178] sm:$0xff]
        %v2562 = vld [vmem:[#allocation13 + $0x180] sm:$0xff]
        %v2563 = vld [vmem:[#allocation13 + $0x188] sm:$0xff]
        %v2564 = vld [vmem:[#allocation13 + $0x190] sm:$0xff]
        %v2565 = vld [vmem:[#allocation13 + $0x198] sm:$0xff]
        %v2566 = vld [vmem:[#allocation13 + $0x1a0] sm:$0xff]
        %v2567 = vld [vmem:[#allocation13 + $0x1a8] sm:$0xff]
        %v2568 = vld [vmem:[#allocation13 + $0x1b0] sm:$0xff]
        %v2569 = vld [vmem:[#allocation13 + $0x1b8] sm:$0xff]
        %v2570 = vld [vmem:[#allocation13 + $0x1c0] sm:$0xff]
        %v2571 = vld [vmem:[#allocation13 + $0x1c8] sm:$0xff]
        %v2572 = vld [vmem:[#allocation13 + $0x1d0] sm:$0xff]
        %v2573 = vld [vmem:[#allocation13 + $0x1d8] sm:$0xff]
        %v2574 = vld [vmem:[#allocation13 + $0x1e0] sm:$0xff]
        %v2575 = vld [vmem:[#allocation13 + $0x1e8] sm:$0xff]
        %v2576 = vld [vmem:[#allocation13 + $0x1f0] sm:$0xff]
        %v2577 = vld [vmem:[#allocation13 + $0x1f8] sm:$0xff]
        %v2642 = vunpack.c.l.b16 %v2514
        %v2643 = vunpack.c.h.b16 %v2514
        %v2644 = vunpack.c.l.b16 %v2515
        %v2645 = vunpack.c.h.b16 %v2515
        %v2646 = vunpack.c.l.b16 %v2516
        %v2647 = vunpack.c.h.b16 %v2516
        %v2648 = vunpack.c.l.b16 %v2517
        %v2649 = vunpack.c.h.b16 %v2517
        %v2650 = vunpack.c.l.b16 %v2518
        %v2651 = vunpack.c.h.b16 %v2518
        %v2652 = vunpack.c.l.b16 %v2519
        %v2653 = vunpack.c.h.b16 %v2519
        %v2654 = vunpack.c.l.b16 %v2520
        %v2655 = vunpack.c.h.b16 %v2520
        %v2656 = vunpack.c.l.b16 %v2521
        %v2657 = vunpack.c.h.b16 %v2521
        %v2658 = vunpack.c.l.b16 %v2522
        %v2659 = vunpack.c.h.b16 %v2522
        %v2660 = vunpack.c.l.b16 %v2523
        %v2661 = vunpack.c.h.b16 %v2523
        %v2662 = vunpack.c.l.b16 %v2524
        %v2663 = vunpack.c.h.b16 %v2524
        %v2664 = vunpack.c.l.b16 %v2525
        %v2665 = vunpack.c.h.b16 %v2525
        %v2666 = vunpack.c.l.b16 %v2526
        %v2667 = vunpack.c.h.b16 %v2526
        %v2668 = vunpack.c.l.b16 %v2527
        %v2669 = vunpack.c.h.b16 %v2527
        %v2670 = vunpack.c.l.b16 %v2528
        %v2671 = vunpack.c.h.b16 %v2528
        %v2672 = vunpack.c.l.b16 %v2529
        %v2673 = vunpack.c.h.b16 %v2529
        %v2674 = vunpack.c.l.b16 %v2530
        %v2675 = vunpack.c.h.b16 %v2530
        %v2676 = vunpack.c.l.b16 %v2531
        %v2677 = vunpack.c.h.b16 %v2531
        %v2678 = vunpack.c.l.b16 %v2532
        %v2679 = vunpack.c.h.b16 %v2532
        %v2680 = vunpack.c.l.b16 %v2533
        %v2681 = vunpack.c.h.b16 %v2533
        %v2682 = vunpack.c.l.b16 %v2534
        %v2683 = vunpack.c.h.b16 %v2534
        %v2684 = vunpack.c.l.b16 %v2535
        %v2685 = vunpack.c.h.b16 %v2535
        %v2686 = vunpack.c.l.b16 %v2536
        %v2687 = vunpack.c.h.b16 %v2536
        %v2688 = vunpack.c.l.b16 %v2537
        %v2689 = vunpack.c.h.b16 %v2537
        %v2690 = vunpack.c.l.b16 %v2538
        %v2691 = vunpack.c.h.b16 %v2538
        %v2692 = vunpack.c.l.b16 %v2539
        %v2693 = vunpack.c.h.b16 %v2539
        %v2694 = vunpack.c.l.b16 %v2540
        %v2695 = vunpack.c.h.b16 %v2540
        %v2696 = vunpack.c.l.b16 %v2541
        %v2697 = vunpack.c.h.b16 %v2541
        %v2698 = vunpack.c.l.b16 %v2542
        %v2699 = vunpack.c.h.b16 %v2542
        %v2700 = vunpack.c.l.b16 %v2543
        %v2701 = vunpack.c.h.b16 %v2543
        %v2702 = vunpack.c.l.b16 %v2544
        %v2703 = vunpack.c.h.b16 %v2544
        %v2704 = vunpack.c.l.b16 %v2545
        %v2705 = vunpack.c.h.b16 %v2545
        %v2706 = vunpack.c.l.b16 %v2546
        %v2707 = vunpack.c.h.b16 %v2546
        %v2708 = vunpack.c.l.b16 %v2547
        %v2709 = vunpack.c.h.b16 %v2547
        %v2710 = vunpack.c.l.b16 %v2548
        %v2711 = vunpack.c.h.b16 %v2548
        %v2712 = vunpack.c.l.b16 %v2549
        %v2713 = vunpack.c.h.b16 %v2549
        %v2714 = vunpack.c.l.b16 %v2550
        %v2715 = vunpack.c.h.b16 %v2550
        %v2716 = vunpack.c.l.b16 %v2551
        %v2717 = vunpack.c.h.b16 %v2551
        %v2718 = vunpack.c.l.b16 %v2552
        %v2719 = vunpack.c.h.b16 %v2552
        %v2720 = vunpack.c.l.b16 %v2553
        %v2721 = vunpack.c.h.b16 %v2553
        %v2722 = vunpack.c.l.b16 %v2554
        %v2723 = vunpack.c.h.b16 %v2554
        %v2724 = vunpack.c.l.b16 %v2555
        %v2725 = vunpack.c.h.b16 %v2555
        %v2726 = vunpack.c.l.b16 %v2556
        %v2727 = vunpack.c.h.b16 %v2556
        %v2728 = vunpack.c.l.b16 %v2557
        %v2729 = vunpack.c.h.b16 %v2557
        %v2730 = vunpack.c.l.b16 %v2558
        %v2731 = vunpack.c.h.b16 %v2558
        %v2732 = vunpack.c.l.b16 %v2559
        %v2733 = vunpack.c.h.b16 %v2559
        %v2734 = vunpack.c.l.b16 %v2560
        %v2735 = vunpack.c.h.b16 %v2560
        %v2736 = vunpack.c.l.b16 %v2561
        %v2737 = vunpack.c.h.b16 %v2561
        %v2738 = vunpack.c.l.b16 %v2562
        %v2739 = vunpack.c.h.b16 %v2562
        %v2740 = vunpack.c.l.b16 %v2563
        %v2741 = vunpack.c.h.b16 %v2563
        %v2742 = vunpack.c.l.b16 %v2564
        %v2743 = vunpack.c.h.b16 %v2564
        %v2744 = vunpack.c.l.b16 %v2565
        %v2745 = vunpack.c.h.b16 %v2565
        %v2746 = vunpack.c.l.b16 %v2566
        %v2747 = vunpack.c.h.b16 %v2566
        %v2748 = vunpack.c.l.b16 %v2567
        %v2749 = vunpack.c.h.b16 %v2567
        %v2750 = vunpack.c.l.b16 %v2568
        %v2751 = vunpack.c.h.b16 %v2568
        %v2752 = vunpack.c.l.b16 %v2569
        %v2753 = vunpack.c.h.b16 %v2569
        %v2754 = vunpack.c.l.b16 %v2570
        %v2755 = vunpack.c.h.b16 %v2570
        %v2756 = vunpack.c.l.b16 %v2571
        %v2757 = vunpack.c.h.b16 %v2571
        %v2758 = vunpack.c.l.b16 %v2572
        %v2759 = vunpack.c.h.b16 %v2572
        %v2760 = vunpack.c.l.b16 %v2573
        %v2761 = vunpack.c.h.b16 %v2573
        %v2762 = vunpack.c.l.b16 %v2574
        %v2763 = vunpack.c.h.b16 %v2574
        %v2764 = vunpack.c.l.b16 %v2575
        %v2765 = vunpack.c.h.b16 %v2575
        %v2766 = vunpack.c.l.b16 %v2576
        %v2767 = vunpack.c.h.b16 %v2576
        %v2768 = vunpack.c.l.b16 %v2577
        %v2769 = vunpack.c.h.b16 %v2577
        %v2770 = vpack.c.b16 %v2644, %v2642
        %v2771 = vpack.c.b16 %v2645, %v2643
        %v2772 = vpack.c.b16 %v2648, %v2646
        %v2773 = vpack.c.b16 %v2649, %v2647
        %v2774 = vpack.c.b16 %v2652, %v2650
        %v2775 = vpack.c.b16 %v2653, %v2651
        %v2776 = vpack.c.b16 %v2656, %v2654
        %v2777 = vpack.c.b16 %v2657, %v2655
        %v2778 = vpack.c.b16 %v2660, %v2658
        %v2779 = vpack.c.b16 %v2661, %v2659
        %v2780 = vpack.c.b16 %v2664, %v2662
        %v2781 = vpack.c.b16 %v2665, %v2663
        %v2782 = vpack.c.b16 %v2668, %v2666
        %v2783 = vpack.c.b16 %v2669, %v2667
        %v2784 = vpack.c.b16 %v2672, %v2670
        %v2785 = vpack.c.b16 %v2673, %v2671
        %v2786 = vpack.c.b16 %v2676, %v2674
        %v2787 = vpack.c.b16 %v2677, %v2675
        %v2788 = vpack.c.b16 %v2680, %v2678
        %v2789 = vpack.c.b16 %v2681, %v2679
        %v2790 = vpack.c.b16 %v2684, %v2682
        %v2791 = vpack.c.b16 %v2685, %v2683
        %v2792 = vpack.c.b16 %v2688, %v2686
        %v2793 = vpack.c.b16 %v2689, %v2687
        %v2794 = vpack.c.b16 %v2692, %v2690
        %v2795 = vpack.c.b16 %v2693, %v2691
        %v2796 = vpack.c.b16 %v2696, %v2694
        %v2797 = vpack.c.b16 %v2697, %v2695
        %v2798 = vpack.c.b16 %v2700, %v2698
        %v2799 = vpack.c.b16 %v2701, %v2699
        %v2800 = vpack.c.b16 %v2704, %v2702
        %v2801 = vpack.c.b16 %v2705, %v2703
        %v2802 = vpack.c.b16 %v2708, %v2706
        %v2803 = vpack.c.b16 %v2709, %v2707
        %v2804 = vpack.c.b16 %v2712, %v2710
        %v2805 = vpack.c.b16 %v2713, %v2711
        %v2806 = vpack.c.b16 %v2716, %v2714
        %v2807 = vpack.c.b16 %v2717, %v2715
        %v2808 = vpack.c.b16 %v2720, %v2718
        %v2809 = vpack.c.b16 %v2721, %v2719
        %v2810 = vpack.c.b16 %v2724, %v2722
        %v2811 = vpack.c.b16 %v2725, %v2723
        %v2812 = vpack.c.b16 %v2728, %v2726
        %v2813 = vpack.c.b16 %v2729, %v2727
        %v2814 = vpack.c.b16 %v2732, %v2730
        %v2815 = vpack.c.b16 %v2733, %v2731
        %v2816 = vpack.c.b16 %v2736, %v2734
        %v2817 = vpack.c.b16 %v2737, %v2735
        %v2818 = vpack.c.b16 %v2740, %v2738
        %v2819 = vpack.c.b16 %v2741, %v2739
        %v2820 = vpack.c.b16 %v2744, %v2742
        %v2821 = vpack.c.b16 %v2745, %v2743
        %v2822 = vpack.c.b16 %v2748, %v2746
        %v2823 = vpack.c.b16 %v2749, %v2747
        %v2824 = vpack.c.b16 %v2752, %v2750
        %v2825 = vpack.c.b16 %v2753, %v2751
        %v2826 = vpack.c.b16 %v2756, %v2754
        %v2827 = vpack.c.b16 %v2757, %v2755
        %v2828 = vpack.c.b16 %v2760, %v2758
        %v2829 = vpack.c.b16 %v2761, %v2759
        %v2830 = vpack.c.b16 %v2764, %v2762
        %v2831 = vpack.c.b16 %v2765, %v2763
        %v2832 = vpack.c.b16 %v2768, %v2766
        %v2833 = vpack.c.b16 %v2769, %v2767
        %2898 = vmatprep.subr.bf16.mxu0 %v2785
        %2899 = vmatpush1.bf16.msra.mxu0 %v2784
        %2900 = vmatprep.subr.bf16.mxu0 %v2783
        %2901 = vmatpush1.bf16.msra.mxu0 %v2782
        %2902 = vmatprep.subr.bf16.mxu0 %v2781
        %2903 = vmatpush1.bf16.msra.mxu0 %v2780
        %2904 = vmatprep.subr.bf16.mxu0 %v2779
        %2905 = vmatpush1.bf16.msra.mxu0 %v2778
        %2906 = vmatprep.subr.bf16.mxu0 %v2777
        %2907 = vmatpush1.bf16.msra.mxu0 %v2776
        %2908 = vmatprep.subr.bf16.mxu0 %v2775
        %2909 = vmatpush1.bf16.msra.mxu0 %v2774
        %2910 = vmatprep.subr.bf16.mxu0 %v2773
        %2911 = vmatpush1.bf16.msra.mxu0 %v2772
        %2912 = vmatprep.subr.bf16.mxu0 %v2771
        %2913 = vmatpush1.bf16.msra.mxu0 %v2770
        %2914 = vmatprep.subr.bf16.mxu0 %v2801
        %2915 = vmatpush2.bf16.msra.mxu0 %v2800
        %2916 = vmatprep.subr.bf16.mxu0 %v2799
        %2917 = vmatpush2.bf16.msra.mxu0 %v2798
        %2918 = vmatprep.subr.bf16.mxu0 %v2797
        %2919 = vmatpush2.bf16.msra.mxu0 %v2796
        %2920 = vmatprep.subr.bf16.mxu0 %v2795
        %2921 = vmatpush2.bf16.msra.mxu0 %v2794
        %2922 = vmatprep.subr.bf16.mxu0 %v2793
        %2923 = vmatpush2.bf16.msra.mxu0 %v2792
        %2924 = vmatprep.subr.bf16.mxu0 %v2791
        %2925 = vmatpush2.bf16.msra.mxu0 %v2790
        %2926 = vmatprep.subr.bf16.mxu0 %v2789
        %2927 = vmatpush2.bf16.msra.mxu0 %v2788
        %2928 = vmatprep.subr.bf16.mxu0 %v2787
        %2929 = vmatpush2.bf16.msra.mxu0 %v2786
        %2930 = vmatprep.mubr.bf16.mxu0 %v2511
        %2931 = vmatmul.mubr.bf16.gmra.mxu0 %v2510
        %v2932 = vpop.f32.mrf.mxu0
        %v2933 = vadd.f32 %v1968, %v2932
        %v2934 = vpop.f32.mrf.mxu0
        %v2935 = vadd.f32 %v1969, %v2934
        %v2936 = vpop.f32.mrf.mxu0
        %v2937 = vpop.f32.mrf.mxu0
        %2938 = vdwg.mxu0
        %2939 = vmatprep.subr.bf16.mxu0 %v2817
        %2940 = vmatpush1.bf16.msra.mxu0 %v2816
        %2941 = vmatprep.subr.bf16.mxu0 %v2815
        %2942 = vmatpush1.bf16.msra.mxu0 %v2814
        %2943 = vmatprep.subr.bf16.mxu0 %v2813
        %2944 = vmatpush1.bf16.msra.mxu0 %v2812
        %2945 = vmatprep.subr.bf16.mxu0 %v2811
        %2946 = vmatpush1.bf16.msra.mxu0 %v2810
        %2947 = vmatprep.subr.bf16.mxu0 %v2809
        %2948 = vmatpush1.bf16.msra.mxu0 %v2808
        %2949 = vmatprep.subr.bf16.mxu0 %v2807
        %2950 = vmatpush1.bf16.msra.mxu0 %v2806
        %2951 = vmatprep.subr.bf16.mxu0 %v2805
        %2952 = vmatpush1.bf16.msra.mxu0 %v2804
        %2953 = vmatprep.subr.bf16.mxu0 %v2803
        %2954 = vmatpush1.bf16.msra.mxu0 %v2802
        %2955 = vmatprep.subr.bf16.mxu0 %v2833
        %2956 = vmatpush2.bf16.msra.mxu0 %v2832
        %2957 = vmatprep.subr.bf16.mxu0 %v2831
        %2958 = vmatpush2.bf16.msra.mxu0 %v2830
        %2959 = vmatprep.subr.bf16.mxu0 %v2829
        %2960 = vmatpush2.bf16.msra.mxu0 %v2828
        %2961 = vmatprep.subr.bf16.mxu0 %v2827
        %2962 = vmatpush2.bf16.msra.mxu0 %v2826
        %2963 = vmatprep.subr.bf16.mxu0 %v2825
        %2964 = vmatpush2.bf16.msra.mxu0 %v2824
        %2965 = vmatprep.subr.bf16.mxu0 %v2823
        %2966 = vmatpush2.bf16.msra.mxu0 %v2822
        %2967 = vmatprep.subr.bf16.mxu0 %v2821
        %2968 = vmatpush2.bf16.msra.mxu0 %v2820
        %2969 = vmatprep.subr.bf16.mxu0 %v2819
        %2970 = vmatpush2.bf16.msra.mxu0 %v2818
        %2971 = vmatprep.mubr.bf16.mxu0 %v2513
        %2972 = vmatmul.mubr.bf16.gmra.mxu0 %v2512
        %v2973 = vpop.f32.mrf.mxu0
        %v2974 = vadd.f32 %v2933, %v2973
        %v2975 = vpop.f32.mrf.mxu0
        %v2976 = vadd.f32 %v2935, %v2975
        %v2977 = vpop.f32.mrf.mxu0
        %v2978 = vpop.f32.mrf.mxu0
        %2979 = vdwg.mxu0
        %v2980 = vpack.c.bf16 %v2974, %v2974
        %v2981 = vpack.c.bf16 %v2976, %v2976
        %v2984 = vunpack.c.l.b16 %v2980
        %v2985 = vunpack.c.l.b16 %v2981
        %v2986 = vpack.c.b16 %v2985, %v2984
        %2988 = vst [vmem:[%s485] sm:$0xff] %v2986
        %s2989 = sand.u32 %s275, 1
        %s2990 = scalar_lea.sflag [#allocation4], %s2989
        %s2991 = sand.u32 %s275, 1
        %s2992 = smul.addr %s2991, 8
        %s2993 = scalar_lea.vmem [#allocation14], %s2992
        // Predicated region
        $region93: #{tpu_custom_call.1} parent=63 // pred_check
          %p2994 = pneg %p285
        $region94: #{tpu_custom_call.1} parent=63 // pred_check_branch
          %2996 = sbr.rel (%p2994) target = $region96
        $region95: #{tpu_custom_call.1} parent=63 // pred_region
          %s2998 = ssub.s32 128, 128
          %2999 = vsyncadd %s2990, %s2998
          %s3000 = smul.addr %s31, 2
          %s3001 = smul.addr %s3000, 64
          %s3002 = scalar_lea.hbm %s11, %s3001
          %s3004 = sshll.u32 %s2993, 4
          %s3005 = int_to_ptr.vmem [resolvable:$true] %s3004
          %3007 = dma.vmem_to_hbm [thread:$0]  %s3005, 128, %s3002, %s2990
        $region96: #{tpu_custom_call.1} parent=63 // pred_fallthru
          _
      $region64: #{tpu_custom_call.1} parent=5 // pred_fallthru
        _
      %p3008 = scmp.le.s32.totalorder 2, %s26
      // Predicated region
      $region97: #{tpu_custom_call.1} parent=5 // pred_check
        %p3009 = pneg %p3008
      $region98: #{tpu_custom_call.1} parent=5 // pred_check_branch
        %3011 = sbr.rel (%p3009) target = $region100
      $region99: #{tpu_custom_call.1} parent=5 // pred_region
        %s3012 = ssub.s32 %s26, 2
        // Predicated region
        $region101: #{tpu_custom_call.1} parent=99 // pred_check
          %p3013 = pneg %p291
        $region102: #{tpu_custom_call.1} parent=99 // pred_check_branch
          %3015 = sbr.rel (%p3013) target = $region104
        $region103: #{tpu_custom_call.1} parent=99 // pred_region
          %s3016 = sand.u32 %s276, 1
          %s3017 = scalar_lea.sflag [#allocation4], %s3016
          %s3018 = sand.u32 %s276, 1
          %s3019 = smul.addr %s3018, 8
          %s3020 = scalar_lea.vmem [#allocation14], %s3019
          %3021 = dma.done %s3017, 128
        $region104: #{tpu_custom_call.1} parent=99 // pred_fallthru
          _
      $region100: #{tpu_custom_call.1} parent=5 // pred_fallthru
        _
    $region6: #{tpu_custom_call.1} parent=1 // loop_footer
      %s30 = sadd.s32 1, %s26
    $region7: #{tpu_custom_call.1} parent=1 // loop_footer_branch
      %25 = sbr.rel target = $region3
    $region8: #{tpu_custom_call.1} parent=1 // loop_exit
      _
    %3022 = vsyncpa [#allocation3], 1
    %s3023 = scalar_lea.sflag [#allocation3], 1
    %3024 = vsyncpa %s3023, 1
    %3025 = vsyncpa [#allocation6], 1
    %3026 = vsyncpa [#allocation9], 1
    %3027 = vsyncpa [#allocation12], 1
    %3028 = vsyncpa [#allocation4], 1
    %s3029 = scalar_lea.sflag [#allocation4], 1
    %3030 = vsyncpa %s3029, 1

</llo_original>
